<compile_context>
chip_gen: v7x
topology: tpu7x:2x2x1
jax: 0.10.0
libtpu: 0.0.40
codegen_flags: <defaults>
</compile_context>

<pallas_src>
import functools
import math

import jax
import jax.numpy as jnp
from jax.experimental import pallas as pl
from jax.experimental.pallas import tpu as pltpu

_LN_EPS = 1e-5


def _layer_norm(y, gamma, beta):
    mu = jnp.mean(y, axis=-1, keepdims=True)
    var = jnp.mean(jnp.square(y - mu), axis=-1, keepdims=True)
    return (y - mu) * jax.lax.rsqrt(var + _LN_EPS) * gamma + beta


def _gelu_tanh(x):
    # TODO(synk): torch.nn.GELU() defaults to the exact erf formulation; the
    # tanh approximation (max abs dev ~3e-3) is used since erf lowering in
    # Mosaic is not guaranteed. The in-file reference uses the same formula.
    c = math.sqrt(2.0 / math.pi)
    return 0.5 * x * (1.0 + jnp.tanh(c * (x + 0.044715 * x * x * x)))


# --------------------------------------------------------------------------
# Kernel 1: multi-head self-attention + mean attention score + LayerNorm1
# --------------------------------------------------------------------------
def _attn_norm_kernel(x_ref, wq_ref, wk_ref, wv_ref, wo_ref,
                      bq_ref, bk_ref, bv_ref, bo_ref,
                      g1_ref, be1_ref,
                      y_ref, w_ref, scores_scr, *, num_heads):
    x = x_ref[0].astype(jnp.float32)                       # (S, H)
    S, H = x.shape
    d = H // num_heads

    # Projections. 1/sqrt(d) is already folded into wq/bq by the wrapper.
    q = jnp.dot(x, wq_ref[...], preferred_element_type=jnp.float32) + bq_ref[...]
    k = jnp.dot(x, wk_ref[...], preferred_element_type=jnp.float32) + bk_ref[...]
    v = jnp.dot(x, wv_ref[...], preferred_element_type=jnp.float32) + bv_ref[...]

    # Per-head scores, contracting the LAST dim of both operands (no k.T / XLU
    # transpose).  Each head's (S, S) block is written straight into the
    # head-stacked (nh*S, S) VMEM scratch (no concatenate copies, all offsets
    # static and sublane-aligned since S is a multiple of 8).
    dn = (((1,), (1,)), ((), ()))
    for h in range(num_heads):
        scores_scr[h * S:(h + 1) * S, :] = jax.lax.dot_general(
            q[:, h * d:(h + 1) * d], k[:, h * d:(h + 1) * d], dn,
            preferred_element_type=jnp.float32)

    # One softmax over the stacked slab (one reduction/exp pass for all heads).
    scores = scores_scr[...]                               # (nh*S, S)
    m = jnp.max(scores, axis=-1, keepdims=True)
    p = jnp.exp(scores - m)
    denom = jnp.sum(p, axis=-1, keepdims=True)
    # Exact divide (not pl.reciprocal(approx=True)): the downstream top-k token
    # selection depends on these weights, so keep them bit-faithful.
    attn = p / denom                                       # (nh*S, S)

    # token_score[j] = mean over (head, query) of attn  ==
    # torch: attn_output_weights.mean(dim=1).mean(dim=-2)
    w_ref[0] = jnp.mean(attn, axis=0, keepdims=True).astype(w_ref.dtype)

    # Per-head context lane-concatenated into one (S, H) slab, then a SINGLE
    # full-width output projection against wo (128-deep contraction, one MXU
    # push, bo added once).
    ctx = jnp.concatenate(
        [jnp.dot(attn[h * S:(h + 1) * S, :], v[:, h * d:(h + 1) * d],
                 preferred_element_type=jnp.float32)
         for h in range(num_heads)], axis=1)               # (S, H)
    out = jnp.dot(ctx, wo_ref[...], preferred_element_type=jnp.float32) + bo_ref[...]

    # Residual + LayerNorm1.
    y_ref[0] = _layer_norm(x + out, g1_ref[...], be1_ref[...]).astype(y_ref.dtype)


# --------------------------------------------------------------------------
# Kernel 2: fused top-k gather + FFN (Linear -> GELU -> Linear) + LayerNorm2
# --------------------------------------------------------------------------
def _gather_ffn_norm_kernel(idx_ref, y_ref, w1_ref, b1_ref, w2_ref, b2_ref,
                            g2_ref, be2_ref, o_ref):
    yb = y_ref[0].astype(jnp.float32)                      # (S, H)
    S = yb.shape[0]
    idx = idx_ref[0]                                       # (top_k, 1) int32
    K = idx.shape[0]

    # Fused gather: one-hot (K, S) selection matrix built from the indices,
    # applied as a tiny MXU matmul -> (K, H).  Replaces the inter-kernel
    # jnp.take_along_axis pass (one fewer HBM read+write of the pooled tokens).
    cols = jax.lax.broadcasted_iota(jnp.int32, (K, S), 1)
    onehot = (cols == idx).astype(jnp.float32)
    xg = jnp.dot(onehot, yb, preferred_element_type=jnp.float32)   # (K, H)

    h = jnp.dot(xg, w1_ref[...], preferred_element_type=jnp.float32) + b1_ref[...]
    h = _gelu_tanh(h)
    y2 = jnp.dot(h, w2_ref[...], preferred_element_type=jnp.float32) + b2_ref[...]
    # TODO(synk): torch.nn.Dropout is identity in eval mode; nothing to emit.
    o_ref[0] = _layer_norm(y2, g2_ref[...], be2_ref[...]).astype(o_ref.dtype)


# --------------------------------------------------------------------------
# Wrapper
# --------------------------------------------------------------------------
@functools.partial(jax.jit, static_argnames=("num_heads", "pct_pool"))
def attention_pooling_removal(x, params, *, num_heads, pct_pool):
    (wq, bq, wk, bk, wv, bv, wo, bo,
     g1, be1, w1, b1, w2, b2, g2, be2) = params
    B, S, H = x.shape
    d = H // num_heads
    scale = 1.0 / math.sqrt(d)
    wq_s, bq_s = wq * scale, bq * scale   # fold score scaling into the Q proj

    hh = pl.BlockSpec((H, H), lambda b: (0, 0))     # resident weights
    hv = pl.BlockSpec((1, H), lambda b: (0, 0))     # resident biases / affines

    kernel1 = functools.partial(_attn_norm_kernel, num_heads=num_heads)
    y, w = pl.pallas_call(
        kernel1,
        out_shape=(jax.ShapeDtypeStruct((B, S, H), x.dtype),
                   jax.ShapeDtypeStruct((B, 1, S), jnp.float32)),
        grid=(B,),
        in_specs=[pl.BlockSpec((1, S, H), lambda b: (b, 0, 0)),
                  hh, hh, hh, hh,
                  hv, hv, hv, hv, hv, hv],
        out_specs=(pl.BlockSpec((1, S, H), lambda b: (b, 0, 0)),
                   pl.BlockSpec((1, 1, S), lambda b: (b, 0, 0))),
        scratch_shapes=[pltpu.VMEM((num_heads * S, S), jnp.float32)],
        compiler_params=pltpu.CompilerParams(
            dimension_semantics=("parallel",)),
    )(x, wq_s, wk, wv, wo, bq_s, bk, bv, bo, g1, be1)

    # TODO(synk): torch.topk has no clean Pallas sort/top-k at these shapes;
    # done with JAX glue.  The token gather itself is fused into kernel 2.
    token_score = w[:, 0, :]                               # (B, S)
    top_k = int(S * (1.0 - pct_pool))
    _, idx = jax.lax.top_k(token_score, top_k)             # (B, K), desc order
    idx3 = idx.astype(jnp.int32)[:, :, None]               # (B, K, 1)

    H4, H_out = w1.shape[1], w2.shape[1]
    out = pl.pallas_call(
        _gather_ffn_norm_kernel,
        out_shape=jax.ShapeDtypeStruct((B, top_k, H_out), x.dtype),
        grid=(B,),
        in_specs=[pl.BlockSpec((1, top_k, 1), lambda b: (b, 0, 0)),
                  pl.BlockSpec((1, S, H), lambda b: (b, 0, 0)),
                  pl.BlockSpec((H, H4), lambda b: (0, 0)),
                  pl.BlockSpec((1, H4), lambda b: (0, 0)),
                  pl.BlockSpec((H4, H_out), lambda b: (0, 0)),
                  pl.BlockSpec((1, H_out), lambda b: (0, 0)),
                  pl.BlockSpec((1, H_out), lambda b: (0, 0)),
                  pl.BlockSpec((1, H_out), lambda b: (0, 0))],
        out_specs=pl.BlockSpec((1, top_k, H_out), lambda b: (b, 0, 0)),
        compiler_params=pltpu.CompilerParams(
            dimension_semantics=("parallel",)),
    )(idx3, y, w1, b1, w2, b2, g2, be2)
    return out


# --------------------------------------------------------------------------
# Pure-JAX reference (mirrors the PyTorch module, HIGHEST matmul precision)
# --------------------------------------------------------------------------
def _reference(x, params, *, num_heads, pct_pool):
    (wq, bq, wk, bk, wv, bv, wo, bo,
     g1, be1, w1, b1, w2, b2, g2, be2) = params
    B, S, H = x.shape
    d = H // num_heads
    hi = jax.lax.Precision.HIGHEST
    mm = lambda a, b: jnp.matmul(a, b, precision=hi)

    def split(t):
        return t.reshape(B, S, num_heads, d).transpose(0, 2, 1, 3)

    q = split(mm(x, wq) + bq)
    k = split(mm(x, wk) + bk)
    v = split(mm(x, wv) + bv)
    scores = jnp.einsum("bhqd,bhkd->bhqk", q, k, precision=hi) / math.sqrt(d)
    attn = jax.nn.softmax(scores, axis=-1)
    ctx = jnp.einsum("bhqk,bhkd->bhqd", attn, v, precision=hi)
    ctx = ctx.transpose(0, 2, 1, 3).reshape(B, S, H)
    attn_out = mm(ctx, wo) + bo

    token_score = attn.mean(axis=1).mean(axis=-2)          # (B, S)
    x1 = _layer_norm(x + attn_out, g1, be1)

    top_k = int(S * (1.0 - pct_pool))
    _, idx = jax.lax.top_k(token_score, top_k)
    red = jnp.take_along_axis(x1, idx[:, :, None], axis=1)

    h = _gelu_tanh(mm(red, w1) + b1)
    y = mm(h, w2) + b2
    return _layer_norm(y, g2, be2)


def _init_params(key, h_in, h_out):
    # nn.Linear-style init, weights stored pre-transposed: y = x @ W_T + b.
    ks = jax.random.split(key, 16)

    def lin(kw, kb, fan_in, fan_out):
        bound = 1.0 / math.sqrt(fan_in)
        w_t = jax.random.uniform(kw, (fan_in, fan_out), jnp.float32, -bound, bound)
        b = jax.random.uniform(kb, (1, fan_out), jnp.float32, -bound, bound)
        return w_t, b

    wq, bq = lin(ks[0], ks[1], h_in, h_in)
    wk, bk = lin(ks[2], ks[3], h_in, h_in)
    wv, bv = lin(ks[4], ks[5], h_in, h_in)
    wo, bo = lin(ks[6], ks[7], h_in, h_in)
    w1, b1 = lin(ks[8], ks[9], h_in, 4 * h_in)
    w2, b2 = lin(ks[10], ks[11], 4 * h_in, h_out)
    # LayerNorm affines randomized as if trained (PyTorch init is ones/zeros).
    g1 = 1.0 + 0.1 * jax.random.normal(ks[12], (1, h_in), jnp.float32)
    be1 = 0.1 * jax.random.normal(ks[13], (1, h_in), jnp.float32)
    g2 = 1.0 + 0.1 * jax.random.normal(ks[14], (1, h_out), jnp.float32)
    be2 = 0.1 * jax.random.normal(ks[15], (1, h_out), jnp.float32)
    return (wq, bq, wk, bk, wv, bv, wo, bo, g1, be1, w1, b1, w2, b2, g2, be2)


if __name__ == "__main__":
    B, S = 2, 16
    HIDDEN_IN, HIDDEN_OUT = 128, 128      # multiples of 128 -> lane-dense stores
    NUM_HEADS, PCT_POOL = 4, 0.25         # top_k = int(16 * 0.75) = 12

    key = jax.random.PRNGKey(0)
    kx, kp = jax.random.split(key)
    x = jax.random.normal(kx, (B, S, HIDDEN_IN), jnp.float32)
    params = _init_params(kp, HIDDEN_IN, HIDDEN_OUT)

    out = attention_pooling_removal(x, params, num_heads=NUM_HEADS,
                                    pct_pool=PCT_POOL)
    out = jax.block_until_ready(out)

    ref = _reference(x, params, num_heads=NUM_HEADS, pct_pool=PCT_POOL)
    top_k = int(S * (1.0 - PCT_POOL))
    assert out.shape == (B, top_k, HIDDEN_OUT), out.shape
    assert jnp.allclose(out, ref, atol=2e-3, rtol=2e-3), "mismatch vs reference"
    print("KERNEL_OK")
</pallas_src>

<mosaic_0001>
module attributes {stable_mosaic.version = 11 : i64} {
  func.func @_attn_norm_kernel(%arg0: i32, %arg1: memref<1x16x128xf32, #tpu.memory_space<vmem>>, %arg2: memref<128x128xf32, #tpu.memory_space<vmem>>, %arg3: memref<128x128xf32, #tpu.memory_space<vmem>>, %arg4: memref<128x128xf32, #tpu.memory_space<vmem>>, %arg5: memref<128x128xf32, #tpu.memory_space<vmem>>, %arg6: memref<1x128xf32, #tpu.memory_space<vmem>>, %arg7: memref<1x128xf32, #tpu.memory_space<vmem>>, %arg8: memref<1x128xf32, #tpu.memory_space<vmem>>, %arg9: memref<1x128xf32, #tpu.memory_space<vmem>>, %arg10: memref<1x128xf32, #tpu.memory_space<vmem>>, %arg11: memref<1x128xf32, #tpu.memory_space<vmem>>, %arg12: memref<1x16x128xf32, #tpu.memory_space<vmem>>, %arg13: memref<1x1x16xf32, #tpu.memory_space<vmem>>, %arg14: memref<64x16xf32, #tpu.memory_space<vmem>>) attributes {dimension_semantics = [#tpu.dimension_semantics<parallel>], iteration_bounds = array<i64: 2>, scalar_prefetch = 0 : i64, scratch_operands = 1 : i64, tpu.core_type = #tpu.core_type<tc>, window_params = [{transform_indices = @transform_0, window_bounds = array<i64: 1, 16, 128>}, {pipeline_mode = #tpu.pipeline_mode<synchronous>, transform_indices = @transform_1, window_bounds = array<i64: 128, 128>}, {pipeline_mode = #tpu.pipeline_mode<synchronous>, transform_indices = @transform_2, window_bounds = array<i64: 128, 128>}, {pipeline_mode = #tpu.pipeline_mode<synchronous>, transform_indices = @transform_3, window_bounds = array<i64: 128, 128>}, {pipeline_mode = #tpu.pipeline_mode<synchronous>, transform_indices = @transform_4, window_bounds = array<i64: 128, 128>}, {pipeline_mode = #tpu.pipeline_mode<synchronous>, transform_indices = @transform_5, window_bounds = array<i64: 1, 128>}, {pipeline_mode = #tpu.pipeline_mode<synchronous>, transform_indices = @transform_6, window_bounds = array<i64: 1, 128>}, {pipeline_mode = #tpu.pipeline_mode<synchronous>, transform_indices = @transform_7, window_bounds = array<i64: 1, 128>}, {pipeline_mode = #tpu.pipeline_mode<synchronous>, transform_indices = @transform_8, window_bounds = array<i64: 1, 128>}, {pipeline_mode = #tpu.pipeline_mode<synchronous>, transform_indices = @transform_9, window_bounds = array<i64: 1, 128>}, {pipeline_mode = #tpu.pipeline_mode<synchronous>, transform_indices = @transform_10, window_bounds = array<i64: 1, 128>}, {transform_indices = @transform_11, window_bounds = array<i64: 1, 16, 128>}, {transform_indices = @transform_12, window_bounds = array<i64: 1, 1, 16>}]} {
    %c0 = arith.constant 0 : index
    %c0_0 = arith.constant 0 : index
    %c0_1 = arith.constant 0 : index
    %0 = vector.load %arg1[%c0, %c0_0, %c0_1] : memref<1x16x128xf32, #tpu.memory_space<vmem>>, vector<1x16x128xf32>
    %1 = vector.shape_cast %0 : vector<1x16x128xf32> to vector<16x128xf32>
    %c0_2 = arith.constant 0 : index
    %c0_3 = arith.constant 0 : index
    %2 = vector.load %arg2[%c0_2, %c0_3] : memref<128x128xf32, #tpu.memory_space<vmem>>, vector<128x128xf32>
    %cst = arith.constant dense<0.000000e+00> : vector<16x128xf32>
    %3 = tpu.matmul %1, %2, %cst {dimension_numbers = #tpu.dot_dimension_numbers<[1], [0], [0], [1], [0, 0, 1, 1], [], []>} : vector<16x128xf32>, vector<128x128xf32>, vector<16x128xf32> -> vector<16x128xf32>
    %c0_4 = arith.constant 0 : index
    %c0_5 = arith.constant 0 : index
    %4 = vector.load %arg6[%c0_4, %c0_5] : memref<1x128xf32, #tpu.memory_space<vmem>>, vector<1x128xf32>
    %5 = vector.broadcast %4 : vector<1x128xf32> to vector<16x128xf32>
    %6 = arith.addf %3, %5 : vector<16x128xf32>
    %c0_6 = arith.constant 0 : index
    %c0_7 = arith.constant 0 : index
    %7 = vector.load %arg3[%c0_6, %c0_7] : memref<128x128xf32, #tpu.memory_space<vmem>>, vector<128x128xf32>
    %cst_8 = arith.constant dense<0.000000e+00> : vector<16x128xf32>
    %8 = tpu.matmul %1, %7, %cst_8 {dimension_numbers = #tpu.dot_dimension_numbers<[1], [0], [0], [1], [0, 0, 1, 1], [], []>} : vector<16x128xf32>, vector<128x128xf32>, vector<16x128xf32> -> vector<16x128xf32>
    %c0_9 = arith.constant 0 : index
    %c0_10 = arith.constant 0 : index
    %9 = vector.load %arg7[%c0_9, %c0_10] : memref<1x128xf32, #tpu.memory_space<vmem>>, vector<1x128xf32>
    %10 = vector.broadcast %9 : vector<1x128xf32> to vector<16x128xf32>
    %11 = arith.addf %8, %10 : vector<16x128xf32>
    %c0_11 = arith.constant 0 : index
    %c0_12 = arith.constant 0 : index
    %12 = vector.load %arg4[%c0_11, %c0_12] : memref<128x128xf32, #tpu.memory_space<vmem>>, vector<128x128xf32>
    %cst_13 = arith.constant dense<0.000000e+00> : vector<16x128xf32>
    %13 = tpu.matmul %1, %12, %cst_13 {dimension_numbers = #tpu.dot_dimension_numbers<[1], [0], [0], [1], [0, 0, 1, 1], [], []>} : vector<16x128xf32>, vector<128x128xf32>, vector<16x128xf32> -> vector<16x128xf32>
    %c0_14 = arith.constant 0 : index
    %c0_15 = arith.constant 0 : index
    %14 = vector.load %arg8[%c0_14, %c0_15] : memref<1x128xf32, #tpu.memory_space<vmem>>, vector<1x128xf32>
    %15 = vector.broadcast %14 : vector<1x128xf32> to vector<16x128xf32>
    %16 = arith.addf %13, %15 : vector<16x128xf32>
    %17 = vector.extract_strided_slice %6 {offsets = [0, 0], sizes = [16, 32], strides = [1, 1]} : vector<16x128xf32> to vector<16x32xf32>
    %18 = vector.extract_strided_slice %11 {offsets = [0, 0], sizes = [16, 32], strides = [1, 1]} : vector<16x128xf32> to vector<16x32xf32>
    %cst_16 = arith.constant dense<0.000000e+00> : vector<16x16xf32>
    %19 = tpu.matmul %17, %18, %cst_16 {dimension_numbers = #tpu.dot_dimension_numbers<[1], [1], [0], [0], [0, 0, 1, 0], [], []>} : vector<16x32xf32>, vector<16x32xf32>, vector<16x16xf32> -> vector<16x16xf32>
    %c0_17 = arith.constant 0 : index
    %c0_18 = arith.constant 0 : index
    %20 = vector.load %arg14[%c0_17, %c0_18] : memref<64x16xf32, #tpu.memory_space<vmem>>, vector<16x16xf32>
    tpu.vector_store %arg14[%c0_17, %c0_18], %19 {strides = array<i32>} : memref<64x16xf32, #tpu.memory_space<vmem>>, vector<16x16xf32>,
    %21 = vector.extract_strided_slice %6 {offsets = [0, 32], sizes = [16, 32], strides = [1, 1]} : vector<16x128xf32> to vector<16x32xf32>
    %22 = vector.extract_strided_slice %11 {offsets = [0, 32], sizes = [16, 32], strides = [1, 1]} : vector<16x128xf32> to vector<16x32xf32>
    %cst_19 = arith.constant dense<0.000000e+00> : vector<16x16xf32>
    %23 = tpu.matmul %21, %22, %cst_19 {dimension_numbers = #tpu.dot_dimension_numbers<[1], [1], [0], [0], [0, 0, 1, 0], [], []>} : vector<16x32xf32>, vector<16x32xf32>, vector<16x16xf32> -> vector<16x16xf32>
    %c16 = arith.constant 16 : index
    %c0_20 = arith.constant 0 : index
    %24 = vector.load %arg14[%c16, %c0_20] : memref<64x16xf32, #tpu.memory_space<vmem>>, vector<16x16xf32>
    tpu.vector_store %arg14[%c16, %c0_20], %23 {strides = array<i32>} : memref<64x16xf32, #tpu.memory_space<vmem>>, vector<16x16xf32>,
    %25 = vector.extract_strided_slice %6 {offsets = [0, 64], sizes = [16, 32], strides = [1, 1]} : vector<16x128xf32> to vector<16x32xf32>
    %26 = vector.extract_strided_slice %11 {offsets = [0, 64], sizes = [16, 32], strides = [1, 1]} : vector<16x128xf32> to vector<16x32xf32>
    %cst_21 = arith.constant dense<0.000000e+00> : vector<16x16xf32>
    %27 = tpu.matmul %25, %26, %cst_21 {dimension_numbers = #tpu.dot_dimension_numbers<[1], [1], [0], [0], [0, 0, 1, 0], [], []>} : vector<16x32xf32>, vector<16x32xf32>, vector<16x16xf32> -> vector<16x16xf32>
    %c32 = arith.constant 32 : index
    %c0_22 = arith.constant 0 : index
    %28 = vector.load %arg14[%c32, %c0_22] : memref<64x16xf32, #tpu.memory_space<vmem>>, vector<16x16xf32>
    tpu.vector_store %arg14[%c32, %c0_22], %27 {strides = array<i32>} : memref<64x16xf32, #tpu.memory_space<vmem>>, vector<16x16xf32>,
    %29 = vector.extract_strided_slice %6 {offsets = [0, 96], sizes = [16, 32], strides = [1, 1]} : vector<16x128xf32> to vector<16x32xf32>
    %30 = vector.extract_strided_slice %11 {offsets = [0, 96], sizes = [16, 32], strides = [1, 1]} : vector<16x128xf32> to vector<16x32xf32>
    %cst_23 = arith.constant dense<0.000000e+00> : vector<16x16xf32>
    %31 = tpu.matmul %29, %30, %cst_23 {dimension_numbers = #tpu.dot_dimension_numbers<[1], [1], [0], [0], [0, 0, 1, 0], [], []>} : vector<16x32xf32>, vector<16x32xf32>, vector<16x16xf32> -> vector<16x16xf32>
    %c48 = arith.constant 48 : index
    %c0_24 = arith.constant 0 : index
    %32 = vector.load %arg14[%c48, %c0_24] : memref<64x16xf32, #tpu.memory_space<vmem>>, vector<16x16xf32>
    tpu.vector_store %arg14[%c48, %c0_24], %31 {strides = array<i32>} : memref<64x16xf32, #tpu.memory_space<vmem>>, vector<16x16xf32>,
    %c0_25 = arith.constant 0 : index
    %c0_26 = arith.constant 0 : index
    %33 = vector.load %arg14[%c0_25, %c0_26] : memref<64x16xf32, #tpu.memory_space<vmem>>, vector<64x16xf32>
    %cst_27 = arith.constant dense<0xFF800000> : vector<64xf32>
    %34 = vector.multi_reduction <maximumf>, %33, %cst_27 [1] : vector<64x16xf32> to vector<64xf32>
    %35 = vector.shape_cast %34 : vector<64xf32> to vector<64x1xf32>
    %36 = vector.broadcast %35 : vector<64x1xf32> to vector<64x16xf32>
    %37 = arith.subf %33, %36 : vector<64x16xf32>
    %38 = math.exp %37 : vector<64x16xf32>
    %cst_28 = arith.constant dense<0.000000e+00> : vector<64xf32>
    %39 = vector.multi_reduction <add>, %38, %cst_28 [1] : vector<64x16xf32> to vector<64xf32>
    %40 = vector.shape_cast %39 : vector<64xf32> to vector<64x1xf32>
    %41 = vector.broadcast %40 : vector<64x1xf32> to vector<64x16xf32>
    %42 = arith.divf %38, %41 : vector<64x16xf32>
    %cst_29 = arith.constant dense<0.000000e+00> : vector<16xf32>
    %43 = vector.multi_reduction <add>, %42, %cst_29 [0] : vector<64x16xf32> to vector<16xf32>
    %44 = vector.shape_cast %43 : vector<16xf32> to vector<1x16xf32>
    %cst_30 = arith.constant 6.400000e+01 : f32
    %45 = vector.broadcast %cst_30 : f32 to vector<1x16xf32>
    %46 = arith.divf %44, %45 : vector<1x16xf32>
    %c0_31 = arith.constant 0 : index
    %c0_32 = arith.constant 0 : index
    %c0_33 = arith.constant 0 : index
    %47 = vector.load %arg13[%c0_31, %c0_32, %c0_33] : memref<1x1x16xf32, #tpu.memory_space<vmem>>, vector<1x1x16xf32>
    %48 = vector.shape_cast %47 : vector<1x1x16xf32> to vector<1x16xf32>
    %49 = vector.shape_cast %46 : vector<1x16xf32> to vector<1x1x16xf32>
    tpu.vector_store %arg13[%c0_31, %c0_32, %c0_33], %49 {strides = array<i32>} : memref<1x1x16xf32, #tpu.memory_space<vmem>>, vector<1x1x16xf32>,
    %50 = vector.extract_strided_slice %42 {offsets = [0, 0], sizes = [16, 16], strides = [1, 1]} : vector<64x16xf32> to vector<16x16xf32>
    %51 = vector.extract_strided_slice %16 {offsets = [0, 0], sizes = [16, 32], strides = [1, 1]} : vector<16x128xf32> to vector<16x32xf32>
    %cst_34 = arith.constant dense<0.000000e+00> : vector<16x32xf32>
    %52 = tpu.matmul %50, %51, %cst_34 {dimension_numbers = #tpu.dot_dimension_numbers<[1], [0], [0], [1], [0, 0, 1, 1], [], []>} : vector<16x16xf32>, vector<16x32xf32>, vector<16x32xf32> -> vector<16x32xf32>
    %53 = vector.extract_strided_slice %42 {offsets = [16, 0], sizes = [16, 16], strides = [1, 1]} : vector<64x16xf32> to vector<16x16xf32>
    %54 = vector.extract_strided_slice %16 {offsets = [0, 32], sizes = [16, 32], strides = [1, 1]} : vector<16x128xf32> to vector<16x32xf32>
    %cst_35 = arith.constant dense<0.000000e+00> : vector<16x32xf32>
    %55 = tpu.matmul %53, %54, %cst_35 {dimension_numbers = #tpu.dot_dimension_numbers<[1], [0], [0], [1], [0, 0, 1, 1], [], []>} : vector<16x16xf32>, vector<16x32xf32>, vector<16x32xf32> -> vector<16x32xf32>
    %56 = vector.extract_strided_slice %42 {offsets = [32, 0], sizes = [16, 16], strides = [1, 1]} : vector<64x16xf32> to vector<16x16xf32>
    %57 = vector.extract_strided_slice %16 {offsets = [0, 64], sizes = [16, 32], strides = [1, 1]} : vector<16x128xf32> to vector<16x32xf32>
    %cst_36 = arith.constant dense<0.000000e+00> : vector<16x32xf32>
    %58 = tpu.matmul %56, %57, %cst_36 {dimension_numbers = #tpu.dot_dimension_numbers<[1], [0], [0], [1], [0, 0, 1, 1], [], []>} : vector<16x16xf32>, vector<16x32xf32>, vector<16x32xf32> -> vector<16x32xf32>
    %59 = vector.extract_strided_slice %42 {offsets = [48, 0], sizes = [16, 16], strides = [1, 1]} : vector<64x16xf32> to vector<16x16xf32>
    %60 = vector.extract_strided_slice %16 {offsets = [0, 96], sizes = [16, 32], strides = [1, 1]} : vector<16x128xf32> to vector<16x32xf32>
    %cst_37 = arith.constant dense<0.000000e+00> : vector<16x32xf32>
    %61 = tpu.matmul %59, %60, %cst_37 {dimension_numbers = #tpu.dot_dimension_numbers<[1], [0], [0], [1], [0, 0, 1, 1], [], []>} : vector<16x16xf32>, vector<16x32xf32>, vector<16x32xf32> -> vector<16x32xf32>
    %62 = tpu.concatenate %52, %55, %58, %61 in 1 : vector<16x32xf32>, vector<16x32xf32>, vector<16x32xf32>, vector<16x32xf32> -> vector<16x128xf32>
    %c0_38 = arith.constant 0 : index
    %c0_39 = arith.constant 0 : index
    %63 = vector.load %arg5[%c0_38, %c0_39] : memref<128x128xf32, #tpu.memory_space<vmem>>, vector<128x128xf32>
    %cst_40 = arith.constant dense<0.000000e+00> : vector<16x128xf32>
    %64 = tpu.matmul %62, %63, %cst_40 {dimension_numbers = #tpu.dot_dimension_numbers<[1], [0], [0], [1], [0, 0, 1, 1], [], []>} : vector<16x128xf32>, vector<128x128xf32>, vector<16x128xf32> -> vector<16x128xf32>
    %c0_41 = arith.constant 0 : index
    %c0_42 = arith.constant 0 : index
    %65 = vector.load %arg9[%c0_41, %c0_42] : memref<1x128xf32, #tpu.memory_space<vmem>>, vector<1x128xf32>
    %66 = vector.broadcast %65 : vector<1x128xf32> to vector<16x128xf32>
    %67 = arith.addf %64, %66 : vector<16x128xf32>
    %68 = arith.addf %1, %67 : vector<16x128xf32>
    %c0_43 = arith.constant 0 : index
    %c0_44 = arith.constant 0 : index
    %69 = vector.load %arg10[%c0_43, %c0_44] : memref<1x128xf32, #tpu.memory_space<vmem>>, vector<1x128xf32>
    %c0_45 = arith.constant 0 : index
    %c0_46 = arith.constant 0 : index
    %70 = vector.load %arg11[%c0_45, %c0_46] : memref<1x128xf32, #tpu.memory_space<vmem>>, vector<1x128xf32>
    %cst_47 = arith.constant dense<0.000000e+00> : vector<16xf32>
    %71 = vector.multi_reduction <add>, %68, %cst_47 [1] : vector<16x128xf32> to vector<16xf32>
    %72 = vector.shape_cast %71 : vector<16xf32> to vector<16x1xf32>
    %cst_48 = arith.constant 1.280000e+02 : f32
    %73 = vector.broadcast %cst_48 : f32 to vector<16x1xf32>
    %74 = arith.divf %72, %73 : vector<16x1xf32>
    %75 = vector.broadcast %74 : vector<16x1xf32> to vector<16x128xf32>
    %76 = arith.subf %68, %75 : vector<16x128xf32>
    %77 = arith.mulf %76, %76 : vector<16x128xf32>
    %cst_49 = arith.constant dense<0.000000e+00> : vector<16xf32>
    %78 = vector.multi_reduction <add>, %77, %cst_49 [1] : vector<16x128xf32> to vector<16xf32>
    %79 = vector.shape_cast %78 : vector<16xf32> to vector<16x1xf32>
    %cst_50 = arith.constant 1.280000e+02 : f32
    %80 = vector.broadcast %cst_50 : f32 to vector<16x1xf32>
    %81 = arith.divf %79, %80 : vector<16x1xf32>
    %82 = vector.broadcast %74 : vector<16x1xf32> to vector<16x128xf32>
    %83 = arith.subf %68, %82 : vector<16x128xf32>
    %cst_51 = arith.constant 9.99999974E-6 : f32
    %84 = vector.broadcast %cst_51 : f32 to vector<16x1xf32>
    %85 = arith.addf %81, %84 : vector<16x1xf32>
    %86 = math.rsqrt %85 : vector<16x1xf32>
    %87 = vector.broadcast %86 : vector<16x1xf32> to vector<16x128xf32>
    %88 = arith.mulf %83, %87 : vector<16x128xf32>
    %89 = vector.broadcast %69 : vector<1x128xf32> to vector<16x128xf32>
    %90 = arith.mulf %88, %89 : vector<16x128xf32>
    %91 = vector.broadcast %70 : vector<1x128xf32> to vector<16x128xf32>
    %92 = arith.addf %90, %91 : vector<16x128xf32>
    %c0_52 = arith.constant 0 : index
    %c0_53 = arith.constant 0 : index
    %c0_54 = arith.constant 0 : index
    %93 = vector.load %arg12[%c0_52, %c0_53, %c0_54] : memref<1x16x128xf32, #tpu.memory_space<vmem>>, vector<1x16x128xf32>
    %94 = vector.shape_cast %93 : vector<1x16x128xf32> to vector<16x128xf32>
    %95 = vector.shape_cast %92 : vector<16x128xf32> to vector<1x16x128xf32>
    tpu.vector_store %arg12[%c0_52, %c0_53, %c0_54], %95 {strides = array<i32>} : memref<1x16x128xf32, #tpu.memory_space<vmem>>, vector<1x16x128xf32>,
    return
  }
  func.func @transform_0(%arg0: i32) -> (i32, i32, i32) {
    %c0_i32 = arith.constant 0 : i32
    %c0_i32_0 = arith.constant 0 : i32
    %c0_i32_1 = arith.constant 0 : i32
    return %arg0, %c0_i32, %c0_i32_0 : i32, i32, i32
  }
  func.func @transform_1(%arg0: i32) -> (i32, i32) {
    %c0_i32 = arith.constant 0 : i32
    %c0_i32_0 = arith.constant 0 : i32
    %c0_i32_1 = arith.constant 0 : i32
    return %c0_i32, %c0_i32_0 : i32, i32
  }
  func.func @transform_2(%arg0: i32) -> (i32, i32) {
    %c0_i32 = arith.constant 0 : i32
    %c0_i32_0 = arith.constant 0 : i32
    %c0_i32_1 = arith.constant 0 : i32
    return %c0_i32, %c0_i32_0 : i32, i32
  }
  func.func @transform_3(%arg0: i32) -> (i32, i32) {
    %c0_i32 = arith.constant 0 : i32
    %c0_i32_0 = arith.constant 0 : i32
    %c0_i32_1 = arith.constant 0 : i32
    return %c0_i32, %c0_i32_0 : i32, i32
  }
  func.func @transform_4(%arg0: i32) -> (i32, i32) {
    %c0_i32 = arith.constant 0 : i32
    %c0_i32_0 = arith.constant 0 : i32
    %c0_i32_1 = arith.constant 0 : i32
    return %c0_i32, %c0_i32_0 : i32, i32
  }
  func.func @transform_5(%arg0: i32) -> (i32, i32) {
    %c0_i32 = arith.constant 0 : i32
    %c0_i32_0 = arith.constant 0 : i32
    %c0_i32_1 = arith.constant 0 : i32
    return %c0_i32, %c0_i32_0 : i32, i32
  }
  func.func @transform_6(%arg0: i32) -> (i32, i32) {
    %c0_i32 = arith.constant 0 : i32
    %c0_i32_0 = arith.constant 0 : i32
    %c0_i32_1 = arith.constant 0 : i32
    return %c0_i32, %c0_i32_0 : i32, i32
  }
  func.func @transform_7(%arg0: i32) -> (i32, i32) {
    %c0_i32 = arith.constant 0 : i32
    %c0_i32_0 = arith.constant 0 : i32
    %c0_i32_1 = arith.constant 0 : i32
    return %c0_i32, %c0_i32_0 : i32, i32
  }
  func.func @transform_8(%arg0: i32) -> (i32, i32) {
    %c0_i32 = arith.constant 0 : i32
    %c0_i32_0 = arith.constant 0 : i32
    %c0_i32_1 = arith.constant 0 : i32
    return %c0_i32, %c0_i32_0 : i32, i32
  }
  func.func @transform_9(%arg0: i32) -> (i32, i32) {
    %c0_i32 = arith.constant 0 : i32
    %c0_i32_0 = arith.constant 0 : i32
    %c0_i32_1 = arith.constant 0 : i32
    return %c0_i32, %c0_i32_0 : i32, i32
  }
  func.func @transform_10(%arg0: i32) -> (i32, i32) {
    %c0_i32 = arith.constant 0 : i32
    %c0_i32_0 = arith.constant 0 : i32
    %c0_i32_1 = arith.constant 0 : i32
    return %c0_i32, %c0_i32_0 : i32, i32
  }
  func.func @transform_11(%arg0: i32) -> (i32, i32, i32) {
    %c0_i32 = arith.constant 0 : i32
    %c0_i32_0 = arith.constant 0 : i32
    %c0_i32_1 = arith.constant 0 : i32
    return %arg0, %c0_i32, %c0_i32_0 : i32, i32, i32
  }
  func.func @transform_12(%arg0: i32) -> (i32, i32, i32) {
    %c0_i32 = arith.constant 0 : i32
    %c0_i32_0 = arith.constant 0 : i32
    %c0_i32_1 = arith.constant 0 : i32
    return %arg0, %c0_i32, %c0_i32_0 : i32, i32, i32
  }
}

module attributes {stable_mosaic.version = 11 : i64} {
  func.func @_gather_ffn_norm_kernel(%arg0: i32, %arg1: memref<1x12x1xi32, #tpu.memory_space<vmem>>, %arg2: memref<1x16x128xf32, #tpu.memory_space<vmem>>, %arg3: memref<128x512xf32, #tpu.memory_space<vmem>>, %arg4: memref<1x512xf32, #tpu.memory_space<vmem>>, %arg5: memref<512x128xf32, #tpu.memory_space<vmem>>, %arg6: memref<1x128xf32, #tpu.memory_space<vmem>>, %arg7: memref<1x128xf32, #tpu.memory_space<vmem>>, %arg8: memref<1x128xf32, #tpu.memory_space<vmem>>, %arg9: memref<1x12x128xf32, #tpu.memory_space<vmem>>) attributes {dimension_semantics = [#tpu.dimension_semantics<parallel>], iteration_bounds = array<i64: 2>, scalar_prefetch = 0 : i64, scratch_operands = 0 : i64, tpu.core_type = #tpu.core_type<tc>, window_params = [{transform_indices = @transform_0, window_bounds = array<i64: 1, 12, 1>}, {transform_indices = @transform_1, window_bounds = array<i64: 1, 16, 128>}, {pipeline_mode = #tpu.pipeline_mode<synchronous>, transform_indices = @transform_2, window_bounds = array<i64: 128, 512>}, {pipeline_mode = #tpu.pipeline_mode<synchronous>, transform_indices = @transform_3, window_bounds = array<i64: 1, 512>}, {pipeline_mode = #tpu.pipeline_mode<synchronous>, transform_indices = @transform_4, window_bounds = array<i64: 512, 128>}, {pipeline_mode = #tpu.pipeline_mode<synchronous>, transform_indices = @transform_5, window_bounds = array<i64: 1, 128>}, {pipeline_mode = #tpu.pipeline_mode<synchronous>, transform_indices = @transform_6, window_bounds = array<i64: 1, 128>}, {pipeline_mode = #tpu.pipeline_mode<synchronous>, transform_indices = @transform_7, window_bounds = array<i64: 1, 128>}, {transform_indices = @transform_8, window_bounds = array<i64: 1, 12, 128>}]} {
    %c0 = arith.constant 0 : index
    %c0_0 = arith.constant 0 : index
    %c0_1 = arith.constant 0 : index
    %0 = vector.load %arg2[%c0, %c0_0, %c0_1] : memref<1x16x128xf32, #tpu.memory_space<vmem>>, vector<1x16x128xf32>
    %1 = vector.shape_cast %0 : vector<1x16x128xf32> to vector<16x128xf32>
    %c0_2 = arith.constant 0 : index
    %c0_3 = arith.constant 0 : index
    %c0_4 = arith.constant 0 : index
    %2 = vector.load %arg1[%c0_2, %c0_3, %c0_4] : memref<1x12x1xi32, #tpu.memory_space<vmem>>, vector<1x12x1xi32>
    %3 = vector.shape_cast %2 : vector<1x12x1xi32> to vector<12x1xi32>
    %4 = tpu.iota {dimensions = array<i32: 1>} : vector<12x16xi32>
    %5 = vector.broadcast %3 : vector<12x1xi32> to vector<12x16xi32>
    %6 = arith.cmpi eq, %4, %5 : vector<12x16xi32>
    %7 = arith.extui %6 : vector<12x16xi1> to vector<12x16xi32>
    %8 = arith.sitofp %7 : vector<12x16xi32> to vector<12x16xf32>
    %cst = arith.constant dense<0.000000e+00> : vector<12x128xf32>
    %9 = tpu.matmul %8, %1, %cst {dimension_numbers = #tpu.dot_dimension_numbers<[1], [0], [0], [1], [0, 0, 1, 1], [], []>} : vector<12x16xf32>, vector<16x128xf32>, vector<12x128xf32> -> vector<12x128xf32>
    %c0_5 = arith.constant 0 : index
    %c0_6 = arith.constant 0 : index
    %10 = vector.load %arg3[%c0_5, %c0_6] : memref<128x512xf32, #tpu.memory_space<vmem>>, vector<128x512xf32>
    %cst_7 = arith.constant dense<0.000000e+00> : vector<12x512xf32>
    %11 = tpu.matmul %9, %10, %cst_7 {dimension_numbers = #tpu.dot_dimension_numbers<[1], [0], [0], [1], [0, 0, 1, 1], [], []>} : vector<12x128xf32>, vector<128x512xf32>, vector<12x512xf32> -> vector<12x512xf32>
    %c0_8 = arith.constant 0 : index
    %c0_9 = arith.constant 0 : index
    %12 = vector.load %arg4[%c0_8, %c0_9] : memref<1x512xf32, #tpu.memory_space<vmem>>, vector<1x512xf32>
    %13 = vector.broadcast %12 : vector<1x512xf32> to vector<12x512xf32>
    %14 = arith.addf %11, %13 : vector<12x512xf32>
    %cst_10 = arith.constant 5.000000e-01 : f32
    %15 = vector.broadcast %cst_10 : f32 to vector<12x512xf32>
    %16 = arith.mulf %15, %14 : vector<12x512xf32>
    %cst_11 = arith.constant 4.471500e-02 : f32
    %17 = vector.broadcast %cst_11 : f32 to vector<12x512xf32>
    %18 = arith.mulf %17, %14 : vector<12x512xf32>
    %19 = arith.mulf %18, %14 : vector<12x512xf32>
    %20 = arith.mulf %19, %14 : vector<12x512xf32>
    %21 = arith.addf %14, %20 : vector<12x512xf32>
    %cst_12 = arith.constant 0.797884583 : f32
    %22 = vector.broadcast %cst_12 : f32 to vector<12x512xf32>
    %23 = arith.mulf %22, %21 : vector<12x512xf32>
    %24 = math.tanh %23 : vector<12x512xf32>
    %cst_13 = arith.constant 1.000000e+00 : f32
    %25 = vector.broadcast %cst_13 : f32 to vector<12x512xf32>
    %26 = arith.addf %25, %24 : vector<12x512xf32>
    %27 = arith.mulf %16, %26 : vector<12x512xf32>
    %c0_14 = arith.constant 0 : index
    %c0_15 = arith.constant 0 : index
    %28 = vector.load %arg5[%c0_14, %c0_15] : memref<512x128xf32, #tpu.memory_space<vmem>>, vector<512x128xf32>
    %cst_16 = arith.constant dense<0.000000e+00> : vector<12x128xf32>
    %29 = tpu.matmul %27, %28, %cst_16 {dimension_numbers = #tpu.dot_dimension_numbers<[1], [0], [0], [1], [0, 0, 1, 1], [], []>} : vector<12x512xf32>, vector<512x128xf32>, vector<12x128xf32> -> vector<12x128xf32>
    %c0_17 = arith.constant 0 : index
    %c0_18 = arith.constant 0 : index
    %30 = vector.load %arg6[%c0_17, %c0_18] : memref<1x128xf32, #tpu.memory_space<vmem>>, vector<1x128xf32>
    %31 = vector.broadcast %30 : vector<1x128xf32> to vector<12x128xf32>
    %32 = arith.addf %29, %31 : vector<12x128xf32>
    %c0_19 = arith.constant 0 : index
    %c0_20 = arith.constant 0 : index
    %33 = vector.load %arg7[%c0_19, %c0_20] : memref<1x128xf32, #tpu.memory_space<vmem>>, vector<1x128xf32>
    %c0_21 = arith.constant 0 : index
    %c0_22 = arith.constant 0 : index
    %34 = vector.load %arg8[%c0_21, %c0_22] : memref<1x128xf32, #tpu.memory_space<vmem>>, vector<1x128xf32>
    %cst_23 = arith.constant dense<0.000000e+00> : vector<12xf32>
    %35 = vector.multi_reduction <add>, %32, %cst_23 [1] : vector<12x128xf32> to vector<12xf32>
    %36 = vector.shape_cast %35 : vector<12xf32> to vector<12x1xf32>
    %cst_24 = arith.constant 1.280000e+02 : f32
    %37 = vector.broadcast %cst_24 : f32 to vector<12x1xf32>
    %38 = arith.divf %36, %37 : vector<12x1xf32>
    %39 = vector.broadcast %38 : vector<12x1xf32> to vector<12x128xf32>
    %40 = arith.subf %32, %39 : vector<12x128xf32>
    %41 = arith.mulf %40, %40 : vector<12x128xf32>
    %cst_25 = arith.constant dense<0.000000e+00> : vector<12xf32>
    %42 = vector.multi_reduction <add>, %41, %cst_25 [1] : vector<12x128xf32> to vector<12xf32>
    %43 = vector.shape_cast %42 : vector<12xf32> to vector<12x1xf32>
    %cst_26 = arith.constant 1.280000e+02 : f32
    %44 = vector.broadcast %cst_26 : f32 to vector<12x1xf32>
    %45 = arith.divf %43, %44 : vector<12x1xf32>
    %46 = vector.broadcast %38 : vector<12x1xf32> to vector<12x128xf32>
    %47 = arith.subf %32, %46 : vector<12x128xf32>
    %cst_27 = arith.constant 9.99999974E-6 : f32
    %48 = vector.broadcast %cst_27 : f32 to vector<12x1xf32>
    %49 = arith.addf %45, %48 : vector<12x1xf32>
    %50 = math.rsqrt %49 : vector<12x1xf32>
    %51 = vector.broadcast %50 : vector<12x1xf32> to vector<12x128xf32>
    %52 = arith.mulf %47, %51 : vector<12x128xf32>
    %53 = vector.broadcast %33 : vector<1x128xf32> to vector<12x128xf32>
    %54 = arith.mulf %52, %53 : vector<12x128xf32>
    %55 = vector.broadcast %34 : vector<1x128xf32> to vector<12x128xf32>
    %56 = arith.addf %54, %55 : vector<12x128xf32>
    %c0_28 = arith.constant 0 : index
    %c0_29 = arith.constant 0 : index
    %c0_30 = arith.constant 0 : index
    %57 = vector.load %arg9[%c0_28, %c0_29, %c0_30] : memref<1x12x128xf32, #tpu.memory_space<vmem>>, vector<1x12x128xf32>
    %58 = vector.shape_cast %57 : vector<1x12x128xf32> to vector<12x128xf32>
    %59 = vector.shape_cast %56 : vector<12x128xf32> to vector<1x12x128xf32>
    tpu.vector_store %arg9[%c0_28, %c0_29, %c0_30], %59 {strides = array<i32>} : memref<1x12x128xf32, #tpu.memory_space<vmem>>, vector<1x12x128xf32>,
    return
  }
  func.func @transform_0(%arg0: i32) -> (i32, i32, i32) {
    %c0_i32 = arith.constant 0 : i32
    %c0_i32_0 = arith.constant 0 : i32
    %c0_i32_1 = arith.constant 0 : i32
    return %arg0, %c0_i32, %c0_i32_0 : i32, i32, i32
  }
  func.func @transform_1(%arg0: i32) -> (i32, i32, i32) {
    %c0_i32 = arith.constant 0 : i32
    %c0_i32_0 = arith.constant 0 : i32
    %c0_i32_1 = arith.constant 0 : i32
    return %arg0, %c0_i32, %c0_i32_0 : i32, i32, i32
  }
  func.func @transform_2(%arg0: i32) -> (i32, i32) {
    %c0_i32 = arith.constant 0 : i32
    %c0_i32_0 = arith.constant 0 : i32
    %c0_i32_1 = arith.constant 0 : i32
    return %c0_i32, %c0_i32_0 : i32, i32
  }
  func.func @transform_3(%arg0: i32) -> (i32, i32) {
    %c0_i32 = arith.constant 0 : i32
    %c0_i32_0 = arith.constant 0 : i32
    %c0_i32_1 = arith.constant 0 : i32
    return %c0_i32, %c0_i32_0 : i32, i32
  }
  func.func @transform_4(%arg0: i32) -> (i32, i32) {
    %c0_i32 = arith.constant 0 : i32
    %c0_i32_0 = arith.constant 0 : i32
    %c0_i32_1 = arith.constant 0 : i32
    return %c0_i32, %c0_i32_0 : i32, i32
  }
  func.func @transform_5(%arg0: i32) -> (i32, i32) {
    %c0_i32 = arith.constant 0 : i32
    %c0_i32_0 = arith.constant 0 : i32
    %c0_i32_1 = arith.constant 0 : i32
    return %c0_i32, %c0_i32_0 : i32, i32
  }
  func.func @transform_6(%arg0: i32) -> (i32, i32) {
    %c0_i32 = arith.constant 0 : i32
    %c0_i32_0 = arith.constant 0 : i32
    %c0_i32_1 = arith.constant 0 : i32
    return %c0_i32, %c0_i32_0 : i32, i32
  }
  func.func @transform_7(%arg0: i32) -> (i32, i32) {
    %c0_i32 = arith.constant 0 : i32
    %c0_i32_0 = arith.constant 0 : i32
    %c0_i32_1 = arith.constant 0 : i32
    return %c0_i32, %c0_i32_0 : i32, i32
  }
  func.func @transform_8(%arg0: i32) -> (i32, i32, i32) {
    %c0_i32 = arith.constant 0 : i32
    %c0_i32_0 = arith.constant 0 : i32
    %c0_i32_1 = arith.constant 0 : i32
    return %arg0, %c0_i32, %c0_i32_0 : i32, i32, i32
  }
}

</mosaic_0001>

<llo_original>
// kernel: attention_pooling_removal.3
$region0: #{attention_pooling_removal.3}
  #allocation0 [shape = 'u32[]', space=smem, size = 0x4, offset = 0x4, fixed_abs, tag = 'smem constant byte address 0x4 - core index']
  #allocation1 [shape = 'u32[144,128]{1,0:T(1,128)}', space=vmem, size = 0x12000, scoped, tag = 'internal scratch']
  %s0 = inlined_call_operand.vmem [shape: s32[2,12,1], index: 0, kind: input, shape index: {}]
  %s1 = inlined_call_operand.vmem [shape: f32[2,16,128], index: 1, kind: input, shape index: {}]
  %s2 = inlined_call_operand.vmem [shape: f32[128,512], index: 2, kind: input, shape index: {}]
  %s3 = inlined_call_operand.vmem [shape: f32[1,512], index: 3, kind: input, shape index: {}]
  %s4 = inlined_call_operand.hbm [shape: f32[512,128], index: 4, kind: input, shape index: {}]
  %s5 = inlined_call_operand.vmem [shape: f32[1,128], index: 5, kind: input, shape index: {}]
  %s6 = inlined_call_operand.vmem [shape: f32[1,128], index: 6, kind: input, shape index: {}]
  %s7 = inlined_call_operand.vmem [shape: f32[1,128], index: 7, kind: input, shape index: {}]
  %s8 = inlined_call_operand.vmem [shape: f32[2,12,128], index: 8, kind: output, shape index: {}]
  %s9 = sld [smem:[#allocation0]]
  $region69: #{attention_pooling_removal.3} parent=0
    _
  %s11 = ssub.s32 1, %s9
  %s12 = scalar_select 0, %s11, %s9
  $region1: #{attention_pooling_removal.3} parent=0
    #allocation2 [shape = 'u8[262144]{0}', space=vmem, size = 0x40000, scoped, tag = 'input window, operand 4, single buffered']
    #allocation3 [shape = 's32[2]{0}', space=sflag, size = 0x8, scoped, tag = 'scoped memory for attention_pooling_removal.3']
    %13 = vsyncpa [#allocation3], 0
    loop: start=0, step=1, limit=4
    $region2: #{attention_pooling_removal.3} parent=1 // loop_pre_header
      _
    $region3: #{attention_pooling_removal.3} parent=1 // loop_header
      %s15 = sphi 0, %s19
      %p16 = scmp.ge.s32.totalorder %s15, 4
      %s25 = sphi 0, %s27
      %s28 = sphi 0, %s25
      %s29 = sphi 0, %s28
      %s45 = sphi 0, %s29
      %s51 = sphi 0, %s53
      %s54 = sphi 0, %s51
      %s55 = sphi 0, %s54
      %s71 = sphi 0, %s55
      %s75 = sphi 0, %s75
      %s77 = sphi 0, %s75
      %s78 = sphi 0, %s77
      %s92 = sphi 0, %s78
      %s96 = sphi 0, %s96
      %s98 = sphi 0, %s96
      %s99 = sphi 0, %s98
      %s113 = sphi 0, %s99
      %s117 = sphi 0, %s117
      %s119 = sphi 0, %s117
      %s120 = sphi 0, %s119
      %s134 = sphi 0, %s120
      %s138 = sphi 0, %s138
      %s140 = sphi 0, %s138
      %s141 = sphi 0, %s140
      %s155 = sphi 0, %s141
      %s159 = sphi 0, %s159
      %s161 = sphi 0, %s159
      %s162 = sphi 0, %s161
      %s176 = sphi 0, %s162
      %s180 = sphi 0, %s180
      %s182 = sphi 0, %s180
      %s183 = sphi 0, %s182
      %s197 = sphi 0, %s183
      %s203 = sphi 0, %s205
      %s206 = sphi 0, %s203
      %s207 = sphi 0, %s206
      %s223 = sphi 0, %s207
    $region4: #{attention_pooling_removal.3} parent=1 // loop_header_branch
      %18 = sbr.rel (%p16) target = $region8
    $region5: #{attention_pooling_removal.3} parent=1 // loop_body
      %s20 = ssub.s32 %s15, 1
      %s21 = ssub.s32 %s15, 2
      %s22 = sadd.s32 %s15, 1
      %s23 = ssub.s32 %s15, %s22
      %p24 = scmp.eq.s32.totalorder %s23, 0
      %s26 = sadd.s32 %s25, 1
      %s27 = scalar_select %p24, %s25, %s26
      %p30 = pneg %p24
      %p31 = scmp.eq.s32.totalorder %s15, 1
      %p32 = por %p30, %p31
      %p33 = scmp.ne.s32.totalorder %s25, %s28
      %p34 = scmp.eq.s32.totalorder %s15, 0
      %p35 = por %p33, %p34
      %p36 = scmp.ne.s32.totalorder %s25, %s28
      %p37 = scmp.eq.s32.totalorder %s20, 1
      %p38 = por %p36, %p37
      %p39 = scmp.ne.s32.totalorder %s28, %s29
      %p40 = scmp.eq.s32.totalorder %s20, 0
      %p41 = por %p39, %p40
      %p42 = scmp.ne.s32.totalorder %s28, %s29
      %p43 = scmp.eq.s32.totalorder %s21, 1
      %p44 = por %p42, %p43
      %p46 = scmp.ne.s32.totalorder %s29, %s45
      %p47 = scmp.eq.s32.totalorder %s21, 0
      %p48 = por %p46, %p47
      %s49 = ssub.s32 %s15, %s22
      %p50 = scmp.eq.s32.totalorder %s49, 0
      %s52 = sadd.s32 %s51, 1
      %s53 = scalar_select %p50, %s51, %s52
      %p56 = pneg %p50
      %p57 = scmp.eq.s32.totalorder %s15, 1
      %p58 = por %p56, %p57
      %p59 = scmp.ne.s32.totalorder %s51, %s54
      %p60 = scmp.eq.s32.totalorder %s15, 0
      %p61 = por %p59, %p60
      %p62 = scmp.ne.s32.totalorder %s51, %s54
      %p63 = scmp.eq.s32.totalorder %s20, 1
      %p64 = por %p62, %p63
      %p65 = scmp.ne.s32.totalorder %s54, %s55
      %p66 = scmp.eq.s32.totalorder %s20, 0
      %p67 = por %p65, %p66
      %p68 = scmp.ne.s32.totalorder %s54, %s55
      %p69 = scmp.eq.s32.totalorder %s21, 1
      %p70 = por %p68, %p69
      %p72 = scmp.ne.s32.totalorder %s55, %s71
      %p73 = scmp.eq.s32.totalorder %s21, 0
      %p74 = por %p72, %p73
      %s76 = sadd.s32 %s75, 1
      %p79 = scmp.eq.s32.totalorder %s15, 1
      %p80 = scmp.ne.s32.totalorder %s75, %s77
      %p81 = scmp.eq.s32.totalorder %s15, 0
      %p82 = por %p80, %p81
      %p83 = scmp.ne.s32.totalorder %s75, %s77
      %p84 = scmp.eq.s32.totalorder %s20, 1
      %p85 = por %p83, %p84
      %p86 = scmp.ne.s32.totalorder %s77, %s78
      %p87 = scmp.eq.s32.totalorder %s20, 0
      %p88 = por %p86, %p87
      %p89 = scmp.ne.s32.totalorder %s77, %s78
      %p90 = scmp.eq.s32.totalorder %s21, 1
      %p91 = por %p89, %p90
      %p93 = scmp.ne.s32.totalorder %s78, %s92
      %p94 = scmp.eq.s32.totalorder %s21, 0
      %p95 = por %p93, %p94
      %s97 = sadd.s32 %s96, 1
      %p100 = scmp.eq.s32.totalorder %s15, 1
      %p101 = scmp.ne.s32.totalorder %s96, %s98
      %p102 = scmp.eq.s32.totalorder %s15, 0
      %p103 = por %p101, %p102
      %p104 = scmp.ne.s32.totalorder %s96, %s98
      %p105 = scmp.eq.s32.totalorder %s20, 1
      %p106 = por %p104, %p105
      %p107 = scmp.ne.s32.totalorder %s98, %s99
      %p108 = scmp.eq.s32.totalorder %s20, 0
      %p109 = por %p107, %p108
      %p110 = scmp.ne.s32.totalorder %s98, %s99
      %p111 = scmp.eq.s32.totalorder %s21, 1
      %p112 = por %p110, %p111
      %p114 = scmp.ne.s32.totalorder %s99, %s113
      %p115 = scmp.eq.s32.totalorder %s21, 0
      %p116 = por %p114, %p115
      %s118 = sadd.s32 %s117, 1
      %p121 = scmp.eq.s32.totalorder %s15, 1
      %p122 = scmp.ne.s32.totalorder %s117, %s119
      %p123 = scmp.eq.s32.totalorder %s15, 0
      %p124 = por %p122, %p123
      %p125 = scmp.ne.s32.totalorder %s117, %s119
      %p126 = scmp.eq.s32.totalorder %s20, 1
      %p127 = por %p125, %p126
      %p128 = scmp.ne.s32.totalorder %s119, %s120
      %p129 = scmp.eq.s32.totalorder %s20, 0
      %p130 = por %p128, %p129
      %p131 = scmp.ne.s32.totalorder %s119, %s120
      %p132 = scmp.eq.s32.totalorder %s21, 1
      %p133 = por %p131, %p132
      %p135 = scmp.ne.s32.totalorder %s120, %s134
      %p136 = scmp.eq.s32.totalorder %s21, 0
      %p137 = por %p135, %p136
      %s139 = sadd.s32 %s138, 1
      %p142 = scmp.eq.s32.totalorder %s15, 1
      %p143 = scmp.ne.s32.totalorder %s138, %s140
      %p144 = scmp.eq.s32.totalorder %s15, 0
      %p145 = por %p143, %p144
      %p146 = scmp.ne.s32.totalorder %s138, %s140
      %p147 = scmp.eq.s32.totalorder %s20, 1
      %p148 = por %p146, %p147
      %p149 = scmp.ne.s32.totalorder %s140, %s141
      %p150 = scmp.eq.s32.totalorder %s20, 0
      %p151 = por %p149, %p150
      %p152 = scmp.ne.s32.totalorder %s140, %s141
      %p153 = scmp.eq.s32.totalorder %s21, 1
      %p154 = por %p152, %p153
      %p156 = scmp.ne.s32.totalorder %s141, %s155
      %p157 = scmp.eq.s32.totalorder %s21, 0
      %p158 = por %p156, %p157
      %s160 = sadd.s32 %s159, 1
      %p163 = scmp.eq.s32.totalorder %s15, 1
      %p164 = scmp.ne.s32.totalorder %s159, %s161
      %p165 = scmp.eq.s32.totalorder %s15, 0
      %p166 = por %p164, %p165
      %p167 = scmp.ne.s32.totalorder %s159, %s161
      %p168 = scmp.eq.s32.totalorder %s20, 1
      %p169 = por %p167, %p168
      %p170 = scmp.ne.s32.totalorder %s161, %s162
      %p171 = scmp.eq.s32.totalorder %s20, 0
      %p172 = por %p170, %p171
      %p173 = scmp.ne.s32.totalorder %s161, %s162
      %p174 = scmp.eq.s32.totalorder %s21, 1
      %p175 = por %p173, %p174
      %p177 = scmp.ne.s32.totalorder %s162, %s176
      %p178 = scmp.eq.s32.totalorder %s21, 0
      %p179 = por %p177, %p178
      %s181 = sadd.s32 %s180, 1
      %p184 = scmp.eq.s32.totalorder %s15, 1
      %p185 = scmp.ne.s32.totalorder %s180, %s182
      %p186 = scmp.eq.s32.totalorder %s15, 0
      %p187 = por %p185, %p186
      %p188 = scmp.ne.s32.totalorder %s180, %s182
      %p189 = scmp.eq.s32.totalorder %s20, 1
      %p190 = por %p188, %p189
      %p191 = scmp.ne.s32.totalorder %s182, %s183
      %p192 = scmp.eq.s32.totalorder %s20, 0
      %p193 = por %p191, %p192
      %p194 = scmp.ne.s32.totalorder %s182, %s183
      %p195 = scmp.eq.s32.totalorder %s21, 1
      %p196 = por %p194, %p195
      %p198 = scmp.ne.s32.totalorder %s183, %s197
      %p199 = scmp.eq.s32.totalorder %s21, 0
      %p200 = por %p198, %p199
      %s201 = ssub.s32 %s15, %s22
      %p202 = scmp.eq.s32.totalorder %s201, 0
      %s204 = sadd.s32 %s203, 1
      %s205 = scalar_select %p202, %s203, %s204
      %p208 = pneg %p202
      %p209 = scmp.eq.s32.totalorder %s15, 1
      %p210 = por %p208, %p209
      %p211 = scmp.ne.s32.totalorder %s203, %s206
      %p212 = scmp.eq.s32.totalorder %s15, 0
      %p213 = por %p211, %p212
      %p214 = scmp.ne.s32.totalorder %s203, %s206
      %p215 = scmp.eq.s32.totalorder %s20, 1
      %p216 = por %p214, %p215
      %p217 = scmp.ne.s32.totalorder %s206, %s207
      %p218 = scmp.eq.s32.totalorder %s20, 0
      %p219 = por %p217, %p218
      %p220 = scmp.ne.s32.totalorder %s206, %s207
      %p221 = scmp.eq.s32.totalorder %s21, 1
      %p222 = por %p220, %p221
      %p224 = scmp.ne.s32.totalorder %s207, %s223
      %p225 = scmp.eq.s32.totalorder %s21, 0
      %p226 = por %p224, %p225
      %p227 = scmp.le.s32.totalorder 1, %s15
      %p228 = scmp.lt.s32.totalorder %s15, 3
      %p229 = pnand %p227, %p228
      %p230 = pneg %p229
      // Predicated region
      $region9: #{attention_pooling_removal.3} parent=5 // pred_check
        _
      $region10: #{attention_pooling_removal.3} parent=5 // pred_check_branch
        %232 = sbr.rel (%p229) target = $region12
      $region11: #{attention_pooling_removal.3} parent=5 // pred_region
        %s233 = ssub.s32 %s15, 1
        // Predicated region
        $region13: #{attention_pooling_removal.3} parent=11 // pred_check
          %p234 = pneg %p88
        $region14: #{attention_pooling_removal.3} parent=11 // pred_check_branch
          %236 = sbr.rel (%p234) target = $region16
        $region15: #{attention_pooling_removal.3} parent=11 // pred_region
          _
        $region16: #{attention_pooling_removal.3} parent=11 // pred_fallthru
          _
        // Predicated region
        $region17: #{attention_pooling_removal.3} parent=11 // pred_check
          %p237 = pneg %p109
        $region18: #{attention_pooling_removal.3} parent=11 // pred_check_branch
          %239 = sbr.rel (%p237) target = $region20
        $region19: #{attention_pooling_removal.3} parent=11 // pred_region
          _
        $region20: #{attention_pooling_removal.3} parent=11 // pred_fallthru
          _
        // Predicated region
        $region21: #{attention_pooling_removal.3} parent=11 // pred_check
          %p240 = pneg %p130
        $region22: #{attention_pooling_removal.3} parent=11 // pred_check_branch
          %242 = sbr.rel (%p240) target = $region24
        $region23: #{attention_pooling_removal.3} parent=11 // pred_region
          %s244 = ssub.s32 8192, 8192
          %245 = vsyncadd [#allocation3], %s244
          %s246 = sshll.u32 [#allocation2], 4
          %s247 = int_to_ptr.vmem [resolvable:$true] %s246
          %252 = dma.hbm_to_vmem [thread:$0]  %s4, 8192, %s247, [#allocation3], 128, 128, 8
        $region24: #{attention_pooling_removal.3} parent=11 // pred_fallthru
          _
        // Predicated region
        $region25: #{attention_pooling_removal.3} parent=11 // pred_check
          %p253 = pneg %p151
        $region26: #{attention_pooling_removal.3} parent=11 // pred_check_branch
          %255 = sbr.rel (%p253) target = $region28
        $region27: #{attention_pooling_removal.3} parent=11 // pred_region
          _
        $region28: #{attention_pooling_removal.3} parent=11 // pred_fallthru
          _
        // Predicated region
        $region29: #{attention_pooling_removal.3} parent=11 // pred_check
          %p256 = pneg %p172
        $region30: #{attention_pooling_removal.3} parent=11 // pred_check_branch
          %258 = sbr.rel (%p256) target = $region32
        $region31: #{attention_pooling_removal.3} parent=11 // pred_region
          _
        $region32: #{attention_pooling_removal.3} parent=11 // pred_fallthru
          _
        // Predicated region
        $region33: #{attention_pooling_removal.3} parent=11 // pred_check
          %p259 = pneg %p193
        $region34: #{attention_pooling_removal.3} parent=11 // pred_check_branch
          %261 = sbr.rel (%p259) target = $region36
        $region35: #{attention_pooling_removal.3} parent=11 // pred_region
          _
        $region36: #{attention_pooling_removal.3} parent=11 // pred_fallthru
          _
      $region12: #{attention_pooling_removal.3} parent=5 // pred_fallthru
        _
      %p262 = scmp.lt.s32.totalorder %s15, 2
      // Predicated region
      $region37: #{attention_pooling_removal.3} parent=5 // pred_check
        %p263 = pneg %p262
      $region38: #{attention_pooling_removal.3} parent=5 // pred_check_branch
        %265 = sbr.rel (%p263) target = $region40
      $region39: #{attention_pooling_removal.3} parent=5 // pred_region
        // Predicated region
        $region41: #{attention_pooling_removal.3} parent=39 // pred_check
          %p266 = pneg %p35
        $region42: #{attention_pooling_removal.3} parent=39 // pred_check_branch
          %268 = sbr.rel (%p266) target = $region44
        $region43: #{attention_pooling_removal.3} parent=39 // pred_region
          %p269 = scmp.lt.s32.totalorder %s15, 1
          %s270 = scalar_select %p269, %s15, 1
          %s271 = smul.addr %s270, 2
          %s272 = smul.addr %s271, 8
          %s273 = scalar_lea.vmem %s0, %s272
        $region44: #{attention_pooling_removal.3} parent=39 // pred_fallthru
          _
        // Predicated region
        $region45: #{attention_pooling_removal.3} parent=39 // pred_check
          %p274 = pneg %p61
        $region46: #{attention_pooling_removal.3} parent=39 // pred_check_branch
          %276 = sbr.rel (%p274) target = $region48
        $region47: #{attention_pooling_removal.3} parent=39 // pred_region
          %p277 = scmp.lt.s32.totalorder %s15, 1
          %s278 = scalar_select %p277, %s15, 1
          %s279 = smul.addr %s278, 2
          %s280 = smul.addr %s279, 8
          %s281 = scalar_lea.vmem %s1, %s280
        $region48: #{attention_pooling_removal.3} parent=39 // pred_fallthru
          _
      $region40: #{attention_pooling_removal.3} parent=5 // pred_fallthru
        _
      %p282 = scmp.le.s32.totalorder 1, %s15
      %p283 = scmp.lt.s32.totalorder %s15, 3
      %p284 = pnand %p282, %p283
      %p285 = pneg %p284
      // Predicated region
      $region49: #{attention_pooling_removal.3} parent=5 // pred_check
        _
      $region50: #{attention_pooling_removal.3} parent=5 // pred_check_branch
        %287 = sbr.rel (%p284) target = $region52
      $region51: #{attention_pooling_removal.3} parent=5 // pred_region
        %s288 = ssub.s32 %s15, 1
        // Predicated region
        $region53: #{attention_pooling_removal.3} parent=51 // pred_check
          %p289 = pneg %p130
        $region54: #{attention_pooling_removal.3} parent=51 // pred_check_branch
          %291 = sbr.rel (%p289) target = $region56
        $region55: #{attention_pooling_removal.3} parent=51 // pred_region
          %292 = dma.done [#allocation3], 8192
        $region56: #{attention_pooling_removal.3} parent=51 // pred_fallthru
          _
        %p293 = scmp.lt.s32.totalorder %s20, 1
        %s294 = scalar_select %p293, %s20, 1
        %s295 = smul.addr %s294, 2
        %s296 = smul.addr %s295, 8
        %s297 = scalar_lea.vmem %s0, %s296
        %p298 = pneg %p41
        %p299 = pneg %p38
        %p300 = scmp.lt.s32.totalorder %s20, 1
        %s301 = scalar_select %p300, %s20, 1
        %s302 = smul.addr %s301, 2
        %s303 = smul.addr %s302, 8
        %s304 = scalar_lea.vmem %s1, %s303
        %p305 = pneg %p67
        %p306 = pneg %p64
        %p307 = pneg %p88
        %p308 = pneg %p85
        %p309 = pneg %p109
        %p310 = pneg %p106
        %p311 = pneg %p130
        %p312 = pneg %p127
        %p313 = pneg %p151
        %p314 = pneg %p148
        %p315 = pneg %p172
        %p316 = pneg %p169
        %p317 = pneg %p193
        %p318 = pneg %p190
        %p319 = pneg %p219
        %p320 = pneg %p216
        %p321 = scmp.lt.s32.totalorder %s20, 1
        %s322 = scalar_select %p321, %s20, 1
        %s323 = smul.addr %s322, 2
        %s324 = smul.addr %s323, 8
        %s325 = scalar_lea.vmem %s8, %s324
        %p326 = scmp.lt.s32.totalorder %s20, 1
        %s327 = scalar_select %p326, %s20, 1
        %s328 = smul.addr %s327, 2
        %s329 = smul.addr %s328, 8
        %s330 = scalar_lea.vmem %s0, %s329
        %p331 = scmp.lt.s32.totalorder %s20, 1
        %s332 = scalar_select %p331, %s20, 1
        %s333 = smul.addr %s332, 2
        %s334 = smul.addr %s333, 8
        %s335 = scalar_lea.vmem %s1, %s334
        %p336 = scmp.lt.s32.totalorder %s20, 1
        %s337 = scalar_select %p336, %s20, 1
        %s338 = smul.addr %s337, 2
        %s339 = smul.addr %s338, 8
        %s340 = scalar_lea.vmem %s8, %s339
        %v341 = vld [vmem:[%s335] sm:$0xff]
        %v342 = vld [vmem:[%s335 + $0x8] sm:$0xff]
        %v343 = vld [vmem:[%s330] sm:$0xff]
        %v344 = vld [vmem:[%s330 + $0x8] sm:$0xf]
        %v345 = vlaneseq
        %v346 = vand.u32 %v345, 127
        %347 = vset.pattern.permute.xlu0 0
        %348 = vperm.xlu0 %347, %v343
        %v349 = vpop.permute.xlu0 %348
        %350 = vset.pattern.permute.xlu0 0
        %351 = vperm.xlu0 %350, %v344
        %v352 = vpop.permute.xlu0 %351
        %vm353 = vcmp.eq.s32.totalorder %v346, %v349
        %vm354 = vcmp.eq.s32.totalorder %v346, %v352
        %v355 = vsel %vm353, 1, 0
        %v356 = vsel %vm354, 1, 0
        %v357 = vcvt.s32.f32 %v355
        %v358 = vcvt.s32.f32 %v356
        %vm359 = vcmask 130048
        %v361 = vsel %vm359, %v357, 0
        %v364 = vsel %vm359, %v358, 0
        %366 = vmatprep.subr.mxu0 0.0
        %367 = vmatpush1.msra.mxu0 %v341
        %368 = vmatprep.subr.mxu0 0.0
        %369 = vmatpush1.msra.mxu0 %v342
        %370 = vmatprep.subr.mxu0 0.0
        %371 = vmatpush1.msra.mxu0 0.0
        %372 = vmatprep.subr.mxu0 0.0
        %373 = vmatpush1.msra.mxu0 0.0
        %374 = vmatprep.subr.mxu0 0.0
        %375 = vmatpush1.msra.mxu0 0.0
        %376 = vmatprep.subr.mxu0 0.0
        %377 = vmatpush1.msra.mxu0 0.0
        %378 = vmatprep.subr.mxu0 0.0
        %379 = vmatpush1.msra.mxu0 0.0
        %380 = vmatprep.subr.mxu0 0.0
        %381 = vmatpush1.msra.mxu0 0.0
        %382 = vmatprep.subr.mxu0 0.0
        %383 = vmatpush1.msra.mxu0 0.0
        %384 = vmatprep.subr.mxu0 0.0
        %385 = vmatpush1.msra.mxu0 0.0
        %386 = vmatprep.subr.mxu0 0.0
        %387 = vmatpush1.msra.mxu0 0.0
        %388 = vmatprep.subr.mxu0 0.0
        %389 = vmatpush1.msra.mxu0 0.0
        %390 = vmatprep.subr.mxu0 0.0
        %391 = vmatpush1.msra.mxu0 0.0
        %392 = vmatprep.subr.mxu0 0.0
        %393 = vmatpush1.msra.mxu0 0.0
        %394 = vmatprep.subr.mxu0 0.0
        %395 = vmatpush1.msra.mxu0 0.0
        %396 = vmatprep.subr.mxu0 0.0
        %397 = vmatpush1.msra.mxu0 0.0
        %398 = vmatprep.subr.mxu0 0.0
        %399 = vmatpush1.msra.mxu0 0.0
        %400 = vmatprep.subr.mxu0 0.0
        %401 = vmatpush1.msra.mxu0 0.0
        %402 = vmatprep.subr.mxu0 0.0
        %403 = vmatpush1.msra.mxu0 0.0
        %404 = vmatprep.subr.mxu0 0.0
        %405 = vmatpush1.msra.mxu0 0.0
        %406 = vmatprep.subr.mxu0 0.0
        %407 = vmatpush1.msra.mxu0 0.0
        %408 = vmatprep.subr.mxu0 0.0
        %409 = vmatpush1.msra.mxu0 0.0
        %410 = vmatprep.subr.mxu0 0.0
        %411 = vmatpush1.msra.mxu0 0.0
        %412 = vmatprep.subr.mxu0 0.0
        %413 = vmatpush1.msra.mxu0 0.0
        %414 = vmatprep.subr.mxu0 0.0
        %415 = vmatpush1.msra.mxu0 0.0
        %416 = vmatprep.subr.mxu0 0.0
        %417 = vmatpush1.msra.mxu0 0.0
        %418 = vmatprep.subr.mxu0 0.0
        %419 = vmatpush1.msra.mxu0 0.0
        %420 = vmatprep.subr.mxu0 0.0
        %421 = vmatpush1.msra.mxu0 0.0
        %422 = vmatprep.subr.mxu0 0.0
        %423 = vmatpush1.msra.mxu0 0.0
        %424 = vmatprep.subr.mxu0 0.0
        %425 = vmatpush1.msra.mxu0 0.0
        %426 = vmatprep.subr.mxu0 0.0
        %427 = vmatpush1.msra.mxu0 0.0
        %428 = vmatprep.subr.mxu0 0.0
        %429 = vmatpush1.msra.mxu0 0.0
        %430 = vmatprep.mubr.f32.mxu0 0.0
        %431 = vmatmul.mubr.f32.gmra.mrb[0].mxu0 %v361
        %v432 = vpop.f32.mrb[0].mxu0
        %v433 = vadd.f32 0.0, %v432
        %v434 = vpop.f32.mrb[0].mxu0
        %435 = vmatprep.mubr.f32.mxu0 0.0
        %436 = vmatmul.mubr.f32.gmra.mrb[0].mxu0 %v364
        %v437 = vpop.f32.mrb[0].mxu0
        %v438 = vadd.f32 0.0, %v437
        %v439 = vpop.f32.mrb[0].mxu0
        %440 = vdwg.mxu0
        %v441 = vld [vmem:[%s2] sm:$0xff]
        %v442 = vld [vmem:[%s2 + $0x8] sm:$0xff]
        %v443 = vld [vmem:[%s2 + $0x10] sm:$0xff]
        %v444 = vld [vmem:[%s2 + $0x18] sm:$0xff]
        %v445 = vld [vmem:[%s2 + $0x20] sm:$0xff]
        %v446 = vld [vmem:[%s2 + $0x28] sm:$0xff]
        %v447 = vld [vmem:[%s2 + $0x30] sm:$0xff]
        %v448 = vld [vmem:[%s2 + $0x38] sm:$0xff]
        %v449 = vld [vmem:[%s2 + $0x40] sm:$0xff]
        %v450 = vld [vmem:[%s2 + $0x48] sm:$0xff]
        %v451 = vld [vmem:[%s2 + $0x50] sm:$0xff]
        %v452 = vld [vmem:[%s2 + $0x58] sm:$0xff]
        %v453 = vld [vmem:[%s2 + $0x60] sm:$0xff]
        %v454 = vld [vmem:[%s2 + $0x68] sm:$0xff]
        %v455 = vld [vmem:[%s2 + $0x70] sm:$0xff]
        %v456 = vld [vmem:[%s2 + $0x78] sm:$0xff]
        %v457 = vld [vmem:[%s2 + $0x80] sm:$0xff]
        %v458 = vld [vmem:[%s2 + $0x88] sm:$0xff]
        %v459 = vld [vmem:[%s2 + $0x90] sm:$0xff]
        %v460 = vld [vmem:[%s2 + $0x98] sm:$0xff]
        %v461 = vld [vmem:[%s2 + $0xa0] sm:$0xff]
        %v462 = vld [vmem:[%s2 + $0xa8] sm:$0xff]
        %v463 = vld [vmem:[%s2 + $0xb0] sm:$0xff]
        %v464 = vld [vmem:[%s2 + $0xb8] sm:$0xff]
        %v465 = vld [vmem:[%s2 + $0xc0] sm:$0xff]
        %v466 = vld [vmem:[%s2 + $0xc8] sm:$0xff]
        %v467 = vld [vmem:[%s2 + $0xd0] sm:$0xff]
        %v468 = vld [vmem:[%s2 + $0xd8] sm:$0xff]
        %v469 = vld [vmem:[%s2 + $0xe0] sm:$0xff]
        %v470 = vld [vmem:[%s2 + $0xe8] sm:$0xff]
        %v471 = vld [vmem:[%s2 + $0xf0] sm:$0xff]
        %v472 = vld [vmem:[%s2 + $0xf8] sm:$0xff]
        %v473 = vld [vmem:[%s2 + $0x100] sm:$0xff]
        %v474 = vld [vmem:[%s2 + $0x108] sm:$0xff]
        %v475 = vld [vmem:[%s2 + $0x110] sm:$0xff]
        %v476 = vld [vmem:[%s2 + $0x118] sm:$0xff]
        %v477 = vld [vmem:[%s2 + $0x120] sm:$0xff]
        %v478 = vld [vmem:[%s2 + $0x128] sm:$0xff]
        %v479 = vld [vmem:[%s2 + $0x130] sm:$0xff]
        %v480 = vld [vmem:[%s2 + $0x138] sm:$0xff]
        %v481 = vld [vmem:[%s2 + $0x140] sm:$0xff]
        %v482 = vld [vmem:[%s2 + $0x148] sm:$0xff]
        %v483 = vld [vmem:[%s2 + $0x150] sm:$0xff]
        %v484 = vld [vmem:[%s2 + $0x158] sm:$0xff]
        %v485 = vld [vmem:[%s2 + $0x160] sm:$0xff]
        %v486 = vld [vmem:[%s2 + $0x168] sm:$0xff]
        %v487 = vld [vmem:[%s2 + $0x170] sm:$0xff]
        %v488 = vld [vmem:[%s2 + $0x178] sm:$0xff]
        %v489 = vld [vmem:[%s2 + $0x180] sm:$0xff]
        %v490 = vld [vmem:[%s2 + $0x188] sm:$0xff]
        %v491 = vld [vmem:[%s2 + $0x190] sm:$0xff]
        %v492 = vld [vmem:[%s2 + $0x198] sm:$0xff]
        %v493 = vld [vmem:[%s2 + $0x1a0] sm:$0xff]
        %v494 = vld [vmem:[%s2 + $0x1a8] sm:$0xff]
        %v495 = vld [vmem:[%s2 + $0x1b0] sm:$0xff]
        %v496 = vld [vmem:[%s2 + $0x1b8] sm:$0xff]
        %v497 = vld [vmem:[%s2 + $0x1c0] sm:$0xff]
        %v498 = vld [vmem:[%s2 + $0x1c8] sm:$0xff]
        %v499 = vld [vmem:[%s2 + $0x1d0] sm:$0xff]
        %v500 = vld [vmem:[%s2 + $0x1d8] sm:$0xff]
        %v501 = vld [vmem:[%s2 + $0x1e0] sm:$0xff]
        %v502 = vld [vmem:[%s2 + $0x1e8] sm:$0xff]
        %v503 = vld [vmem:[%s2 + $0x1f0] sm:$0xff]
        %v504 = vld [vmem:[%s2 + $0x1f8] sm:$0xff]
        %v505 = vld [vmem:[%s3] sm:$0xf]
        %v507 = vlaneseq
        %v508 = vshrl.u32 %v507, 7
        %v509 = vsub.s32 0, %v508
        %v510 = vrot.slane %v505, %v509
        %v511 = vlaneseq
        %v512 = vshrl.u32 %v511, 7
        %v513 = vsub.s32 1, %v512
        %v514 = vrot.slane %v505, %v513
        %v515 = vlaneseq
        %v516 = vshrl.u32 %v515, 7
        %v517 = vsub.s32 2, %v516
        %v518 = vrot.slane %v505, %v517
        %v519 = vlaneseq
        %v520 = vshrl.u32 %v519, 7
        %v521 = vsub.s32 3, %v520
        %v522 = vrot.slane %v505, %v521
        %527 = vmatprep.subr.mxu0 %v442
        %528 = vmatpush1.msra.mxu0 %v441
        %529 = vmatprep.subr.mxu0 %v446
        %530 = vmatpush1.msra.mxu0 %v445
        %531 = vmatprep.subr.mxu0 %v450
        %532 = vmatpush1.msra.mxu0 %v449
        %533 = vmatprep.subr.mxu0 %v454
        %534 = vmatpush1.msra.mxu0 %v453
        %535 = vmatprep.subr.mxu0 %v458
        %536 = vmatpush1.msra.mxu0 %v457
        %537 = vmatprep.subr.mxu0 %v462
        %538 = vmatpush1.msra.mxu0 %v461
        %539 = vmatprep.subr.mxu0 %v466
        %540 = vmatpush1.msra.mxu0 %v465
        %541 = vmatprep.subr.mxu0 %v470
        %542 = vmatpush1.msra.mxu0 %v469
        %543 = vmatprep.subr.mxu0 %v474
        %544 = vmatpush1.msra.mxu0 %v473
        %545 = vmatprep.subr.mxu0 %v478
        %546 = vmatpush1.msra.mxu0 %v477
        %547 = vmatprep.subr.mxu0 %v482
        %548 = vmatpush1.msra.mxu0 %v481
        %549 = vmatprep.subr.mxu0 %v486
        %550 = vmatpush1.msra.mxu0 %v485
        %551 = vmatprep.subr.mxu0 %v490
        %552 = vmatpush1.msra.mxu0 %v489
        %553 = vmatprep.subr.mxu0 %v494
        %554 = vmatpush1.msra.mxu0 %v493
        %555 = vmatprep.subr.mxu0 %v498
        %556 = vmatpush1.msra.mxu0 %v497
        %557 = vmatprep.subr.mxu0 %v502
        %558 = vmatpush1.msra.mxu0 %v501
        %559 = vmatprep.subr.mxu0 0.0
        %560 = vmatpush1.msra.mxu0 0.0
        %561 = vmatprep.subr.mxu0 0.0
        %562 = vmatpush1.msra.mxu0 0.0
        %563 = vmatprep.subr.mxu0 0.0
        %564 = vmatpush1.msra.mxu0 0.0
        %565 = vmatprep.subr.mxu0 0.0
        %566 = vmatpush1.msra.mxu0 0.0
        %567 = vmatprep.subr.mxu0 0.0
        %568 = vmatpush1.msra.mxu0 0.0
        %569 = vmatprep.subr.mxu0 0.0
        %570 = vmatpush1.msra.mxu0 0.0
        %571 = vmatprep.subr.mxu0 0.0
        %572 = vmatpush1.msra.mxu0 0.0
        %573 = vmatprep.subr.mxu0 0.0
        %574 = vmatpush1.msra.mxu0 0.0
        %575 = vmatprep.subr.mxu0 0.0
        %576 = vmatpush1.msra.mxu0 0.0
        %577 = vmatprep.subr.mxu0 0.0
        %578 = vmatpush1.msra.mxu0 0.0
        %579 = vmatprep.subr.mxu0 0.0
        %580 = vmatpush1.msra.mxu0 0.0
        %581 = vmatprep.subr.mxu0 0.0
        %582 = vmatpush1.msra.mxu0 0.0
        %583 = vmatprep.subr.mxu0 0.0
        %584 = vmatpush1.msra.mxu0 0.0
        %585 = vmatprep.subr.mxu0 0.0
        %586 = vmatpush1.msra.mxu0 0.0
        %587 = vmatprep.subr.mxu0 0.0
        %588 = vmatpush1.msra.mxu0 0.0
        %589 = vmatprep.subr.mxu0 0.0
        %590 = vmatpush1.msra.mxu0 0.0
        %591 = vmatprep.mubr.f32.mxu0 0.0
        %592 = vmatmul.mubr.f32.gmra.mrb[0].mxu0 %v433
        %v593 = vpop.f32.mrb[0].mxu0
        %v594 = vadd.f32 %v510, %v593
        %v595 = vpop.f32.mrb[0].mxu0
        %v596 = vadd.f32 %v514, %v595
        %597 = vmatprep.mubr.f32.mxu0 0.0
        %598 = vmatmul.mubr.f32.gmra.mrb[0].mxu0 %v438
        %v599 = vpop.f32.mrb[0].mxu0
        %v600 = vadd.f32 %v510, %v599
        %v601 = vpop.f32.mrb[0].mxu0
        %v602 = vadd.f32 %v514, %v601
        %603 = vdwg.mxu0
        %604 = vmatprep.subr.mxu0 %v444
        %605 = vmatpush1.msra.mxu0 %v443
        %606 = vmatprep.subr.mxu0 %v448
        %607 = vmatpush1.msra.mxu0 %v447
        %608 = vmatprep.subr.mxu0 %v452
        %609 = vmatpush1.msra.mxu0 %v451
        %610 = vmatprep.subr.mxu0 %v456
        %611 = vmatpush1.msra.mxu0 %v455
        %612 = vmatprep.subr.mxu0 %v460
        %613 = vmatpush1.msra.mxu0 %v459
        %614 = vmatprep.subr.mxu0 %v464
        %615 = vmatpush1.msra.mxu0 %v463
        %616 = vmatprep.subr.mxu0 %v468
        %617 = vmatpush1.msra.mxu0 %v467
        %618 = vmatprep.subr.mxu0 %v472
        %619 = vmatpush1.msra.mxu0 %v471
        %620 = vmatprep.subr.mxu0 %v476
        %621 = vmatpush1.msra.mxu0 %v475
        %622 = vmatprep.subr.mxu0 %v480
        %623 = vmatpush1.msra.mxu0 %v479
        %624 = vmatprep.subr.mxu0 %v484
        %625 = vmatpush1.msra.mxu0 %v483
        %626 = vmatprep.subr.mxu0 %v488
        %627 = vmatpush1.msra.mxu0 %v487
        %628 = vmatprep.subr.mxu0 %v492
        %629 = vmatpush1.msra.mxu0 %v491
        %630 = vmatprep.subr.mxu0 %v496
        %631 = vmatpush1.msra.mxu0 %v495
        %632 = vmatprep.subr.mxu0 %v500
        %633 = vmatpush1.msra.mxu0 %v499
        %634 = vmatprep.subr.mxu0 %v504
        %635 = vmatpush1.msra.mxu0 %v503
        %636 = vmatprep.subr.mxu0 0.0
        %637 = vmatpush1.msra.mxu0 0.0
        %638 = vmatprep.subr.mxu0 0.0
        %639 = vmatpush1.msra.mxu0 0.0
        %640 = vmatprep.subr.mxu0 0.0
        %641 = vmatpush1.msra.mxu0 0.0
        %642 = vmatprep.subr.mxu0 0.0
        %643 = vmatpush1.msra.mxu0 0.0
        %644 = vmatprep.subr.mxu0 0.0
        %645 = vmatpush1.msra.mxu0 0.0
        %646 = vmatprep.subr.mxu0 0.0
        %647 = vmatpush1.msra.mxu0 0.0
        %648 = vmatprep.subr.mxu0 0.0
        %649 = vmatpush1.msra.mxu0 0.0
        %650 = vmatprep.subr.mxu0 0.0
        %651 = vmatpush1.msra.mxu0 0.0
        %652 = vmatprep.subr.mxu0 0.0
        %653 = vmatpush1.msra.mxu0 0.0
        %654 = vmatprep.subr.mxu0 0.0
        %655 = vmatpush1.msra.mxu0 0.0
        %656 = vmatprep.subr.mxu0 0.0
        %657 = vmatpush1.msra.mxu0 0.0
        %658 = vmatprep.subr.mxu0 0.0
        %659 = vmatpush1.msra.mxu0 0.0
        %660 = vmatprep.subr.mxu0 0.0
        %661 = vmatpush1.msra.mxu0 0.0
        %662 = vmatprep.subr.mxu0 0.0
        %663 = vmatpush1.msra.mxu0 0.0
        %664 = vmatprep.subr.mxu0 0.0
        %665 = vmatpush1.msra.mxu0 0.0
        %666 = vmatprep.subr.mxu0 0.0
        %667 = vmatpush1.msra.mxu0 0.0
        %668 = vmatprep.mubr.f32.mxu0 0.0
        %669 = vmatmul.mubr.f32.gmra.mrb[0].mxu0 %v433
        %v670 = vpop.f32.mrb[0].mxu0
        %v671 = vadd.f32 %v518, %v670
        %v672 = vpop.f32.mrb[0].mxu0
        %v673 = vadd.f32 %v522, %v672
        %674 = vmatprep.mubr.f32.mxu0 0.0
        %675 = vmatmul.mubr.f32.gmra.mrb[0].mxu0 %v438
        %v676 = vpop.f32.mrb[0].mxu0
        %v677 = vadd.f32 %v518, %v676
        %v678 = vpop.f32.mrb[0].mxu0
        %v679 = vadd.f32 %v522, %v678
        %680 = vdwg.mxu0
        %v681 = vmul.f32 %v594, 0.5
        %v682 = vmul.f32 %v596, 0.5
        %v683 = vmul.f32 %v671, 0.5
        %v684 = vmul.f32 %v673, 0.5
        %v685 = vmul.f32 %v600, 0.5
        %v686 = vmul.f32 %v602, 0.5
        %v687 = vmul.f32 %v677, 0.5
        %v688 = vmul.f32 %v679, 0.5
        %v689 = vmul.f32 %v594, 0.044715
        %v690 = vmul.f32 %v596, 0.044715
        %v691 = vmul.f32 %v671, 0.044715
        %v692 = vmul.f32 %v673, 0.044715
        %v693 = vmul.f32 %v600, 0.044715
        %v694 = vmul.f32 %v602, 0.044715
        %v695 = vmul.f32 %v677, 0.044715
        %v696 = vmul.f32 %v679, 0.044715
        %v697 = vmul.f32 %v689, %v594
        %v698 = vmul.f32 %v690, %v596
        %v699 = vmul.f32 %v691, %v671
        %v700 = vmul.f32 %v692, %v673
        %v701 = vmul.f32 %v693, %v600
        %v702 = vmul.f32 %v694, %v602
        %v703 = vmul.f32 %v695, %v677
        %v704 = vmul.f32 %v696, %v679
        %v705 = vmul.f32 %v697, %v594
        %v706 = vmul.f32 %v698, %v596
        %v707 = vmul.f32 %v699, %v671
        %v708 = vmul.f32 %v700, %v673
        %v709 = vmul.f32 %v701, %v600
        %v710 = vmul.f32 %v702, %v602
        %v711 = vmul.f32 %v703, %v677
        %v712 = vmul.f32 %v704, %v679
        %v713 = vadd.f32 %v594, %v705
        %v714 = vadd.f32 %v596, %v706
        %v715 = vadd.f32 %v671, %v707
        %v716 = vadd.f32 %v673, %v708
        %v717 = vadd.f32 %v600, %v709
        %v718 = vadd.f32 %v602, %v710
        %v719 = vadd.f32 %v677, %v711
        %v720 = vadd.f32 %v679, %v712
        %v721 = vmul.f32 %v713, 0.7978846
        %v722 = vmul.f32 %v714, 0.7978846
        %v723 = vmul.f32 %v715, 0.7978846
        %v724 = vmul.f32 %v716, 0.7978846
        %v725 = vmul.f32 %v717, 0.7978846
        %v726 = vmul.f32 %v718, 0.7978846
        %v727 = vmul.f32 %v719, 0.7978846
        %v728 = vmul.f32 %v720, 0.7978846
        %v729 = vtanh.pop %v721
        %v730 = vtanh.pop %v722
        %v731 = vtanh.pop %v723
        %v732 = vtanh.pop %v724
        %v733 = vtanh.pop %v725
        %v734 = vtanh.pop %v726
        %v735 = vtanh.pop %v727
        %v736 = vtanh.pop %v728
        %v737 = vadd.f32 %v729, 1.0
        %v738 = vadd.f32 %v730, 1.0
        %v739 = vadd.f32 %v731, 1.0
        %v740 = vadd.f32 %v732, 1.0
        %v741 = vadd.f32 %v733, 1.0
        %v742 = vadd.f32 %v734, 1.0
        %v743 = vadd.f32 %v735, 1.0
        %v744 = vadd.f32 %v736, 1.0
        %v745 = vmul.f32 %v681, %v737
        %v746 = vmul.f32 %v682, %v738
        %v747 = vmul.f32 %v683, %v739
        %v748 = vmul.f32 %v684, %v740
        %v749 = vmul.f32 %v685, %v741
        %v750 = vmul.f32 %v686, %v742
        %v751 = vmul.f32 %v687, %v743
        %v752 = vmul.f32 %v688, %v744
        %v753 = vld [vmem:[#allocation2] sm:$0xff]
        %v754 = vld [vmem:[#allocation2 + $0x8] sm:$0xff]
        %v755 = vld [vmem:[#allocation2 + $0x10] sm:$0xff]
        %v756 = vld [vmem:[#allocation2 + $0x18] sm:$0xff]
        %v757 = vld [vmem:[#allocation2 + $0x20] sm:$0xff]
        %v758 = vld [vmem:[#allocation2 + $0x28] sm:$0xff]
        %v759 = vld [vmem:[#allocation2 + $0x30] sm:$0xff]
        %v760 = vld [vmem:[#allocation2 + $0x38] sm:$0xff]
        %v761 = vld [vmem:[#allocation2 + $0x40] sm:$0xff]
        %v762 = vld [vmem:[#allocation2 + $0x48] sm:$0xff]
        %v763 = vld [vmem:[#allocation2 + $0x50] sm:$0xff]
        %v764 = vld [vmem:[#allocation2 + $0x58] sm:$0xff]
        %v765 = vld [vmem:[#allocation2 + $0x60] sm:$0xff]
        %v766 = vld [vmem:[#allocation2 + $0x68] sm:$0xff]
        %v767 = vld [vmem:[#allocation2 + $0x70] sm:$0xff]
        %v768 = vld [vmem:[#allocation2 + $0x78] sm:$0xff]
        %v769 = vld [vmem:[#allocation2 + $0x80] sm:$0xff]
        %v770 = vld [vmem:[#allocation2 + $0x88] sm:$0xff]
        %v771 = vld [vmem:[#allocation2 + $0x90] sm:$0xff]
        %v772 = vld [vmem:[#allocation2 + $0x98] sm:$0xff]
        %v773 = vld [vmem:[#allocation2 + $0xa0] sm:$0xff]
        %v774 = vld [vmem:[#allocation2 + $0xa8] sm:$0xff]
        %v775 = vld [vmem:[#allocation2 + $0xb0] sm:$0xff]
        %v776 = vld [vmem:[#allocation2 + $0xb8] sm:$0xff]
        %v777 = vld [vmem:[#allocation2 + $0xc0] sm:$0xff]
        %v778 = vld [vmem:[#allocation2 + $0xc8] sm:$0xff]
        %v779 = vld [vmem:[#allocation2 + $0xd0] sm:$0xff]
        %v780 = vld [vmem:[#allocation2 + $0xd8] sm:$0xff]
        %v781 = vld [vmem:[#allocation2 + $0xe0] sm:$0xff]
        %v782 = vld [vmem:[#allocation2 + $0xe8] sm:$0xff]
        %v783 = vld [vmem:[#allocation2 + $0xf0] sm:$0xff]
        %v784 = vld [vmem:[#allocation2 + $0xf8] sm:$0xff]
        %v785 = vld [vmem:[#allocation2 + $0x100] sm:$0xff]
        %v786 = vld [vmem:[#allocation2 + $0x108] sm:$0xff]
        %v787 = vld [vmem:[#allocation2 + $0x110] sm:$0xff]
        %v788 = vld [vmem:[#allocation2 + $0x118] sm:$0xff]
        %v789 = vld [vmem:[#allocation2 + $0x120] sm:$0xff]
        %v790 = vld [vmem:[#allocation2 + $0x128] sm:$0xff]
        %v791 = vld [vmem:[#allocation2 + $0x130] sm:$0xff]
        %v792 = vld [vmem:[#allocation2 + $0x138] sm:$0xff]
        %v793 = vld [vmem:[#allocation2 + $0x140] sm:$0xff]
        %v794 = vld [vmem:[#allocation2 + $0x148] sm:$0xff]
        %v795 = vld [vmem:[#allocation2 + $0x150] sm:$0xff]
        %v796 = vld [vmem:[#allocation2 + $0x158] sm:$0xff]
        %v797 = vld [vmem:[#allocation2 + $0x160] sm:$0xff]
        %v798 = vld [vmem:[#allocation2 + $0x168] sm:$0xff]
        %v799 = vld [vmem:[#allocation2 + $0x170] sm:$0xff]
        %v800 = vld [vmem:[#allocation2 + $0x178] sm:$0xff]
        %v801 = vld [vmem:[#allocation2 + $0x180] sm:$0xff]
        %v802 = vld [vmem:[#allocation2 + $0x188] sm:$0xff]
        %v803 = vld [vmem:[#allocation2 + $0x190] sm:$0xff]
        %v804 = vld [vmem:[#allocation2 + $0x198] sm:$0xff]
        %v805 = vld [vmem:[#allocation2 + $0x1a0] sm:$0xff]
        %v806 = vld [vmem:[#allocation2 + $0x1a8] sm:$0xff]
        %v807 = vld [vmem:[#allocation2 + $0x1b0] sm:$0xff]
        %v808 = vld [vmem:[#allocation2 + $0x1b8] sm:$0xff]
        %v809 = vld [vmem:[#allocation2 + $0x1c0] sm:$0xff]
        %v810 = vld [vmem:[#allocation2 + $0x1c8] sm:$0xff]
        %v811 = vld [vmem:[#allocation2 + $0x1d0] sm:$0xff]
        %v812 = vld [vmem:[#allocation2 + $0x1d8] sm:$0xff]
        %v813 = vld [vmem:[#allocation2 + $0x1e0] sm:$0xff]
        %v814 = vld [vmem:[#allocation2 + $0x1e8] sm:$0xff]
        %v815 = vld [vmem:[#allocation2 + $0x1f0] sm:$0xff]
        %v816 = vld [vmem:[#allocation2 + $0x1f8] sm:$0xff]
        %v817 = vld [vmem:[%s5] sm:$0x1]
        %v819 = vlaneseq
        %v820 = vshrl.u32 %v819, 7
        %v821 = vsub.s32 0, %v820
        %v822 = vrot.slane %v817, %v821
        %824 = vmatprep.subr.mxu0 0.0
        %825 = vmatpush1.msra.mxu0 %v753
        %826 = vmatprep.subr.mxu0 0.0
        %827 = vmatpush1.msra.mxu0 %v754
        %828 = vmatprep.subr.mxu0 0.0
        %829 = vmatpush1.msra.mxu0 %v755
        %830 = vmatprep.subr.mxu0 0.0
        %831 = vmatpush1.msra.mxu0 %v756
        %832 = vmatprep.subr.mxu0 0.0
        %833 = vmatpush1.msra.mxu0 %v757
        %834 = vmatprep.subr.mxu0 0.0
        %835 = vmatpush1.msra.mxu0 %v758
        %836 = vmatprep.subr.mxu0 0.0
        %837 = vmatpush1.msra.mxu0 %v759
        %838 = vmatprep.subr.mxu0 0.0
        %839 = vmatpush1.msra.mxu0 %v760
        %840 = vmatprep.subr.mxu0 0.0
        %841 = vmatpush1.msra.mxu0 %v761
        %842 = vmatprep.subr.mxu0 0.0
        %843 = vmatpush1.msra.mxu0 %v762
        %844 = vmatprep.subr.mxu0 0.0
        %845 = vmatpush1.msra.mxu0 %v763
        %846 = vmatprep.subr.mxu0 0.0
        %847 = vmatpush1.msra.mxu0 %v764
        %848 = vmatprep.subr.mxu0 0.0
        %849 = vmatpush1.msra.mxu0 %v765
        %850 = vmatprep.subr.mxu0 0.0
        %851 = vmatpush1.msra.mxu0 %v766
        %852 = vmatprep.subr.mxu0 0.0
        %853 = vmatpush1.msra.mxu0 %v767
        %854 = vmatprep.subr.mxu0 0.0
        %855 = vmatpush1.msra.mxu0 %v768
        %856 = vmatprep.subr.mxu0 0.0
        %857 = vmatpush1.msra.mxu0 %v769
        %858 = vmatprep.subr.mxu0 0.0
        %859 = vmatpush1.msra.mxu0 %v770
        %860 = vmatprep.subr.mxu0 0.0
        %861 = vmatpush1.msra.mxu0 %v771
        %862 = vmatprep.subr.mxu0 0.0
        %863 = vmatpush1.msra.mxu0 %v772
        %864 = vmatprep.subr.mxu0 0.0
        %865 = vmatpush1.msra.mxu0 %v773
        %866 = vmatprep.subr.mxu0 0.0
        %867 = vmatpush1.msra.mxu0 %v774
        %868 = vmatprep.subr.mxu0 0.0
        %869 = vmatpush1.msra.mxu0 %v775
        %870 = vmatprep.subr.mxu0 0.0
        %871 = vmatpush1.msra.mxu0 %v776
        %872 = vmatprep.subr.mxu0 0.0
        %873 = vmatpush1.msra.mxu0 %v777
        %874 = vmatprep.subr.mxu0 0.0
        %875 = vmatpush1.msra.mxu0 %v778
        %876 = vmatprep.subr.mxu0 0.0
        %877 = vmatpush1.msra.mxu0 %v779
        %878 = vmatprep.subr.mxu0 0.0
        %879 = vmatpush1.msra.mxu0 %v780
        %880 = vmatprep.subr.mxu0 0.0
        %881 = vmatpush1.msra.mxu0 %v781
        %882 = vmatprep.subr.mxu0 0.0
        %883 = vmatpush1.msra.mxu0 %v782
        %884 = vmatprep.subr.mxu0 0.0
        %885 = vmatpush1.msra.mxu0 %v783
        %886 = vmatprep.subr.mxu0 0.0
        %887 = vmatpush1.msra.mxu0 %v784
        %888 = vmatprep.mubr.f32.mxu0 %v746
        %889 = vmatmul.mubr.f32.gmra.mrb[0].mxu0 %v745
        %v890 = vpop.f32.mrb[0].mxu0
        %v891 = vadd.f32 %v822, %v890
        %v892 = vpop.f32.mrb[0].mxu0
        %893 = vmatprep.mubr.f32.mxu0 %v750
        %894 = vmatmul.mubr.f32.gmra.mrb[0].mxu0 %v749
        %v895 = vpop.f32.mrb[0].mxu0
        %v896 = vadd.f32 %v822, %v895
        %v897 = vpop.f32.mrb[0].mxu0
        %898 = vdwg.mxu0
        %899 = vmatprep.subr.mxu0 0.0
        %900 = vmatpush1.msra.mxu0 %v785
        %901 = vmatprep.subr.mxu0 0.0
        %902 = vmatpush1.msra.mxu0 %v786
        %903 = vmatprep.subr.mxu0 0.0
        %904 = vmatpush1.msra.mxu0 %v787
        %905 = vmatprep.subr.mxu0 0.0
        %906 = vmatpush1.msra.mxu0 %v788
        %907 = vmatprep.subr.mxu0 0.0
        %908 = vmatpush1.msra.mxu0 %v789
        %909 = vmatprep.subr.mxu0 0.0
        %910 = vmatpush1.msra.mxu0 %v790
        %911 = vmatprep.subr.mxu0 0.0
        %912 = vmatpush1.msra.mxu0 %v791
        %913 = vmatprep.subr.mxu0 0.0
        %914 = vmatpush1.msra.mxu0 %v792
        %915 = vmatprep.subr.mxu0 0.0
        %916 = vmatpush1.msra.mxu0 %v793
        %917 = vmatprep.subr.mxu0 0.0
        %918 = vmatpush1.msra.mxu0 %v794
        %919 = vmatprep.subr.mxu0 0.0
        %920 = vmatpush1.msra.mxu0 %v795
        %921 = vmatprep.subr.mxu0 0.0
        %922 = vmatpush1.msra.mxu0 %v796
        %923 = vmatprep.subr.mxu0 0.0
        %924 = vmatpush1.msra.mxu0 %v797
        %925 = vmatprep.subr.mxu0 0.0
        %926 = vmatpush1.msra.mxu0 %v798
        %927 = vmatprep.subr.mxu0 0.0
        %928 = vmatpush1.msra.mxu0 %v799
        %929 = vmatprep.subr.mxu0 0.0
        %930 = vmatpush1.msra.mxu0 %v800
        %931 = vmatprep.subr.mxu0 0.0
        %932 = vmatpush1.msra.mxu0 %v801
        %933 = vmatprep.subr.mxu0 0.0
        %934 = vmatpush1.msra.mxu0 %v802
        %935 = vmatprep.subr.mxu0 0.0
        %936 = vmatpush1.msra.mxu0 %v803
        %937 = vmatprep.subr.mxu0 0.0
        %938 = vmatpush1.msra.mxu0 %v804
        %939 = vmatprep.subr.mxu0 0.0
        %940 = vmatpush1.msra.mxu0 %v805
        %941 = vmatprep.subr.mxu0 0.0
        %942 = vmatpush1.msra.mxu0 %v806
        %943 = vmatprep.subr.mxu0 0.0
        %944 = vmatpush1.msra.mxu0 %v807
        %945 = vmatprep.subr.mxu0 0.0
        %946 = vmatpush1.msra.mxu0 %v808
        %947 = vmatprep.subr.mxu0 0.0
        %948 = vmatpush1.msra.mxu0 %v809
        %949 = vmatprep.subr.mxu0 0.0
        %950 = vmatpush1.msra.mxu0 %v810
        %951 = vmatprep.subr.mxu0 0.0
        %952 = vmatpush1.msra.mxu0 %v811
        %953 = vmatprep.subr.mxu0 0.0
        %954 = vmatpush1.msra.mxu0 %v812
        %955 = vmatprep.subr.mxu0 0.0
        %956 = vmatpush1.msra.mxu0 %v813
        %957 = vmatprep.subr.mxu0 0.0
        %958 = vmatpush1.msra.mxu0 %v814
        %959 = vmatprep.subr.mxu0 0.0
        %960 = vmatpush1.msra.mxu0 %v815
        %961 = vmatprep.subr.mxu0 0.0
        %962 = vmatpush1.msra.mxu0 %v816
        %963 = vmatprep.mubr.f32.mxu0 %v748
        %964 = vmatmul.mubr.f32.gmra.mrb[0].mxu0 %v747
        %v965 = vpop.f32.mrb[0].mxu0
        %v966 = vadd.f32 %v891, %v965
        %v967 = vpop.f32.mrb[0].mxu0
        %968 = vmatprep.mubr.f32.mxu0 %v752
        %969 = vmatmul.mubr.f32.gmra.mrb[0].mxu0 %v751
        %v970 = vpop.f32.mrb[0].mxu0
        %v971 = vadd.f32 %v896, %v970
        %v972 = vpop.f32.mrb[0].mxu0
        %973 = vdwg.mxu0
        %v974 = vld [vmem:[%s6] sm:$0x1]
        %v975 = vld [vmem:[%s7] sm:$0x1]
        %976 = vadd.xlane.f32.xlu0 %v966
        %v977 = vpop.xlane.xlu0 %976
        %vm978 = vcmask 1043456
        %v979 = vsel %vm978, %v971, 0.0
        %980 = vadd.xlane.f32.xlu0 %v979
        %v981 = vpop.xlane.xlu0 %980
        %v982 = vrcp.pop 128.0
        %v983 = vmul.f32 %v977, %v982
        %v984 = vmul.f32 %v981, %v982
        %v985 = vsub.f32 %v966, %v983
        %v986 = vsub.f32 %v971, %v984
        %v987 = vmul.f32 %v985, %v985
        %v988 = vmul.f32 %v986, %v986
        %989 = vadd.xlane.f32.xlu0 %v987
        %v990 = vpop.xlane.xlu0 %989
        %v991 = vsel %vm978, %v988, 0.0
        %992 = vadd.xlane.f32.xlu0 %v991
        %v993 = vpop.xlane.xlu0 %992
        %v994 = vmul.f32 %v990, %v982
        %v995 = vmul.f32 %v993, %v982
        %v996 = vadd.f32 %v994, 1e-05
        %v997 = vadd.f32 %v995, 1e-05
        %v998 = vrsqrt.pop %v996
        %v999 = vrsqrt.pop %v997
        %v1000 = vmul.f32 %v985, %v998
        %v1001 = vmul.f32 %v986, %v999
        %v1003 = vlaneseq
        %v1004 = vshrl.u32 %v1003, 7
        %v1005 = vsub.s32 0, %v1004
        %v1006 = vrot.slane %v974, %v1005
        %v1008 = vmul.f32 %v1000, %v1006
        %v1009 = vmul.f32 %v1001, %v1006
        %v1011 = vlaneseq
        %v1012 = vshrl.u32 %v1011, 7
        %v1013 = vsub.s32 0, %v1012
        %v1014 = vrot.slane %v975, %v1013
        %v1016 = vadd.f32 %v1008, %v1014
        %v1017 = vadd.f32 %v1009, %v1014
        %1018 = vst [vmem:[%s340] sm:$0xff] %v1016
        %1019 = vst [vmem:[%s340 + $0x8] sm:$0xf] %v1017
        %p1020 = scmp.lt.s32.totalorder %s20, 1
        %s1021 = scalar_select %p1020, %s20, 1
        %s1022 = smul.addr %s1021, 2
        %s1023 = smul.addr %s1022, 8
        %s1024 = scalar_lea.vmem %s8, %s1023
        // Predicated region
        $region57: #{attention_pooling_removal.3} parent=51 // pred_check
          %p1025 = pneg %p216
        $region58: #{attention_pooling_removal.3} parent=51 // pred_check_branch
          %1027 = sbr.rel (%p1025) target = $region60
        $region59: #{attention_pooling_removal.3} parent=51 // pred_region
          _
        $region60: #{attention_pooling_removal.3} parent=51 // pred_fallthru
          _
      $region52: #{attention_pooling_removal.3} parent=5 // pred_fallthru
        _
      %p1028 = scmp.le.s32.totalorder 2, %s15
      // Predicated region
      $region61: #{attention_pooling_removal.3} parent=5 // pred_check
        %p1029 = pneg %p1028
      $region62: #{attention_pooling_removal.3} parent=5 // pred_check_branch
        %1031 = sbr.rel (%p1029) target = $region64
      $region63: #{attention_pooling_removal.3} parent=5 // pred_region
        %s1032 = ssub.s32 %s15, 2
        // Predicated region
        $region65: #{attention_pooling_removal.3} parent=63 // pred_check
          %p1033 = pneg %p222
        $region66: #{attention_pooling_removal.3} parent=63 // pred_check_branch
          %1035 = sbr.rel (%p1033) target = $region68
        $region67: #{attention_pooling_removal.3} parent=63 // pred_region
          %p1036 = scmp.lt.s32.totalorder %s21, 1
          %s1037 = scalar_select %p1036, %s21, 1
          %s1038 = smul.addr %s1037, 2
          %s1039 = smul.addr %s1038, 8
          %s1040 = scalar_lea.vmem %s8, %s1039
        $region68: #{attention_pooling_removal.3} parent=63 // pred_fallthru
          _
      $region64: #{attention_pooling_removal.3} parent=5 // pred_fallthru
        _
    $region6: #{attention_pooling_removal.3} parent=1 // loop_footer
      %s19 = sadd.s32 1, %s15
    $region7: #{attention_pooling_removal.3} parent=1 // loop_footer_branch
      %14 = sbr.rel target = $region3
    $region8: #{attention_pooling_removal.3} parent=1 // loop_exit
      _
    %1041 = vsyncpa [#allocation3], 1
    %s1042 = scalar_lea.sflag [#allocation3], 1
    %1043 = vsyncpa %s1042, 1

// kernel: attention_pooling_removal.2
$region0: #{attention_pooling_removal.2}
  #allocation0 [shape = 'u32[]', space=smem, size = 0x4, offset = 0x4, fixed_abs, tag = 'smem constant byte address 0x4 - core index']
  #allocation1 [shape = 'u32[144,128]{1,0:T(1,128)}', space=vmem, size = 0x12000, scoped, tag = 'internal scratch']
  #allocation2 [shape = 'f32[64,16]{1,0:T(8,128)}', space=vmem, size = 0x8000, scoped, tag = 'scratch operand']
  %s0 = inlined_call_operand.hbm [shape: f32[2,16,128], index: 0, kind: input, shape index: {}]
  %s1 = inlined_call_operand.vmem [shape: f32[128,128], index: 1, kind: input, shape index: {}]
  %s2 = inlined_call_operand.vmem [shape: f32[128,128], index: 2, kind: input, shape index: {}]
  %s3 = inlined_call_operand.vmem [shape: f32[128,128], index: 3, kind: input, shape index: {}]
  %s4 = inlined_call_operand.hbm [shape: f32[128,128], index: 4, kind: input, shape index: {}]
  %s5 = inlined_call_operand.vmem [shape: f32[1,128], index: 5, kind: input, shape index: {}]
  %s6 = inlined_call_operand.vmem [shape: f32[1,128], index: 6, kind: input, shape index: {}]
  %s7 = inlined_call_operand.vmem [shape: f32[1,128], index: 7, kind: input, shape index: {}]
  %s8 = inlined_call_operand.vmem [shape: f32[1,128], index: 8, kind: input, shape index: {}]
  %s9 = inlined_call_operand.vmem [shape: f32[1,128], index: 9, kind: input, shape index: {}]
  %s10 = inlined_call_operand.vmem [shape: f32[1,128], index: 10, kind: input, shape index: {}]
  %s11 = inlined_call_operand.vmem [shape: f32[2,16,128], index: 11, kind: output, shape index: {0}]
  %s12 = inlined_call_operand.vmem [shape: f32[2,1,16], index: 12, kind: output, shape index: {1}]
  %13 = xla_tuple %s11, %s12
  %s14 = sld [smem:[#allocation0]]
  $region93: #{attention_pooling_removal.2} parent=0
    _
  %s16 = ssub.s32 1, %s14
  %s17 = scalar_select 0, %s16, %s14
  $region1: #{attention_pooling_removal.2} parent=0
    #allocation3 [shape = 'u8[16384]{0}', space=vmem, size = 0x4000, scoped, tag = 'input window, operand 0']
    #allocation4 [shape = 's32[2]{0}', space=sflag, size = 0x8, scoped, tag = 'scoped memory for attention_pooling_removal.2']
    #allocation5 [shape = 'u8[65536]{0}', space=vmem, size = 0x10000, scoped, tag = 'input window, operand 4, single buffered']
    #allocation6 [shape = 's32[1]{0}', space=sflag, size = 0x4, scoped, tag = 'scoped memory for attention_pooling_removal.2']
    %18 = vsyncpa [#allocation4], 0
    %s19 = scalar_lea.sflag [#allocation4], 1
    %20 = vsyncpa %s19, 0
    %21 = vsyncpa [#allocation6], 0
    loop: start=0, step=1, limit=4
    $region2: #{attention_pooling_removal.2} parent=1 // loop_pre_header
      _
    $region3: #{attention_pooling_removal.2} parent=1 // loop_header
      %s23 = sphi 0, %s27
      %p24 = scmp.ge.s32.totalorder %s23, 4
      %s33 = sphi 0, %s35
      %s36 = sphi 0, %s33
      %s37 = sphi 0, %s36
      %s53 = sphi 0, %s37
      %s57 = sphi 0, %s57
      %s59 = sphi 0, %s57
      %s60 = sphi 0, %s59
      %s74 = sphi 0, %s60
      %s78 = sphi 0, %s78
      %s80 = sphi 0, %s78
      %s81 = sphi 0, %s80
      %s95 = sphi 0, %s81
      %s99 = sphi 0, %s99
      %s101 = sphi 0, %s99
      %s102 = sphi 0, %s101
      %s116 = sphi 0, %s102
      %s120 = sphi 0, %s120
      %s122 = sphi 0, %s120
      %s123 = sphi 0, %s122
      %s137 = sphi 0, %s123
      %s141 = sphi 0, %s141
      %s143 = sphi 0, %s141
      %s144 = sphi 0, %s143
      %s158 = sphi 0, %s144
      %s162 = sphi 0, %s162
      %s164 = sphi 0, %s162
      %s165 = sphi 0, %s164
      %s179 = sphi 0, %s165
      %s183 = sphi 0, %s183
      %s185 = sphi 0, %s183
      %s186 = sphi 0, %s185
      %s200 = sphi 0, %s186
      %s204 = sphi 0, %s204
      %s206 = sphi 0, %s204
      %s207 = sphi 0, %s206
      %s221 = sphi 0, %s207
      %s225 = sphi 0, %s225
      %s227 = sphi 0, %s225
      %s228 = sphi 0, %s227
      %s242 = sphi 0, %s228
      %s246 = sphi 0, %s246
      %s248 = sphi 0, %s246
      %s249 = sphi 0, %s248
      %s263 = sphi 0, %s249
      %s269 = sphi 0, %s271
      %s272 = sphi 0, %s269
      %s273 = sphi 0, %s272
      %s289 = sphi 0, %s273
      %s295 = sphi 0, %s297
      %s298 = sphi 0, %s295
      %s299 = sphi 0, %s298
      %s315 = sphi 0, %s299
    $region4: #{attention_pooling_removal.2} parent=1 // loop_header_branch
      %26 = sbr.rel (%p24) target = $region8
    $region5: #{attention_pooling_removal.2} parent=1 // loop_body
      %s28 = ssub.s32 %s23, 1
      %s29 = ssub.s32 %s23, 2
      %s30 = sadd.s32 %s23, 1
      %s31 = ssub.s32 %s23, %s30
      %p32 = scmp.eq.s32.totalorder %s31, 0
      %s34 = sadd.s32 %s33, 1
      %s35 = scalar_select %p32, %s33, %s34
      %p38 = pneg %p32
      %p39 = scmp.eq.s32.totalorder %s23, 1
      %p40 = por %p38, %p39
      %p41 = scmp.ne.s32.totalorder %s33, %s36
      %p42 = scmp.eq.s32.totalorder %s23, 0
      %p43 = por %p41, %p42
      %p44 = scmp.ne.s32.totalorder %s33, %s36
      %p45 = scmp.eq.s32.totalorder %s28, 1
      %p46 = por %p44, %p45
      %p47 = scmp.ne.s32.totalorder %s36, %s37
      %p48 = scmp.eq.s32.totalorder %s28, 0
      %p49 = por %p47, %p48
      %p50 = scmp.ne.s32.totalorder %s36, %s37
      %p51 = scmp.eq.s32.totalorder %s29, 1
      %p52 = por %p50, %p51
      %p54 = scmp.ne.s32.totalorder %s37, %s53
      %p55 = scmp.eq.s32.totalorder %s29, 0
      %p56 = por %p54, %p55
      %s58 = sadd.s32 %s57, 1
      %p61 = scmp.eq.s32.totalorder %s23, 1
      %p62 = scmp.ne.s32.totalorder %s57, %s59
      %p63 = scmp.eq.s32.totalorder %s23, 0
      %p64 = por %p62, %p63
      %p65 = scmp.ne.s32.totalorder %s57, %s59
      %p66 = scmp.eq.s32.totalorder %s28, 1
      %p67 = por %p65, %p66
      %p68 = scmp.ne.s32.totalorder %s59, %s60
      %p69 = scmp.eq.s32.totalorder %s28, 0
      %p70 = por %p68, %p69
      %p71 = scmp.ne.s32.totalorder %s59, %s60
      %p72 = scmp.eq.s32.totalorder %s29, 1
      %p73 = por %p71, %p72
      %p75 = scmp.ne.s32.totalorder %s60, %s74
      %p76 = scmp.eq.s32.totalorder %s29, 0
      %p77 = por %p75, %p76
      %s79 = sadd.s32 %s78, 1
      %p82 = scmp.eq.s32.totalorder %s23, 1
      %p83 = scmp.ne.s32.totalorder %s78, %s80
      %p84 = scmp.eq.s32.totalorder %s23, 0
      %p85 = por %p83, %p84
      %p86 = scmp.ne.s32.totalorder %s78, %s80
      %p87 = scmp.eq.s32.totalorder %s28, 1
      %p88 = por %p86, %p87
      %p89 = scmp.ne.s32.totalorder %s80, %s81
      %p90 = scmp.eq.s32.totalorder %s28, 0
      %p91 = por %p89, %p90
      %p92 = scmp.ne.s32.totalorder %s80, %s81
      %p93 = scmp.eq.s32.totalorder %s29, 1
      %p94 = por %p92, %p93
      %p96 = scmp.ne.s32.totalorder %s81, %s95
      %p97 = scmp.eq.s32.totalorder %s29, 0
      %p98 = por %p96, %p97
      %s100 = sadd.s32 %s99, 1
      %p103 = scmp.eq.s32.totalorder %s23, 1
      %p104 = scmp.ne.s32.totalorder %s99, %s101
      %p105 = scmp.eq.s32.totalorder %s23, 0
      %p106 = por %p104, %p105
      %p107 = scmp.ne.s32.totalorder %s99, %s101
      %p108 = scmp.eq.s32.totalorder %s28, 1
      %p109 = por %p107, %p108
      %p110 = scmp.ne.s32.totalorder %s101, %s102
      %p111 = scmp.eq.s32.totalorder %s28, 0
      %p112 = por %p110, %p111
      %p113 = scmp.ne.s32.totalorder %s101, %s102
      %p114 = scmp.eq.s32.totalorder %s29, 1
      %p115 = por %p113, %p114
      %p117 = scmp.ne.s32.totalorder %s102, %s116
      %p118 = scmp.eq.s32.totalorder %s29, 0
      %p119 = por %p117, %p118
      %s121 = sadd.s32 %s120, 1
      %p124 = scmp.eq.s32.totalorder %s23, 1
      %p125 = scmp.ne.s32.totalorder %s120, %s122
      %p126 = scmp.eq.s32.totalorder %s23, 0
      %p127 = por %p125, %p126
      %p128 = scmp.ne.s32.totalorder %s120, %s122
      %p129 = scmp.eq.s32.totalorder %s28, 1
      %p130 = por %p128, %p129
      %p131 = scmp.ne.s32.totalorder %s122, %s123
      %p132 = scmp.eq.s32.totalorder %s28, 0
      %p133 = por %p131, %p132
      %p134 = scmp.ne.s32.totalorder %s122, %s123
      %p135 = scmp.eq.s32.totalorder %s29, 1
      %p136 = por %p134, %p135
      %p138 = scmp.ne.s32.totalorder %s123, %s137
      %p139 = scmp.eq.s32.totalorder %s29, 0
      %p140 = por %p138, %p139
      %s142 = sadd.s32 %s141, 1
      %p145 = scmp.eq.s32.totalorder %s23, 1
      %p146 = scmp.ne.s32.totalorder %s141, %s143
      %p147 = scmp.eq.s32.totalorder %s23, 0
      %p148 = por %p146, %p147
      %p149 = scmp.ne.s32.totalorder %s141, %s143
      %p150 = scmp.eq.s32.totalorder %s28, 1
      %p151 = por %p149, %p150
      %p152 = scmp.ne.s32.totalorder %s143, %s144
      %p153 = scmp.eq.s32.totalorder %s28, 0
      %p154 = por %p152, %p153
      %p155 = scmp.ne.s32.totalorder %s143, %s144
      %p156 = scmp.eq.s32.totalorder %s29, 1
      %p157 = por %p155, %p156
      %p159 = scmp.ne.s32.totalorder %s144, %s158
      %p160 = scmp.eq.s32.totalorder %s29, 0
      %p161 = por %p159, %p160
      %s163 = sadd.s32 %s162, 1
      %p166 = scmp.eq.s32.totalorder %s23, 1
      %p167 = scmp.ne.s32.totalorder %s162, %s164
      %p168 = scmp.eq.s32.totalorder %s23, 0
      %p169 = por %p167, %p168
      %p170 = scmp.ne.s32.totalorder %s162, %s164
      %p171 = scmp.eq.s32.totalorder %s28, 1
      %p172 = por %p170, %p171
      %p173 = scmp.ne.s32.totalorder %s164, %s165
      %p174 = scmp.eq.s32.totalorder %s28, 0
      %p175 = por %p173, %p174
      %p176 = scmp.ne.s32.totalorder %s164, %s165
      %p177 = scmp.eq.s32.totalorder %s29, 1
      %p178 = por %p176, %p177
      %p180 = scmp.ne.s32.totalorder %s165, %s179
      %p181 = scmp.eq.s32.totalorder %s29, 0
      %p182 = por %p180, %p181
      %s184 = sadd.s32 %s183, 1
      %p187 = scmp.eq.s32.totalorder %s23, 1
      %p188 = scmp.ne.s32.totalorder %s183, %s185
      %p189 = scmp.eq.s32.totalorder %s23, 0
      %p190 = por %p188, %p189
      %p191 = scmp.ne.s32.totalorder %s183, %s185
      %p192 = scmp.eq.s32.totalorder %s28, 1
      %p193 = por %p191, %p192
      %p194 = scmp.ne.s32.totalorder %s185, %s186
      %p195 = scmp.eq.s32.totalorder %s28, 0
      %p196 = por %p194, %p195
      %p197 = scmp.ne.s32.totalorder %s185, %s186
      %p198 = scmp.eq.s32.totalorder %s29, 1
      %p199 = por %p197, %p198
      %p201 = scmp.ne.s32.totalorder %s186, %s200
      %p202 = scmp.eq.s32.totalorder %s29, 0
      %p203 = por %p201, %p202
      %s205 = sadd.s32 %s204, 1
      %p208 = scmp.eq.s32.totalorder %s23, 1
      %p209 = scmp.ne.s32.totalorder %s204, %s206
      %p210 = scmp.eq.s32.totalorder %s23, 0
      %p211 = por %p209, %p210
      %p212 = scmp.ne.s32.totalorder %s204, %s206
      %p213 = scmp.eq.s32.totalorder %s28, 1
      %p214 = por %p212, %p213
      %p215 = scmp.ne.s32.totalorder %s206, %s207
      %p216 = scmp.eq.s32.totalorder %s28, 0
      %p217 = por %p215, %p216
      %p218 = scmp.ne.s32.totalorder %s206, %s207
      %p219 = scmp.eq.s32.totalorder %s29, 1
      %p220 = por %p218, %p219
      %p222 = scmp.ne.s32.totalorder %s207, %s221
      %p223 = scmp.eq.s32.totalorder %s29, 0
      %p224 = por %p222, %p223
      %s226 = sadd.s32 %s225, 1
      %p229 = scmp.eq.s32.totalorder %s23, 1
      %p230 = scmp.ne.s32.totalorder %s225, %s227
      %p231 = scmp.eq.s32.totalorder %s23, 0
      %p232 = por %p230, %p231
      %p233 = scmp.ne.s32.totalorder %s225, %s227
      %p234 = scmp.eq.s32.totalorder %s28, 1
      %p235 = por %p233, %p234
      %p236 = scmp.ne.s32.totalorder %s227, %s228
      %p237 = scmp.eq.s32.totalorder %s28, 0
      %p238 = por %p236, %p237
      %p239 = scmp.ne.s32.totalorder %s227, %s228
      %p240 = scmp.eq.s32.totalorder %s29, 1
      %p241 = por %p239, %p240
      %p243 = scmp.ne.s32.totalorder %s228, %s242
      %p244 = scmp.eq.s32.totalorder %s29, 0
      %p245 = por %p243, %p244
      %s247 = sadd.s32 %s246, 1
      %p250 = scmp.eq.s32.totalorder %s23, 1
      %p251 = scmp.ne.s32.totalorder %s246, %s248
      %p252 = scmp.eq.s32.totalorder %s23, 0
      %p253 = por %p251, %p252
      %p254 = scmp.ne.s32.totalorder %s246, %s248
      %p255 = scmp.eq.s32.totalorder %s28, 1
      %p256 = por %p254, %p255
      %p257 = scmp.ne.s32.totalorder %s248, %s249
      %p258 = scmp.eq.s32.totalorder %s28, 0
      %p259 = por %p257, %p258
      %p260 = scmp.ne.s32.totalorder %s248, %s249
      %p261 = scmp.eq.s32.totalorder %s29, 1
      %p262 = por %p260, %p261
      %p264 = scmp.ne.s32.totalorder %s249, %s263
      %p265 = scmp.eq.s32.totalorder %s29, 0
      %p266 = por %p264, %p265
      %s267 = ssub.s32 %s23, %s30
      %p268 = scmp.eq.s32.totalorder %s267, 0
      %s270 = sadd.s32 %s269, 1
      %s271 = scalar_select %p268, %s269, %s270
      %p274 = pneg %p268
      %p275 = scmp.eq.s32.totalorder %s23, 1
      %p276 = por %p274, %p275
      %p277 = scmp.ne.s32.totalorder %s269, %s272
      %p278 = scmp.eq.s32.totalorder %s23, 0
      %p279 = por %p277, %p278
      %p280 = scmp.ne.s32.totalorder %s269, %s272
      %p281 = scmp.eq.s32.totalorder %s28, 1
      %p282 = por %p280, %p281
      %p283 = scmp.ne.s32.totalorder %s272, %s273
      %p284 = scmp.eq.s32.totalorder %s28, 0
      %p285 = por %p283, %p284
      %p286 = scmp.ne.s32.totalorder %s272, %s273
      %p287 = scmp.eq.s32.totalorder %s29, 1
      %p288 = por %p286, %p287
      %p290 = scmp.ne.s32.totalorder %s273, %s289
      %p291 = scmp.eq.s32.totalorder %s29, 0
      %p292 = por %p290, %p291
      %s293 = ssub.s32 %s23, %s30
      %p294 = scmp.eq.s32.totalorder %s293, 0
      %s296 = sadd.s32 %s295, 1
      %s297 = scalar_select %p294, %s295, %s296
      %p300 = pneg %p294
      %p301 = scmp.eq.s32.totalorder %s23, 1
      %p302 = por %p300, %p301
      %p303 = scmp.ne.s32.totalorder %s295, %s298
      %p304 = scmp.eq.s32.totalorder %s23, 0
      %p305 = por %p303, %p304
      %p306 = scmp.ne.s32.totalorder %s295, %s298
      %p307 = scmp.eq.s32.totalorder %s28, 1
      %p308 = por %p306, %p307
      %p309 = scmp.ne.s32.totalorder %s298, %s299
      %p310 = scmp.eq.s32.totalorder %s28, 0
      %p311 = por %p309, %p310
      %p312 = scmp.ne.s32.totalorder %s298, %s299
      %p313 = scmp.eq.s32.totalorder %s29, 1
      %p314 = por %p312, %p313
      %p316 = scmp.ne.s32.totalorder %s299, %s315
      %p317 = scmp.eq.s32.totalorder %s29, 0
      %p318 = por %p316, %p317
      %p319 = scmp.le.s32.totalorder 1, %s23
      %p320 = scmp.lt.s32.totalorder %s23, 3
      %p321 = pnand %p319, %p320
      %p322 = pneg %p321
      // Predicated region
      $region9: #{attention_pooling_removal.2} parent=5 // pred_check
        _
      $region10: #{attention_pooling_removal.2} parent=5 // pred_check_branch
        %324 = sbr.rel (%p321) target = $region12
      $region11: #{attention_pooling_removal.2} parent=5 // pred_region
        %s325 = ssub.s32 %s23, 1
        // Predicated region
        $region13: #{attention_pooling_removal.2} parent=11 // pred_check
          %p326 = pneg %p70
        $region14: #{attention_pooling_removal.2} parent=11 // pred_check_branch
          %328 = sbr.rel (%p326) target = $region16
        $region15: #{attention_pooling_removal.2} parent=11 // pred_region
          _
        $region16: #{attention_pooling_removal.2} parent=11 // pred_fallthru
          _
        // Predicated region
        $region17: #{attention_pooling_removal.2} parent=11 // pred_check
          %p329 = pneg %p91
        $region18: #{attention_pooling_removal.2} parent=11 // pred_check_branch
          %331 = sbr.rel (%p329) target = $region20
        $region19: #{attention_pooling_removal.2} parent=11 // pred_region
          _
        $region20: #{attention_pooling_removal.2} parent=11 // pred_fallthru
          _
        // Predicated region
        $region21: #{attention_pooling_removal.2} parent=11 // pred_check
          %p332 = pneg %p112
        $region22: #{attention_pooling_removal.2} parent=11 // pred_check_branch
          %334 = sbr.rel (%p332) target = $region24
        $region23: #{attention_pooling_removal.2} parent=11 // pred_region
          _
        $region24: #{attention_pooling_removal.2} parent=11 // pred_fallthru
          _
        // Predicated region
        $region25: #{attention_pooling_removal.2} parent=11 // pred_check
          %p335 = pneg %p133
        $region26: #{attention_pooling_removal.2} parent=11 // pred_check_branch
          %337 = sbr.rel (%p335) target = $region28
        $region27: #{attention_pooling_removal.2} parent=11 // pred_region
          %s339 = ssub.s32 2048, 2048
          %340 = vsyncadd [#allocation6], %s339
          %s341 = sshll.u32 [#allocation5], 4
          %s342 = int_to_ptr.vmem [resolvable:$true] %s341
          %347 = dma.hbm_to_vmem [thread:$0]  %s4, 2048, %s342, [#allocation6], 128, 128, 8
        $region28: #{attention_pooling_removal.2} parent=11 // pred_fallthru
          _
        // Predicated region
        $region29: #{attention_pooling_removal.2} parent=11 // pred_check
          %p348 = pneg %p154
        $region30: #{attention_pooling_removal.2} parent=11 // pred_check_branch
          %350 = sbr.rel (%p348) target = $region32
        $region31: #{attention_pooling_removal.2} parent=11 // pred_region
          _
        $region32: #{attention_pooling_removal.2} parent=11 // pred_fallthru
          _
        // Predicated region
        $region33: #{attention_pooling_removal.2} parent=11 // pred_check
          %p351 = pneg %p175
        $region34: #{attention_pooling_removal.2} parent=11 // pred_check_branch
          %353 = sbr.rel (%p351) target = $region36
        $region35: #{attention_pooling_removal.2} parent=11 // pred_region
          _
        $region36: #{attention_pooling_removal.2} parent=11 // pred_fallthru
          _
        // Predicated region
        $region37: #{attention_pooling_removal.2} parent=11 // pred_check
          %p354 = pneg %p196
        $region38: #{attention_pooling_removal.2} parent=11 // pred_check_branch
          %356 = sbr.rel (%p354) target = $region40
        $region39: #{attention_pooling_removal.2} parent=11 // pred_region
          _
        $region40: #{attention_pooling_removal.2} parent=11 // pred_fallthru
          _
        // Predicated region
        $region41: #{attention_pooling_removal.2} parent=11 // pred_check
          %p357 = pneg %p217
        $region42: #{attention_pooling_removal.2} parent=11 // pred_check_branch
          %359 = sbr.rel (%p357) target = $region44
        $region43: #{attention_pooling_removal.2} parent=11 // pred_region
          _
        $region44: #{attention_pooling_removal.2} parent=11 // pred_fallthru
          _
        // Predicated region
        $region45: #{attention_pooling_removal.2} parent=11 // pred_check
          %p360 = pneg %p238
        $region46: #{attention_pooling_removal.2} parent=11 // pred_check_branch
          %362 = sbr.rel (%p360) target = $region48
        $region47: #{attention_pooling_removal.2} parent=11 // pred_region
          _
        $region48: #{attention_pooling_removal.2} parent=11 // pred_fallthru
          _
        // Predicated region
        $region49: #{attention_pooling_removal.2} parent=11 // pred_check
          %p363 = pneg %p259
        $region50: #{attention_pooling_removal.2} parent=11 // pred_check_branch
          %365 = sbr.rel (%p363) target = $region52
        $region51: #{attention_pooling_removal.2} parent=11 // pred_region
          _
        $region52: #{attention_pooling_removal.2} parent=11 // pred_fallthru
          _
      $region12: #{attention_pooling_removal.2} parent=5 // pred_fallthru
        _
      %p366 = scmp.lt.s32.totalorder %s23, 2
      // Predicated region
      $region53: #{attention_pooling_removal.2} parent=5 // pred_check
        %p367 = pneg %p366
      $region54: #{attention_pooling_removal.2} parent=5 // pred_check_branch
        %369 = sbr.rel (%p367) target = $region56
      $region55: #{attention_pooling_removal.2} parent=5 // pred_region
        // Predicated region
        $region57: #{attention_pooling_removal.2} parent=55 // pred_check
          %p370 = pneg %p43
        $region58: #{attention_pooling_removal.2} parent=55 // pred_check_branch
          %372 = sbr.rel (%p370) target = $region60
        $region59: #{attention_pooling_removal.2} parent=55 // pred_region
          %s373 = sand.u32 %s33, 1
          %s374 = scalar_lea.sflag [#allocation4], %s373
          %s375 = sand.u32 %s33, 1
          %s376 = smul.addr %s375, 16
          %s377 = scalar_lea.vmem [#allocation3], %s376
          %s379 = ssub.s32 256, 256
          %380 = vsyncadd %s374, %s379
          %s381 = smul.addr %s23, 2
          %s382 = smul.addr %s381, 128
          %s383 = scalar_lea.hbm %s0, %s382
          %s384 = sshll.u32 %s377, 4
          %s385 = int_to_ptr.vmem [resolvable:$true] %s384
          %390 = dma.hbm_to_vmem [thread:$0]  %s383, 256, %s385, %s374, 128, 128, 8
        $region60: #{attention_pooling_removal.2} parent=55 // pred_fallthru
          _
      $region56: #{attention_pooling_removal.2} parent=5 // pred_fallthru
        _
      %p391 = scmp.le.s32.totalorder 1, %s23
      %p392 = scmp.lt.s32.totalorder %s23, 3
      %p393 = pnand %p391, %p392
      %p394 = pneg %p393
      // Predicated region
      $region61: #{attention_pooling_removal.2} parent=5 // pred_check
        _
      $region62: #{attention_pooling_removal.2} parent=5 // pred_check_branch
        %396 = sbr.rel (%p393) target = $region64
      $region63: #{attention_pooling_removal.2} parent=5 // pred_region
        %s397 = ssub.s32 %s23, 1
        %s398 = sand.u32 %s36, 1
        %s399 = scalar_lea.sflag [#allocation4], %s398
        %s400 = sand.u32 %s36, 1
        %s401 = smul.addr %s400, 16
        %s402 = scalar_lea.vmem [#allocation3], %s401
        // Predicated region
        $region65: #{attention_pooling_removal.2} parent=63 // pred_check
          %p403 = pneg %p49
        $region66: #{attention_pooling_removal.2} parent=63 // pred_check_branch
          %405 = sbr.rel (%p403) target = $region68
        $region67: #{attention_pooling_removal.2} parent=63 // pred_region
          %406 = dma.done %s399, 256
        $region68: #{attention_pooling_removal.2} parent=63 // pred_fallthru
          _
        // Predicated region
        $region69: #{attention_pooling_removal.2} parent=63 // pred_check
          %p407 = pneg %p133
        $region70: #{attention_pooling_removal.2} parent=63 // pred_check_branch
          %409 = sbr.rel (%p407) target = $region72
        $region71: #{attention_pooling_removal.2} parent=63 // pred_region
          %410 = dma.done [#allocation6], 2048
        $region72: #{attention_pooling_removal.2} parent=63 // pred_fallthru
          _
        %s411 = sand.u32 %s36, 1
        %s412 = scalar_lea.sflag [#allocation4], %s411
        %s413 = sand.u32 %s36, 1
        %s414 = smul.addr %s413, 16
        %s415 = scalar_lea.vmem [#allocation3], %s414
        %p416 = pneg %p49
        %p417 = pneg %p46
        %p418 = pneg %p70
        %p419 = pneg %p67
        %p420 = pneg %p91
        %p421 = pneg %p88
        %p422 = pneg %p112
        %p423 = pneg %p109
        %p424 = pneg %p133
        %p425 = pneg %p130
        %p426 = pneg %p154
        %p427 = pneg %p151
        %p428 = pneg %p175
        %p429 = pneg %p172
        %p430 = pneg %p196
        %p431 = pneg %p193
        %p432 = pneg %p217
        %p433 = pneg %p214
        %p434 = pneg %p238
        %p435 = pneg %p235
        %p436 = pneg %p259
        %p437 = pneg %p256
        %p438 = pneg %p285
        %p439 = pneg %p282
        %p440 = scmp.lt.s32.totalorder %s28, 1
        %s441 = scalar_select %p440, %s28, 1
        %s442 = smul.addr %s441, 2
        %s443 = smul.addr %s442, 8
        %s444 = scalar_lea.vmem %s11, %s443
        %p445 = pneg %p311
        %p446 = pneg %p308
        %p447 = scmp.lt.s32.totalorder %s28, 1
        %s448 = scalar_select %p447, %s28, 1
        %s449 = scalar_lea.vmem %s12, %s448
        %p450 = scmp.lt.s32.totalorder %s28, 1
        %s451 = scalar_select %p450, %s28, 1
        %s452 = smul.addr %s451, 2
        %s453 = smul.addr %s452, 8
        %s454 = scalar_lea.vmem %s11, %s453
        %p455 = scmp.lt.s32.totalorder %s28, 1
        %s456 = scalar_select %p455, %s28, 1
        %s457 = scalar_lea.vmem %s12, %s456
        %v458 = vld [vmem:[%s402] sm:$0xff]
        %v459 = vld [vmem:[%s402 + $0x8] sm:$0xff]
        %v460 = vld [vmem:[%s1] sm:$0xff]
        %v461 = vld [vmem:[%s1 + $0x8] sm:$0xff]
        %v462 = vld [vmem:[%s1 + $0x10] sm:$0xff]
        %v463 = vld [vmem:[%s1 + $0x18] sm:$0xff]
        %v464 = vld [vmem:[%s1 + $0x20] sm:$0xff]
        %v465 = vld [vmem:[%s1 + $0x28] sm:$0xff]
        %v466 = vld [vmem:[%s1 + $0x30] sm:$0xff]
        %v467 = vld [vmem:[%s1 + $0x38] sm:$0xff]
        %v468 = vld [vmem:[%s1 + $0x40] sm:$0xff]
        %v469 = vld [vmem:[%s1 + $0x48] sm:$0xff]
        %v470 = vld [vmem:[%s1 + $0x50] sm:$0xff]
        %v471 = vld [vmem:[%s1 + $0x58] sm:$0xff]
        %v472 = vld [vmem:[%s1 + $0x60] sm:$0xff]
        %v473 = vld [vmem:[%s1 + $0x68] sm:$0xff]
        %v474 = vld [vmem:[%s1 + $0x70] sm:$0xff]
        %v475 = vld [vmem:[%s1 + $0x78] sm:$0xff]
        %v476 = vld [vmem:[%s5] sm:$0x1]
        %v478 = vlaneseq
        %v479 = vshrl.u32 %v478, 7
        %v480 = vsub.s32 0, %v479
        %v481 = vrot.slane %v476, %v480
        %483 = vmatprep.subr.mxu0 0.0
        %484 = vmatpush1.msra.mxu0 %v460
        %485 = vmatprep.subr.mxu0 0.0
        %486 = vmatpush1.msra.mxu0 %v461
        %487 = vmatprep.subr.mxu0 0.0
        %488 = vmatpush1.msra.mxu0 %v462
        %489 = vmatprep.subr.mxu0 0.0
        %490 = vmatpush1.msra.mxu0 %v463
        %491 = vmatprep.subr.mxu0 0.0
        %492 = vmatpush1.msra.mxu0 %v464
        %493 = vmatprep.subr.mxu0 0.0
        %494 = vmatpush1.msra.mxu0 %v465
        %495 = vmatprep.subr.mxu0 0.0
        %496 = vmatpush1.msra.mxu0 %v466
        %497 = vmatprep.subr.mxu0 0.0
        %498 = vmatpush1.msra.mxu0 %v467
        %499 = vmatprep.subr.mxu0 0.0
        %500 = vmatpush1.msra.mxu0 %v468
        %501 = vmatprep.subr.mxu0 0.0
        %502 = vmatpush1.msra.mxu0 %v469
        %503 = vmatprep.subr.mxu0 0.0
        %504 = vmatpush1.msra.mxu0 %v470
        %505 = vmatprep.subr.mxu0 0.0
        %506 = vmatpush1.msra.mxu0 %v471
        %507 = vmatprep.subr.mxu0 0.0
        %508 = vmatpush1.msra.mxu0 %v472
        %509 = vmatprep.subr.mxu0 0.0
        %510 = vmatpush1.msra.mxu0 %v473
        %511 = vmatprep.subr.mxu0 0.0
        %512 = vmatpush1.msra.mxu0 %v474
        %513 = vmatprep.subr.mxu0 0.0
        %514 = vmatpush1.msra.mxu0 %v475
        %515 = vmatprep.subr.mxu0 0.0
        %516 = vmatpush1.msra.mxu0 0.0
        %517 = vmatprep.subr.mxu0 0.0
        %518 = vmatpush1.msra.mxu0 0.0
        %519 = vmatprep.subr.mxu0 0.0
        %520 = vmatpush1.msra.mxu0 0.0
        %521 = vmatprep.subr.mxu0 0.0
        %522 = vmatpush1.msra.mxu0 0.0
        %523 = vmatprep.subr.mxu0 0.0
        %524 = vmatpush1.msra.mxu0 0.0
        %525 = vmatprep.subr.mxu0 0.0
        %526 = vmatpush1.msra.mxu0 0.0
        %527 = vmatprep.subr.mxu0 0.0
        %528 = vmatpush1.msra.mxu0 0.0
        %529 = vmatprep.subr.mxu0 0.0
        %530 = vmatpush1.msra.mxu0 0.0
        %531 = vmatprep.subr.mxu0 0.0
        %532 = vmatpush1.msra.mxu0 0.0
        %533 = vmatprep.subr.mxu0 0.0
        %534 = vmatpush1.msra.mxu0 0.0
        %535 = vmatprep.subr.mxu0 0.0
        %536 = vmatpush1.msra.mxu0 0.0
        %537 = vmatprep.subr.mxu0 0.0
        %538 = vmatpush1.msra.mxu0 0.0
        %539 = vmatprep.subr.mxu0 0.0
        %540 = vmatpush1.msra.mxu0 0.0
        %541 = vmatprep.subr.mxu0 0.0
        %542 = vmatpush1.msra.mxu0 0.0
        %543 = vmatprep.subr.mxu0 0.0
        %544 = vmatpush1.msra.mxu0 0.0
        %545 = vmatprep.subr.mxu0 0.0
        %546 = vmatpush1.msra.mxu0 0.0
        %547 = vmatprep.mubr.f32.mxu0 0.0
        %548 = vmatmul.mubr.f32.gmra.mrb[0].mxu0 %v458
        %v549 = vpop.f32.mrb[0].mxu0
        %v550 = vadd.f32 %v481, %v549
        %v551 = vpop.f32.mrb[0].mxu0
        %552 = vmatprep.mubr.f32.mxu0 0.0
        %553 = vmatmul.mubr.f32.gmra.mrb[0].mxu0 %v459
        %v554 = vpop.f32.mrb[0].mxu0
        %v555 = vadd.f32 %v481, %v554
        %v556 = vpop.f32.mrb[0].mxu0
        %557 = vdwg.mxu0
        %v558 = vld [vmem:[%s2] sm:$0xff]
        %v559 = vld [vmem:[%s2 + $0x8] sm:$0xff]
        %v560 = vld [vmem:[%s2 + $0x10] sm:$0xff]
        %v561 = vld [vmem:[%s2 + $0x18] sm:$0xff]
        %v562 = vld [vmem:[%s2 + $0x20] sm:$0xff]
        %v563 = vld [vmem:[%s2 + $0x28] sm:$0xff]
        %v564 = vld [vmem:[%s2 + $0x30] sm:$0xff]
        %v565 = vld [vmem:[%s2 + $0x38] sm:$0xff]
        %v566 = vld [vmem:[%s2 + $0x40] sm:$0xff]
        %v567 = vld [vmem:[%s2 + $0x48] sm:$0xff]
        %v568 = vld [vmem:[%s2 + $0x50] sm:$0xff]
        %v569 = vld [vmem:[%s2 + $0x58] sm:$0xff]
        %v570 = vld [vmem:[%s2 + $0x60] sm:$0xff]
        %v571 = vld [vmem:[%s2 + $0x68] sm:$0xff]
        %v572 = vld [vmem:[%s2 + $0x70] sm:$0xff]
        %v573 = vld [vmem:[%s2 + $0x78] sm:$0xff]
        %v574 = vld [vmem:[%s6] sm:$0x1]
        %v576 = vlaneseq
        %v577 = vshrl.u32 %v576, 7
        %v578 = vsub.s32 0, %v577
        %v579 = vrot.slane %v574, %v578
        %581 = vmatprep.subr.mxu0 0.0
        %582 = vmatpush1.msra.mxu0 %v558
        %583 = vmatprep.subr.mxu0 0.0
        %584 = vmatpush1.msra.mxu0 %v559
        %585 = vmatprep.subr.mxu0 0.0
        %586 = vmatpush1.msra.mxu0 %v560
        %587 = vmatprep.subr.mxu0 0.0
        %588 = vmatpush1.msra.mxu0 %v561
        %589 = vmatprep.subr.mxu0 0.0
        %590 = vmatpush1.msra.mxu0 %v562
        %591 = vmatprep.subr.mxu0 0.0
        %592 = vmatpush1.msra.mxu0 %v563
        %593 = vmatprep.subr.mxu0 0.0
        %594 = vmatpush1.msra.mxu0 %v564
        %595 = vmatprep.subr.mxu0 0.0
        %596 = vmatpush1.msra.mxu0 %v565
        %597 = vmatprep.subr.mxu0 0.0
        %598 = vmatpush1.msra.mxu0 %v566
        %599 = vmatprep.subr.mxu0 0.0
        %600 = vmatpush1.msra.mxu0 %v567
        %601 = vmatprep.subr.mxu0 0.0
        %602 = vmatpush1.msra.mxu0 %v568
        %603 = vmatprep.subr.mxu0 0.0
        %604 = vmatpush1.msra.mxu0 %v569
        %605 = vmatprep.subr.mxu0 0.0
        %606 = vmatpush1.msra.mxu0 %v570
        %607 = vmatprep.subr.mxu0 0.0
        %608 = vmatpush1.msra.mxu0 %v571
        %609 = vmatprep.subr.mxu0 0.0
        %610 = vmatpush1.msra.mxu0 %v572
        %611 = vmatprep.subr.mxu0 0.0
        %612 = vmatpush1.msra.mxu0 %v573
        %613 = vmatprep.subr.mxu0 0.0
        %614 = vmatpush1.msra.mxu0 0.0
        %615 = vmatprep.subr.mxu0 0.0
        %616 = vmatpush1.msra.mxu0 0.0
        %617 = vmatprep.subr.mxu0 0.0
        %618 = vmatpush1.msra.mxu0 0.0
        %619 = vmatprep.subr.mxu0 0.0
        %620 = vmatpush1.msra.mxu0 0.0
        %621 = vmatprep.subr.mxu0 0.0
        %622 = vmatpush1.msra.mxu0 0.0
        %623 = vmatprep.subr.mxu0 0.0
        %624 = vmatpush1.msra.mxu0 0.0
        %625 = vmatprep.subr.mxu0 0.0
        %626 = vmatpush1.msra.mxu0 0.0
        %627 = vmatprep.subr.mxu0 0.0
        %628 = vmatpush1.msra.mxu0 0.0
        %629 = vmatprep.subr.mxu0 0.0
        %630 = vmatpush1.msra.mxu0 0.0
        %631 = vmatprep.subr.mxu0 0.0
        %632 = vmatpush1.msra.mxu0 0.0
        %633 = vmatprep.subr.mxu0 0.0
        %634 = vmatpush1.msra.mxu0 0.0
        %635 = vmatprep.subr.mxu0 0.0
        %636 = vmatpush1.msra.mxu0 0.0
        %637 = vmatprep.subr.mxu0 0.0
        %638 = vmatpush1.msra.mxu0 0.0
        %639 = vmatprep.subr.mxu0 0.0
        %640 = vmatpush1.msra.mxu0 0.0
        %641 = vmatprep.subr.mxu0 0.0
        %642 = vmatpush1.msra.mxu0 0.0
        %643 = vmatprep.subr.mxu0 0.0
        %644 = vmatpush1.msra.mxu0 0.0
        %645 = vmatprep.mubr.f32.mxu0 0.0
        %646 = vmatmul.mubr.f32.gmra.mrb[0].mxu0 %v458
        %v647 = vpop.f32.mrb[0].mxu0
        %v648 = vadd.f32 %v579, %v647
        %v649 = vpop.f32.mrb[0].mxu0
        %650 = vmatprep.mubr.f32.mxu0 0.0
        %651 = vmatmul.mubr.f32.gmra.mrb[0].mxu0 %v459
        %v652 = vpop.f32.mrb[0].mxu0
        %v653 = vadd.f32 %v579, %v652
        %v654 = vpop.f32.mrb[0].mxu0
        %655 = vdwg.mxu0
        %v656 = vld [vmem:[%s3] sm:$0xff]
        %v657 = vld [vmem:[%s3 + $0x8] sm:$0xff]
        %v658 = vld [vmem:[%s3 + $0x10] sm:$0xff]
        %v659 = vld [vmem:[%s3 + $0x18] sm:$0xff]
        %v660 = vld [vmem:[%s3 + $0x20] sm:$0xff]
        %v661 = vld [vmem:[%s3 + $0x28] sm:$0xff]
        %v662 = vld [vmem:[%s3 + $0x30] sm:$0xff]
        %v663 = vld [vmem:[%s3 + $0x38] sm:$0xff]
        %v664 = vld [vmem:[%s3 + $0x40] sm:$0xff]
        %v665 = vld [vmem:[%s3 + $0x48] sm:$0xff]
        %v666 = vld [vmem:[%s3 + $0x50] sm:$0xff]
        %v667 = vld [vmem:[%s3 + $0x58] sm:$0xff]
        %v668 = vld [vmem:[%s3 + $0x60] sm:$0xff]
        %v669 = vld [vmem:[%s3 + $0x68] sm:$0xff]
        %v670 = vld [vmem:[%s3 + $0x70] sm:$0xff]
        %v671 = vld [vmem:[%s3 + $0x78] sm:$0xff]
        %v672 = vld [vmem:[%s7] sm:$0x1]
        %v674 = vlaneseq
        %v675 = vshrl.u32 %v674, 7
        %v676 = vsub.s32 0, %v675
        %v677 = vrot.slane %v672, %v676
        %679 = vmatprep.subr.mxu0 0.0
        %680 = vmatpush1.msra.mxu0 %v656
        %681 = vmatprep.subr.mxu0 0.0
        %682 = vmatpush1.msra.mxu0 %v657
        %683 = vmatprep.subr.mxu0 0.0
        %684 = vmatpush1.msra.mxu0 %v658
        %685 = vmatprep.subr.mxu0 0.0
        %686 = vmatpush1.msra.mxu0 %v659
        %687 = vmatprep.subr.mxu0 0.0
        %688 = vmatpush1.msra.mxu0 %v660
        %689 = vmatprep.subr.mxu0 0.0
        %690 = vmatpush1.msra.mxu0 %v661
        %691 = vmatprep.subr.mxu0 0.0
        %692 = vmatpush1.msra.mxu0 %v662
        %693 = vmatprep.subr.mxu0 0.0
        %694 = vmatpush1.msra.mxu0 %v663
        %695 = vmatprep.subr.mxu0 0.0
        %696 = vmatpush1.msra.mxu0 %v664
        %697 = vmatprep.subr.mxu0 0.0
        %698 = vmatpush1.msra.mxu0 %v665
        %699 = vmatprep.subr.mxu0 0.0
        %700 = vmatpush1.msra.mxu0 %v666
        %701 = vmatprep.subr.mxu0 0.0
        %702 = vmatpush1.msra.mxu0 %v667
        %703 = vmatprep.subr.mxu0 0.0
        %704 = vmatpush1.msra.mxu0 %v668
        %705 = vmatprep.subr.mxu0 0.0
        %706 = vmatpush1.msra.mxu0 %v669
        %707 = vmatprep.subr.mxu0 0.0
        %708 = vmatpush1.msra.mxu0 %v670
        %709 = vmatprep.subr.mxu0 0.0
        %710 = vmatpush1.msra.mxu0 %v671
        %711 = vmatprep.subr.mxu0 0.0
        %712 = vmatpush1.msra.mxu0 0.0
        %713 = vmatprep.subr.mxu0 0.0
        %714 = vmatpush1.msra.mxu0 0.0
        %715 = vmatprep.subr.mxu0 0.0
        %716 = vmatpush1.msra.mxu0 0.0
        %717 = vmatprep.subr.mxu0 0.0
        %718 = vmatpush1.msra.mxu0 0.0
        %719 = vmatprep.subr.mxu0 0.0
        %720 = vmatpush1.msra.mxu0 0.0
        %721 = vmatprep.subr.mxu0 0.0
        %722 = vmatpush1.msra.mxu0 0.0
        %723 = vmatprep.subr.mxu0 0.0
        %724 = vmatpush1.msra.mxu0 0.0
        %725 = vmatprep.subr.mxu0 0.0
        %726 = vmatpush1.msra.mxu0 0.0
        %727 = vmatprep.subr.mxu0 0.0
        %728 = vmatpush1.msra.mxu0 0.0
        %729 = vmatprep.subr.mxu0 0.0
        %730 = vmatpush1.msra.mxu0 0.0
        %731 = vmatprep.subr.mxu0 0.0
        %732 = vmatpush1.msra.mxu0 0.0
        %733 = vmatprep.subr.mxu0 0.0
        %734 = vmatpush1.msra.mxu0 0.0
        %735 = vmatprep.subr.mxu0 0.0
        %736 = vmatpush1.msra.mxu0 0.0
        %737 = vmatprep.subr.mxu0 0.0
        %738 = vmatpush1.msra.mxu0 0.0
        %739 = vmatprep.subr.mxu0 0.0
        %740 = vmatpush1.msra.mxu0 0.0
        %741 = vmatprep.subr.mxu0 0.0
        %742 = vmatpush1.msra.mxu0 0.0
        %743 = vmatprep.mubr.f32.mxu0 0.0
        %744 = vmatmul.mubr.f32.gmra.mrb[0].mxu0 %v458
        %v745 = vpop.f32.mrb[0].mxu0
        %v746 = vadd.f32 %v677, %v745
        %v747 = vpop.f32.mrb[0].mxu0
        %748 = vmatprep.mubr.f32.mxu0 0.0
        %749 = vmatmul.mubr.f32.gmra.mrb[0].mxu0 %v459
        %v750 = vpop.f32.mrb[0].mxu0
        %v751 = vadd.f32 %v677, %v750
        %v752 = vpop.f32.mrb[0].mxu0
        %753 = vdwg.mxu0
        %vm754 = vcmask 261120
        %v756 = vsel %vm754, %v550, 0
        %v759 = vsel %vm754, %v555, 0
        %v762 = vsel %vm754, %v648, 0
        %v765 = vsel %vm754, %v653, 0
        %767 = vmatprep.subr.mxu0 0.0
        %768 = vmatpush1.xpose.msra.mxu0 %v762
        %769 = vmatprep.subr.mxu0 0.0
        %770 = vmatpush1.xpose.msra.mxu0 %v765
        %771 = vmatprep.subr.mxu0 0.0
        %772 = vmatpush1.xpose.msra.mxu0 0.0
        %773 = vmatprep.subr.mxu0 0.0
        %774 = vmatpush1.xpose.msra.mxu0 0.0
        %775 = vmatprep.subr.mxu0 0.0
        %776 = vmatpush1.xpose.msra.mxu0 0.0
        %777 = vmatprep.subr.mxu0 0.0
        %778 = vmatpush1.xpose.msra.mxu0 0.0
        %779 = vmatprep.subr.mxu0 0.0
        %780 = vmatpush1.xpose.msra.mxu0 0.0
        %781 = vmatprep.subr.mxu0 0.0
        %782 = vmatpush1.xpose.msra.mxu0 0.0
        %783 = vmatprep.subr.mxu0 0.0
        %784 = vmatpush1.xpose.msra.mxu0 0.0
        %785 = vmatprep.subr.mxu0 0.0
        %786 = vmatpush1.xpose.msra.mxu0 0.0
        %787 = vmatprep.subr.mxu0 0.0
        %788 = vmatpush1.xpose.msra.mxu0 0.0
        %789 = vmatprep.subr.mxu0 0.0
        %790 = vmatpush1.xpose.msra.mxu0 0.0
        %791 = vmatprep.subr.mxu0 0.0
        %792 = vmatpush1.xpose.msra.mxu0 0.0
        %793 = vmatprep.subr.mxu0 0.0
        %794 = vmatpush1.xpose.msra.mxu0 0.0
        %795 = vmatprep.subr.mxu0 0.0
        %796 = vmatpush1.xpose.msra.mxu0 0.0
        %797 = vmatprep.subr.mxu0 0.0
        %798 = vmatpush1.xpose.msra.mxu0 0.0
        %799 = vmatprep.subr.mxu0 0.0
        %800 = vmatpush1.xpose.msra.mxu0 0.0
        %801 = vmatprep.subr.mxu0 0.0
        %802 = vmatpush1.xpose.msra.mxu0 0.0
        %803 = vmatprep.subr.mxu0 0.0
        %804 = vmatpush1.xpose.msra.mxu0 0.0
        %805 = vmatprep.subr.mxu0 0.0
        %806 = vmatpush1.xpose.msra.mxu0 0.0
        %807 = vmatprep.subr.mxu0 0.0
        %808 = vmatpush1.xpose.msra.mxu0 0.0
        %809 = vmatprep.subr.mxu0 0.0
        %810 = vmatpush1.xpose.msra.mxu0 0.0
        %811 = vmatprep.subr.mxu0 0.0
        %812 = vmatpush1.xpose.msra.mxu0 0.0
        %813 = vmatprep.subr.mxu0 0.0
        %814 = vmatpush1.xpose.msra.mxu0 0.0
        %815 = vmatprep.subr.mxu0 0.0
        %816 = vmatpush1.xpose.msra.mxu0 0.0
        %817 = vmatprep.subr.mxu0 0.0
        %818 = vmatpush1.xpose.msra.mxu0 0.0
        %819 = vmatprep.subr.mxu0 0.0
        %820 = vmatpush1.xpose.msra.mxu0 0.0
        %821 = vmatprep.subr.mxu0 0.0
        %822 = vmatpush1.xpose.msra.mxu0 0.0
        %823 = vmatprep.subr.mxu0 0.0
        %824 = vmatpush1.xpose.msra.mxu0 0.0
        %825 = vmatprep.subr.mxu0 0.0
        %826 = vmatpush1.xpose.msra.mxu0 0.0
        %827 = vmatprep.subr.mxu0 0.0
        %828 = vmatpush1.xpose.msra.mxu0 0.0
        %829 = vmatprep.subr.mxu0 0.0
        %830 = vmatpush1.xpose.msra.mxu0 0.0
        %831 = vmatprep.mubr.f32.mxu0 0.0
        %832 = vmatmul.mubr.f32.gmra.mrb[0].mxu0 %v756
        %v833 = vpop.f32.mrb[0].mxu0
        %v834 = vadd.f32 0.0, %v833
        %v835 = vpop.f32.mrb[0].mxu0
        %836 = vmatprep.mubr.f32.mxu0 0.0
        %837 = vmatmul.mubr.f32.gmra.mrb[0].mxu0 %v759
        %v838 = vpop.f32.mrb[0].mxu0
        %v839 = vadd.f32 0.0, %v838
        %v840 = vpop.f32.mrb[0].mxu0
        %841 = vdwg.mxu0
        %vm842 = vcmask 130048
        %843 = vst.msk [vmem:[#allocation2] sm:$0xff] %vm842, %v834
        %844 = vst.msk [vmem:[#allocation2 + $0x8] sm:$0xff] %vm842, %v839
        %845 = vrot.lane.b32.xlu0 %v550, 96
        %v846 = vpop.permute.xlu0 %845
        %847 = vrot.lane.b32.xlu0 %v555, 96
        %v848 = vpop.permute.xlu0 %847
        %849 = vrot.lane.b32.xlu0 %v648, 96
        %v850 = vpop.permute.xlu0 %849
        %851 = vrot.lane.b32.xlu0 %v653, 96
        %v852 = vpop.permute.xlu0 %851
        %v853 = vsel %vm754, %v846, 0
        %v855 = vsel %vm754, %v848, 0
        %v857 = vsel %vm754, %v850, 0
        %v859 = vsel %vm754, %v852, 0
        %861 = vmatprep.subr.mxu0 0.0
        %862 = vmatpush1.xpose.msra.mxu0 %v857
        %863 = vmatprep.subr.mxu0 0.0
        %864 = vmatpush1.xpose.msra.mxu0 %v859
        %865 = vmatprep.subr.mxu0 0.0
        %866 = vmatpush1.xpose.msra.mxu0 0.0
        %867 = vmatprep.subr.mxu0 0.0
        %868 = vmatpush1.xpose.msra.mxu0 0.0
        %869 = vmatprep.subr.mxu0 0.0
        %870 = vmatpush1.xpose.msra.mxu0 0.0
        %871 = vmatprep.subr.mxu0 0.0
        %872 = vmatpush1.xpose.msra.mxu0 0.0
        %873 = vmatprep.subr.mxu0 0.0
        %874 = vmatpush1.xpose.msra.mxu0 0.0
        %875 = vmatprep.subr.mxu0 0.0
        %876 = vmatpush1.xpose.msra.mxu0 0.0
        %877 = vmatprep.subr.mxu0 0.0
        %878 = vmatpush1.xpose.msra.mxu0 0.0
        %879 = vmatprep.subr.mxu0 0.0
        %880 = vmatpush1.xpose.msra.mxu0 0.0
        %881 = vmatprep.subr.mxu0 0.0
        %882 = vmatpush1.xpose.msra.mxu0 0.0
        %883 = vmatprep.subr.mxu0 0.0
        %884 = vmatpush1.xpose.msra.mxu0 0.0
        %885 = vmatprep.subr.mxu0 0.0
        %886 = vmatpush1.xpose.msra.mxu0 0.0
        %887 = vmatprep.subr.mxu0 0.0
        %888 = vmatpush1.xpose.msra.mxu0 0.0
        %889 = vmatprep.subr.mxu0 0.0
        %890 = vmatpush1.xpose.msra.mxu0 0.0
        %891 = vmatprep.subr.mxu0 0.0
        %892 = vmatpush1.xpose.msra.mxu0 0.0
        %893 = vmatprep.subr.mxu0 0.0
        %894 = vmatpush1.xpose.msra.mxu0 0.0
        %895 = vmatprep.subr.mxu0 0.0
        %896 = vmatpush1.xpose.msra.mxu0 0.0
        %897 = vmatprep.subr.mxu0 0.0
        %898 = vmatpush1.xpose.msra.mxu0 0.0
        %899 = vmatprep.subr.mxu0 0.0
        %900 = vmatpush1.xpose.msra.mxu0 0.0
        %901 = vmatprep.subr.mxu0 0.0
        %902 = vmatpush1.xpose.msra.mxu0 0.0
        %903 = vmatprep.subr.mxu0 0.0
        %904 = vmatpush1.xpose.msra.mxu0 0.0
        %905 = vmatprep.subr.mxu0 0.0
        %906 = vmatpush1.xpose.msra.mxu0 0.0
        %907 = vmatprep.subr.mxu0 0.0
        %908 = vmatpush1.xpose.msra.mxu0 0.0
        %909 = vmatprep.subr.mxu0 0.0
        %910 = vmatpush1.xpose.msra.mxu0 0.0
        %911 = vmatprep.subr.mxu0 0.0
        %912 = vmatpush1.xpose.msra.mxu0 0.0
        %913 = vmatprep.subr.mxu0 0.0
        %914 = vmatpush1.xpose.msra.mxu0 0.0
        %915 = vmatprep.subr.mxu0 0.0
        %916 = vmatpush1.xpose.msra.mxu0 0.0
        %917 = vmatprep.subr.mxu0 0.0
        %918 = vmatpush1.xpose.msra.mxu0 0.0
        %919 = vmatprep.subr.mxu0 0.0
        %920 = vmatpush1.xpose.msra.mxu0 0.0
        %921 = vmatprep.subr.mxu0 0.0
        %922 = vmatpush1.xpose.msra.mxu0 0.0
        %923 = vmatprep.subr.mxu0 0.0
        %924 = vmatpush1.xpose.msra.mxu0 0.0
        %925 = vmatprep.mubr.f32.mxu0 0.0
        %926 = vmatmul.mubr.f32.gmra.mrb[0].mxu0 %v853
        %v927 = vpop.f32.mrb[0].mxu0
        %v928 = vadd.f32 0.0, %v927
        %v929 = vpop.f32.mrb[0].mxu0
        %930 = vmatprep.mubr.f32.mxu0 0.0
        %931 = vmatmul.mubr.f32.gmra.mrb[0].mxu0 %v855
        %v932 = vpop.f32.mrb[0].mxu0
        %v933 = vadd.f32 0.0, %v932
        %v934 = vpop.f32.mrb[0].mxu0
        %935 = vdwg.mxu0
        %936 = vst.msk [vmem:[#allocation2 + $0x10] sm:$0xff] %vm842, %v928
        %937 = vst.msk [vmem:[#allocation2 + $0x18] sm:$0xff] %vm842, %v933
        %938 = vrot.lane.b32.xlu0 %v550, 64
        %v939 = vpop.permute.xlu0 %938
        %940 = vrot.lane.b32.xlu0 %v555, 64
        %v941 = vpop.permute.xlu0 %940
        %942 = vrot.lane.b32.xlu0 %v648, 64
        %v943 = vpop.permute.xlu0 %942
        %944 = vrot.lane.b32.xlu0 %v653, 64
        %v945 = vpop.permute.xlu0 %944
        %v946 = vsel %vm754, %v939, 0
        %v948 = vsel %vm754, %v941, 0
        %v950 = vsel %vm754, %v943, 0
        %v952 = vsel %vm754, %v945, 0
        %954 = vmatprep.subr.mxu0 0.0
        %955 = vmatpush1.xpose.msra.mxu0 %v950
        %956 = vmatprep.subr.mxu0 0.0
        %957 = vmatpush1.xpose.msra.mxu0 %v952
        %958 = vmatprep.subr.mxu0 0.0
        %959 = vmatpush1.xpose.msra.mxu0 0.0
        %960 = vmatprep.subr.mxu0 0.0
        %961 = vmatpush1.xpose.msra.mxu0 0.0
        %962 = vmatprep.subr.mxu0 0.0
        %963 = vmatpush1.xpose.msra.mxu0 0.0
        %964 = vmatprep.subr.mxu0 0.0
        %965 = vmatpush1.xpose.msra.mxu0 0.0
        %966 = vmatprep.subr.mxu0 0.0
        %967 = vmatpush1.xpose.msra.mxu0 0.0
        %968 = vmatprep.subr.mxu0 0.0
        %969 = vmatpush1.xpose.msra.mxu0 0.0
        %970 = vmatprep.subr.mxu0 0.0
        %971 = vmatpush1.xpose.msra.mxu0 0.0
        %972 = vmatprep.subr.mxu0 0.0
        %973 = vmatpush1.xpose.msra.mxu0 0.0
        %974 = vmatprep.subr.mxu0 0.0
        %975 = vmatpush1.xpose.msra.mxu0 0.0
        %976 = vmatprep.subr.mxu0 0.0
        %977 = vmatpush1.xpose.msra.mxu0 0.0
        %978 = vmatprep.subr.mxu0 0.0
        %979 = vmatpush1.xpose.msra.mxu0 0.0
        %980 = vmatprep.subr.mxu0 0.0
        %981 = vmatpush1.xpose.msra.mxu0 0.0
        %982 = vmatprep.subr.mxu0 0.0
        %983 = vmatpush1.xpose.msra.mxu0 0.0
        %984 = vmatprep.subr.mxu0 0.0
        %985 = vmatpush1.xpose.msra.mxu0 0.0
        %986 = vmatprep.subr.mxu0 0.0
        %987 = vmatpush1.xpose.msra.mxu0 0.0
        %988 = vmatprep.subr.mxu0 0.0
        %989 = vmatpush1.xpose.msra.mxu0 0.0
        %990 = vmatprep.subr.mxu0 0.0
        %991 = vmatpush1.xpose.msra.mxu0 0.0
        %992 = vmatprep.subr.mxu0 0.0
        %993 = vmatpush1.xpose.msra.mxu0 0.0
        %994 = vmatprep.subr.mxu0 0.0
        %995 = vmatpush1.xpose.msra.mxu0 0.0
        %996 = vmatprep.subr.mxu0 0.0
        %997 = vmatpush1.xpose.msra.mxu0 0.0
        %998 = vmatprep.subr.mxu0 0.0
        %999 = vmatpush1.xpose.msra.mxu0 0.0
        %1000 = vmatprep.subr.mxu0 0.0
        %1001 = vmatpush1.xpose.msra.mxu0 0.0
        %1002 = vmatprep.subr.mxu0 0.0
        %1003 = vmatpush1.xpose.msra.mxu0 0.0
        %1004 = vmatprep.subr.mxu0 0.0
        %1005 = vmatpush1.xpose.msra.mxu0 0.0
        %1006 = vmatprep.subr.mxu0 0.0
        %1007 = vmatpush1.xpose.msra.mxu0 0.0
        %1008 = vmatprep.subr.mxu0 0.0
        %1009 = vmatpush1.xpose.msra.mxu0 0.0
        %1010 = vmatprep.subr.mxu0 0.0
        %1011 = vmatpush1.xpose.msra.mxu0 0.0
        %1012 = vmatprep.subr.mxu0 0.0
        %1013 = vmatpush1.xpose.msra.mxu0 0.0
        %1014 = vmatprep.subr.mxu0 0.0
        %1015 = vmatpush1.xpose.msra.mxu0 0.0
        %1016 = vmatprep.subr.mxu0 0.0
        %1017 = vmatpush1.xpose.msra.mxu0 0.0
        %1018 = vmatprep.mubr.f32.mxu0 0.0
        %1019 = vmatmul.mubr.f32.gmra.mrb[0].mxu0 %v946
        %v1020 = vpop.f32.mrb[0].mxu0
        %v1021 = vadd.f32 0.0, %v1020
        %v1022 = vpop.f32.mrb[0].mxu0
        %1023 = vmatprep.mubr.f32.mxu0 0.0
        %1024 = vmatmul.mubr.f32.gmra.mrb[0].mxu0 %v948
        %v1025 = vpop.f32.mrb[0].mxu0
        %v1026 = vadd.f32 0.0, %v1025
        %v1027 = vpop.f32.mrb[0].mxu0
        %1028 = vdwg.mxu0
        %1029 = vst.msk [vmem:[#allocation2 + $0x20] sm:$0xff] %vm842, %v1021
        %1030 = vst.msk [vmem:[#allocation2 + $0x28] sm:$0xff] %vm842, %v1026
        %1031 = vrot.lane.b32.xlu0 %v550, 32
        %v1032 = vpop.permute.xlu0 %1031
        %1033 = vrot.lane.b32.xlu0 %v555, 32
        %v1034 = vpop.permute.xlu0 %1033
        %1035 = vrot.lane.b32.xlu0 %v648, 32
        %v1036 = vpop.permute.xlu0 %1035
        %1037 = vrot.lane.b32.xlu0 %v653, 32
        %v1038 = vpop.permute.xlu0 %1037
        %v1039 = vsel %vm754, %v1032, 0
        %v1041 = vsel %vm754, %v1034, 0
        %v1043 = vsel %vm754, %v1036, 0
        %v1045 = vsel %vm754, %v1038, 0
        %1047 = vmatprep.subr.mxu0 0.0
        %1048 = vmatpush1.xpose.msra.mxu0 %v1043
        %1049 = vmatprep.subr.mxu0 0.0
        %1050 = vmatpush1.xpose.msra.mxu0 %v1045
        %1051 = vmatprep.subr.mxu0 0.0
        %1052 = vmatpush1.xpose.msra.mxu0 0.0
        %1053 = vmatprep.subr.mxu0 0.0
        %1054 = vmatpush1.xpose.msra.mxu0 0.0
        %1055 = vmatprep.subr.mxu0 0.0
        %1056 = vmatpush1.xpose.msra.mxu0 0.0
        %1057 = vmatprep.subr.mxu0 0.0
        %1058 = vmatpush1.xpose.msra.mxu0 0.0
        %1059 = vmatprep.subr.mxu0 0.0
        %1060 = vmatpush1.xpose.msra.mxu0 0.0
        %1061 = vmatprep.subr.mxu0 0.0
        %1062 = vmatpush1.xpose.msra.mxu0 0.0
        %1063 = vmatprep.subr.mxu0 0.0
        %1064 = vmatpush1.xpose.msra.mxu0 0.0
        %1065 = vmatprep.subr.mxu0 0.0
        %1066 = vmatpush1.xpose.msra.mxu0 0.0
        %1067 = vmatprep.subr.mxu0 0.0
        %1068 = vmatpush1.xpose.msra.mxu0 0.0
        %1069 = vmatprep.subr.mxu0 0.0
        %1070 = vmatpush1.xpose.msra.mxu0 0.0
        %1071 = vmatprep.subr.mxu0 0.0
        %1072 = vmatpush1.xpose.msra.mxu0 0.0
        %1073 = vmatprep.subr.mxu0 0.0
        %1074 = vmatpush1.xpose.msra.mxu0 0.0
        %1075 = vmatprep.subr.mxu0 0.0
        %1076 = vmatpush1.xpose.msra.mxu0 0.0
        %1077 = vmatprep.subr.mxu0 0.0
        %1078 = vmatpush1.xpose.msra.mxu0 0.0
        %1079 = vmatprep.subr.mxu0 0.0
        %1080 = vmatpush1.xpose.msra.mxu0 0.0
        %1081 = vmatprep.subr.mxu0 0.0
        %1082 = vmatpush1.xpose.msra.mxu0 0.0
        %1083 = vmatprep.subr.mxu0 0.0
        %1084 = vmatpush1.xpose.msra.mxu0 0.0
        %1085 = vmatprep.subr.mxu0 0.0
        %1086 = vmatpush1.xpose.msra.mxu0 0.0
        %1087 = vmatprep.subr.mxu0 0.0
        %1088 = vmatpush1.xpose.msra.mxu0 0.0
        %1089 = vmatprep.subr.mxu0 0.0
        %1090 = vmatpush1.xpose.msra.mxu0 0.0
        %1091 = vmatprep.subr.mxu0 0.0
        %1092 = vmatpush1.xpose.msra.mxu0 0.0
        %1093 = vmatprep.subr.mxu0 0.0
        %1094 = vmatpush1.xpose.msra.mxu0 0.0
        %1095 = vmatprep.subr.mxu0 0.0
        %1096 = vmatpush1.xpose.msra.mxu0 0.0
        %1097 = vmatprep.subr.mxu0 0.0
        %1098 = vmatpush1.xpose.msra.mxu0 0.0
        %1099 = vmatprep.subr.mxu0 0.0
        %1100 = vmatpush1.xpose.msra.mxu0 0.0
        %1101 = vmatprep.subr.mxu0 0.0
        %1102 = vmatpush1.xpose.msra.mxu0 0.0
        %1103 = vmatprep.subr.mxu0 0.0
        %1104 = vmatpush1.xpose.msra.mxu0 0.0
        %1105 = vmatprep.subr.mxu0 0.0
        %1106 = vmatpush1.xpose.msra.mxu0 0.0
        %1107 = vmatprep.subr.mxu0 0.0
        %1108 = vmatpush1.xpose.msra.mxu0 0.0
        %1109 = vmatprep.subr.mxu0 0.0
        %1110 = vmatpush1.xpose.msra.mxu0 0.0
        %1111 = vmatprep.mubr.f32.mxu0 0.0
        %1112 = vmatmul.mubr.f32.gmra.mrb[0].mxu0 %v1039
        %v1113 = vpop.f32.mrb[0].mxu0
        %v1114 = vadd.f32 0.0, %v1113
        %v1115 = vpop.f32.mrb[0].mxu0
        %1116 = vmatprep.mubr.f32.mxu0 0.0
        %1117 = vmatmul.mubr.f32.gmra.mrb[0].mxu0 %v1041
        %v1118 = vpop.f32.mrb[0].mxu0
        %v1119 = vadd.f32 0.0, %v1118
        %v1120 = vpop.f32.mrb[0].mxu0
        %1121 = vdwg.mxu0
        %1122 = vst.msk [vmem:[#allocation2 + $0x30] sm:$0xff] %vm842, %v1114
        %1123 = vst.msk [vmem:[#allocation2 + $0x38] sm:$0xff] %vm842, %v1119
        %v1124 = vld [vmem:[#allocation2] sm:$0xff]
        %v1125 = vld [vmem:[#allocation2 + $0x8] sm:$0xff]
        %v1126 = vld [vmem:[#allocation2 + $0x10] sm:$0xff]
        %v1127 = vld [vmem:[#allocation2 + $0x18] sm:$0xff]
        %v1128 = vld [vmem:[#allocation2 + $0x20] sm:$0xff]
        %v1129 = vld [vmem:[#allocation2 + $0x28] sm:$0xff]
        %v1130 = vld [vmem:[#allocation2 + $0x30] sm:$0xff]
        %v1131 = vld [vmem:[#allocation2 + $0x38] sm:$0xff]
        %v1132 = vsel %vm842, %v1124, -inf
        %1133 = vmax.xlane.f32.xlu0 %v1132
        %v1134 = vpop.xlane.xlu0 %1133
        %v1135 = vsel %vm842, %v1125, -inf
        %1136 = vmax.xlane.f32.xlu0 %v1135
        %v1137 = vpop.xlane.xlu0 %1136
        %v1138 = vsel %vm842, %v1126, -inf
        %1139 = vmax.xlane.f32.xlu0 %v1138
        %v1140 = vpop.xlane.xlu0 %1139
        %v1141 = vsel %vm842, %v1127, -inf
        %1142 = vmax.xlane.f32.xlu0 %v1141
        %v1143 = vpop.xlane.xlu0 %1142
        %v1144 = vsel %vm842, %v1128, -inf
        %1145 = vmax.xlane.f32.xlu0 %v1144
        %v1146 = vpop.xlane.xlu0 %1145
        %v1147 = vsel %vm842, %v1129, -inf
        %1148 = vmax.xlane.f32.xlu0 %v1147
        %v1149 = vpop.xlane.xlu0 %1148
        %v1150 = vsel %vm842, %v1130, -inf
        %1151 = vmax.xlane.f32.xlu0 %v1150
        %v1152 = vpop.xlane.xlu0 %1151
        %v1153 = vsel %vm842, %v1131, -inf
        %1154 = vmax.xlane.f32.xlu0 %v1153
        %v1155 = vpop.xlane.xlu0 %1154
        %v1156 = vsub.f32 %v1124, %v1134
        %v1157 = vsub.f32 %v1125, %v1137
        %v1158 = vsub.f32 %v1126, %v1140
        %v1159 = vsub.f32 %v1127, %v1143
        %v1160 = vsub.f32 %v1128, %v1146
        %v1161 = vsub.f32 %v1129, %v1149
        %v1162 = vsub.f32 %v1130, %v1152
        %v1163 = vsub.f32 %v1131, %v1155
        %v1164 = vmul.f32 %v1156, 1.442695
        %v1165 = vpow.pop %v1164
        %v1166 = vmul.f32 %v1157, 1.442695
        %v1167 = vpow.pop %v1166
        %v1168 = vmul.f32 %v1158, 1.442695
        %v1169 = vpow.pop %v1168
        %v1170 = vmul.f32 %v1159, 1.442695
        %v1171 = vpow.pop %v1170
        %v1172 = vmul.f32 %v1160, 1.442695
        %v1173 = vpow.pop %v1172
        %v1174 = vmul.f32 %v1161, 1.442695
        %v1175 = vpow.pop %v1174
        %v1176 = vmul.f32 %v1162, 1.442695
        %v1177 = vpow.pop %v1176
        %v1178 = vmul.f32 %v1163, 1.442695
        %v1179 = vpow.pop %v1178
        %v1180 = vsel %vm842, %v1165, 0.0
        %1181 = vadd.xlane.f32.xlu0 %v1180
        %v1182 = vpop.xlane.xlu0 %1181
        %v1183 = vsel %vm842, %v1167, 0.0
        %1184 = vadd.xlane.f32.xlu0 %v1183
        %v1185 = vpop.xlane.xlu0 %1184
        %v1186 = vsel %vm842, %v1169, 0.0
        %1187 = vadd.xlane.f32.xlu0 %v1186
        %v1188 = vpop.xlane.xlu0 %1187
        %v1189 = vsel %vm842, %v1171, 0.0
        %1190 = vadd.xlane.f32.xlu0 %v1189
        %v1191 = vpop.xlane.xlu0 %1190
        %v1192 = vsel %vm842, %v1173, 0.0
        %1193 = vadd.xlane.f32.xlu0 %v1192
        %v1194 = vpop.xlane.xlu0 %1193
        %v1195 = vsel %vm842, %v1175, 0.0
        %1196 = vadd.xlane.f32.xlu0 %v1195
        %v1197 = vpop.xlane.xlu0 %1196
        %v1198 = vsel %vm842, %v1177, 0.0
        %1199 = vadd.xlane.f32.xlu0 %v1198
        %v1200 = vpop.xlane.xlu0 %1199
        %v1201 = vsel %vm842, %v1179, 0.0
        %1202 = vadd.xlane.f32.xlu0 %v1201
        %v1203 = vpop.xlane.xlu0 %1202
        %v1204 = vrcp.pop %v1182
        %v1205 = vmul.f32 %v1165, %v1204
        %v1206 = vrcp.pop %v1185
        %v1207 = vmul.f32 %v1167, %v1206
        %v1208 = vrcp.pop %v1188
        %v1209 = vmul.f32 %v1169, %v1208
        %v1210 = vrcp.pop %v1191
        %v1211 = vmul.f32 %v1171, %v1210
        %v1212 = vrcp.pop %v1194
        %v1213 = vmul.f32 %v1173, %v1212
        %v1214 = vrcp.pop %v1197
        %v1215 = vmul.f32 %v1175, %v1214
        %v1216 = vrcp.pop %v1200
        %v1217 = vmul.f32 %v1177, %v1216
        %v1218 = vrcp.pop %v1203
        %v1219 = vmul.f32 %v1179, %v1218
        %v1220 = vsel %vm842, %v1205, 0.0
        %v1221 = vsel %vm842, %v1207, 0.0
        %v1222 = vadd.f32 %v1220, %v1221
        %v1223 = vsel %vm842, %v1209, 0.0
        %v1224 = vadd.f32 %v1222, %v1223
        %v1225 = vsel %vm842, %v1211, 0.0
        %v1226 = vadd.f32 %v1224, %v1225
        %v1227 = vsel %vm842, %v1213, 0.0
        %v1228 = vadd.f32 %v1226, %v1227
        %v1229 = vsel %vm842, %v1215, 0.0
        %v1230 = vadd.f32 %v1228, %v1229
        %v1231 = vsel %vm842, %v1217, 0.0
        %v1232 = vadd.f32 %v1230, %v1231
        %v1233 = vsel %vm842, %v1219, 0.0
        %v1234 = vadd.f32 %v1232, %v1233
        %v1235 = vrot.slane %v1234, 4
        %v1236 = vadd.f32 %v1234, %v1235
        %v1237 = vrot.slane %v1236, 2
        %v1238 = vadd.f32 %v1236, %v1237
        %v1239 = vrot.slane %v1238, 1
        %v1240 = vadd.f32 %v1238, %v1239
        %v1241 = vrcp.pop 64.0
        %v1242 = vmul.f32 %v1240, %v1241
        %vm1243 = vcmask 122880
        %1244 = vst.msk [vmem:[%s457] sm:$0x1] %vm1243, %v1242
        %v1246 = vsel %vm842, %v1205, 0
        %v1249 = vsel %vm842, %v1207, 0
        %1251 = vmatprep.subr.mxu0 0.0
        %1252 = vmatpush1.msra.mxu0 %v746
        %1253 = vmatprep.subr.mxu0 0.0
        %1254 = vmatpush1.msra.mxu0 %v751
        %1255 = vmatprep.subr.mxu0 0.0
        %1256 = vmatpush1.msra.mxu0 0.0
        %1257 = vmatprep.subr.mxu0 0.0
        %1258 = vmatpush1.msra.mxu0 0.0
        %1259 = vmatprep.subr.mxu0 0.0
        %1260 = vmatpush1.msra.mxu0 0.0
        %1261 = vmatprep.subr.mxu0 0.0
        %1262 = vmatpush1.msra.mxu0 0.0
        %1263 = vmatprep.subr.mxu0 0.0
        %1264 = vmatpush1.msra.mxu0 0.0
        %1265 = vmatprep.subr.mxu0 0.0
        %1266 = vmatpush1.msra.mxu0 0.0
        %1267 = vmatprep.subr.mxu0 0.0
        %1268 = vmatpush1.msra.mxu0 0.0
        %1269 = vmatprep.subr.mxu0 0.0
        %1270 = vmatpush1.msra.mxu0 0.0
        %1271 = vmatprep.subr.mxu0 0.0
        %1272 = vmatpush1.msra.mxu0 0.0
        %1273 = vmatprep.subr.mxu0 0.0
        %1274 = vmatpush1.msra.mxu0 0.0
        %1275 = vmatprep.subr.mxu0 0.0
        %1276 = vmatpush1.msra.mxu0 0.0
        %1277 = vmatprep.subr.mxu0 0.0
        %1278 = vmatpush1.msra.mxu0 0.0
        %1279 = vmatprep.subr.mxu0 0.0
        %1280 = vmatpush1.msra.mxu0 0.0
        %1281 = vmatprep.subr.mxu0 0.0
        %1282 = vmatpush1.msra.mxu0 0.0
        %1283 = vmatprep.subr.mxu0 0.0
        %1284 = vmatpush1.msra.mxu0 0.0
        %1285 = vmatprep.subr.mxu0 0.0
        %1286 = vmatpush1.msra.mxu0 0.0
        %1287 = vmatprep.subr.mxu0 0.0
        %1288 = vmatpush1.msra.mxu0 0.0
        %1289 = vmatprep.subr.mxu0 0.0
        %1290 = vmatpush1.msra.mxu0 0.0
        %1291 = vmatprep.subr.mxu0 0.0
        %1292 = vmatpush1.msra.mxu0 0.0
        %1293 = vmatprep.subr.mxu0 0.0
        %1294 = vmatpush1.msra.mxu0 0.0
        %1295 = vmatprep.subr.mxu0 0.0
        %1296 = vmatpush1.msra.mxu0 0.0
        %1297 = vmatprep.subr.mxu0 0.0
        %1298 = vmatpush1.msra.mxu0 0.0
        %1299 = vmatprep.subr.mxu0 0.0
        %1300 = vmatpush1.msra.mxu0 0.0
        %1301 = vmatprep.subr.mxu0 0.0
        %1302 = vmatpush1.msra.mxu0 0.0
        %1303 = vmatprep.subr.mxu0 0.0
        %1304 = vmatpush1.msra.mxu0 0.0
        %1305 = vmatprep.subr.mxu0 0.0
        %1306 = vmatpush1.msra.mxu0 0.0
        %1307 = vmatprep.subr.mxu0 0.0
        %1308 = vmatpush1.msra.mxu0 0.0
        %1309 = vmatprep.subr.mxu0 0.0
        %1310 = vmatpush1.msra.mxu0 0.0
        %1311 = vmatprep.subr.mxu0 0.0
        %1312 = vmatpush1.msra.mxu0 0.0
        %1313 = vmatprep.subr.mxu0 0.0
        %1314 = vmatpush1.msra.mxu0 0.0
        %1315 = vmatprep.mubr.f32.mxu0 0.0
        %1316 = vmatmul.mubr.f32.gmra.mrb[0].mxu0 %v1246
        %v1317 = vpop.f32.mrb[0].mxu0
        %v1318 = vadd.f32 0.0, %v1317
        %v1319 = vpop.f32.mrb[0].mxu0
        %1320 = vmatprep.mubr.f32.mxu0 0.0
        %1321 = vmatmul.mubr.f32.gmra.mrb[0].mxu0 %v1249
        %v1322 = vpop.f32.mrb[0].mxu0
        %v1323 = vadd.f32 0.0, %v1322
        %v1324 = vpop.f32.mrb[0].mxu0
        %1325 = vdwg.mxu0
        %1328 = vrot.lane.b32.xlu0 %v746, 96
        %v1329 = vpop.permute.xlu0 %1328
        %1330 = vrot.lane.b32.xlu0 %v751, 96
        %v1331 = vpop.permute.xlu0 %1330
        %v1335 = vsel %vm842, %v1209, 0
        %v1338 = vsel %vm842, %v1211, 0
        %1340 = vmatprep.subr.mxu0 0.0
        %1341 = vmatpush1.msra.mxu0 %v1329
        %1342 = vmatprep.subr.mxu0 0.0
        %1343 = vmatpush1.msra.mxu0 %v1331
        %1344 = vmatprep.subr.mxu0 0.0
        %1345 = vmatpush1.msra.mxu0 0.0
        %1346 = vmatprep.subr.mxu0 0.0
        %1347 = vmatpush1.msra.mxu0 0.0
        %1348 = vmatprep.subr.mxu0 0.0
        %1349 = vmatpush1.msra.mxu0 0.0
        %1350 = vmatprep.subr.mxu0 0.0
        %1351 = vmatpush1.msra.mxu0 0.0
        %1352 = vmatprep.subr.mxu0 0.0
        %1353 = vmatpush1.msra.mxu0 0.0
        %1354 = vmatprep.subr.mxu0 0.0
        %1355 = vmatpush1.msra.mxu0 0.0
        %1356 = vmatprep.subr.mxu0 0.0
        %1357 = vmatpush1.msra.mxu0 0.0
        %1358 = vmatprep.subr.mxu0 0.0
        %1359 = vmatpush1.msra.mxu0 0.0
        %1360 = vmatprep.subr.mxu0 0.0
        %1361 = vmatpush1.msra.mxu0 0.0
        %1362 = vmatprep.subr.mxu0 0.0
        %1363 = vmatpush1.msra.mxu0 0.0
        %1364 = vmatprep.subr.mxu0 0.0
        %1365 = vmatpush1.msra.mxu0 0.0
        %1366 = vmatprep.subr.mxu0 0.0
        %1367 = vmatpush1.msra.mxu0 0.0
        %1368 = vmatprep.subr.mxu0 0.0
        %1369 = vmatpush1.msra.mxu0 0.0
        %1370 = vmatprep.subr.mxu0 0.0
        %1371 = vmatpush1.msra.mxu0 0.0
        %1372 = vmatprep.subr.mxu0 0.0
        %1373 = vmatpush1.msra.mxu0 0.0
        %1374 = vmatprep.subr.mxu0 0.0
        %1375 = vmatpush1.msra.mxu0 0.0
        %1376 = vmatprep.subr.mxu0 0.0
        %1377 = vmatpush1.msra.mxu0 0.0
        %1378 = vmatprep.subr.mxu0 0.0
        %1379 = vmatpush1.msra.mxu0 0.0
        %1380 = vmatprep.subr.mxu0 0.0
        %1381 = vmatpush1.msra.mxu0 0.0
        %1382 = vmatprep.subr.mxu0 0.0
        %1383 = vmatpush1.msra.mxu0 0.0
        %1384 = vmatprep.subr.mxu0 0.0
        %1385 = vmatpush1.msra.mxu0 0.0
        %1386 = vmatprep.subr.mxu0 0.0
        %1387 = vmatpush1.msra.mxu0 0.0
        %1388 = vmatprep.subr.mxu0 0.0
        %1389 = vmatpush1.msra.mxu0 0.0
        %1390 = vmatprep.subr.mxu0 0.0
        %1391 = vmatpush1.msra.mxu0 0.0
        %1392 = vmatprep.subr.mxu0 0.0
        %1393 = vmatpush1.msra.mxu0 0.0
        %1394 = vmatprep.subr.mxu0 0.0
        %1395 = vmatpush1.msra.mxu0 0.0
        %1396 = vmatprep.subr.mxu0 0.0
        %1397 = vmatpush1.msra.mxu0 0.0
        %1398 = vmatprep.subr.mxu0 0.0
        %1399 = vmatpush1.msra.mxu0 0.0
        %1400 = vmatprep.subr.mxu0 0.0
        %1401 = vmatpush1.msra.mxu0 0.0
        %1402 = vmatprep.subr.mxu0 0.0
        %1403 = vmatpush1.msra.mxu0 0.0
        %1404 = vmatprep.mubr.f32.mxu0 0.0
        %1405 = vmatmul.mubr.f32.gmra.mrb[0].mxu0 %v1335
        %v1406 = vpop.f32.mrb[0].mxu0
        %v1407 = vadd.f32 0.0, %v1406
        %v1408 = vpop.f32.mrb[0].mxu0
        %1409 = vmatprep.mubr.f32.mxu0 0.0
        %1410 = vmatmul.mubr.f32.gmra.mrb[0].mxu0 %v1338
        %v1411 = vpop.f32.mrb[0].mxu0
        %v1412 = vadd.f32 0.0, %v1411
        %v1413 = vpop.f32.mrb[0].mxu0
        %1414 = vdwg.mxu0
        %1415 = vrot.lane.b32.xlu0 %v746, 64
        %v1416 = vpop.permute.xlu0 %1415
        %1417 = vrot.lane.b32.xlu0 %v751, 64
        %v1418 = vpop.permute.xlu0 %1417
        %v1422 = vsel %vm842, %v1213, 0
        %v1425 = vsel %vm842, %v1215, 0
        %1427 = vmatprep.subr.mxu0 0.0
        %1428 = vmatpush1.msra.mxu0 %v1416
        %1429 = vmatprep.subr.mxu0 0.0
        %1430 = vmatpush1.msra.mxu0 %v1418
        %1431 = vmatprep.subr.mxu0 0.0
        %1432 = vmatpush1.msra.mxu0 0.0
        %1433 = vmatprep.subr.mxu0 0.0
        %1434 = vmatpush1.msra.mxu0 0.0
        %1435 = vmatprep.subr.mxu0 0.0
        %1436 = vmatpush1.msra.mxu0 0.0
        %1437 = vmatprep.subr.mxu0 0.0
        %1438 = vmatpush1.msra.mxu0 0.0
        %1439 = vmatprep.subr.mxu0 0.0
        %1440 = vmatpush1.msra.mxu0 0.0
        %1441 = vmatprep.subr.mxu0 0.0
        %1442 = vmatpush1.msra.mxu0 0.0
        %1443 = vmatprep.subr.mxu0 0.0
        %1444 = vmatpush1.msra.mxu0 0.0
        %1445 = vmatprep.subr.mxu0 0.0
        %1446 = vmatpush1.msra.mxu0 0.0
        %1447 = vmatprep.subr.mxu0 0.0
        %1448 = vmatpush1.msra.mxu0 0.0
        %1449 = vmatprep.subr.mxu0 0.0
        %1450 = vmatpush1.msra.mxu0 0.0
        %1451 = vmatprep.subr.mxu0 0.0
        %1452 = vmatpush1.msra.mxu0 0.0
        %1453 = vmatprep.subr.mxu0 0.0
        %1454 = vmatpush1.msra.mxu0 0.0
        %1455 = vmatprep.subr.mxu0 0.0
        %1456 = vmatpush1.msra.mxu0 0.0
        %1457 = vmatprep.subr.mxu0 0.0
        %1458 = vmatpush1.msra.mxu0 0.0
        %1459 = vmatprep.subr.mxu0 0.0
        %1460 = vmatpush1.msra.mxu0 0.0
        %1461 = vmatprep.subr.mxu0 0.0
        %1462 = vmatpush1.msra.mxu0 0.0
        %1463 = vmatprep.subr.mxu0 0.0
        %1464 = vmatpush1.msra.mxu0 0.0
        %1465 = vmatprep.subr.mxu0 0.0
        %1466 = vmatpush1.msra.mxu0 0.0
        %1467 = vmatprep.subr.mxu0 0.0
        %1468 = vmatpush1.msra.mxu0 0.0
        %1469 = vmatprep.subr.mxu0 0.0
        %1470 = vmatpush1.msra.mxu0 0.0
        %1471 = vmatprep.subr.mxu0 0.0
        %1472 = vmatpush1.msra.mxu0 0.0
        %1473 = vmatprep.subr.mxu0 0.0
        %1474 = vmatpush1.msra.mxu0 0.0
        %1475 = vmatprep.subr.mxu0 0.0
        %1476 = vmatpush1.msra.mxu0 0.0
        %1477 = vmatprep.subr.mxu0 0.0
        %1478 = vmatpush1.msra.mxu0 0.0
        %1479 = vmatprep.subr.mxu0 0.0
        %1480 = vmatpush1.msra.mxu0 0.0
        %1481 = vmatprep.subr.mxu0 0.0
        %1482 = vmatpush1.msra.mxu0 0.0
        %1483 = vmatprep.subr.mxu0 0.0
        %1484 = vmatpush1.msra.mxu0 0.0
        %1485 = vmatprep.subr.mxu0 0.0
        %1486 = vmatpush1.msra.mxu0 0.0
        %1487 = vmatprep.subr.mxu0 0.0
        %1488 = vmatpush1.msra.mxu0 0.0
        %1489 = vmatprep.subr.mxu0 0.0
        %1490 = vmatpush1.msra.mxu0 0.0
        %1491 = vmatprep.mubr.f32.mxu0 0.0
        %1492 = vmatmul.mubr.f32.gmra.mrb[0].mxu0 %v1422
        %v1493 = vpop.f32.mrb[0].mxu0
        %v1494 = vadd.f32 0.0, %v1493
        %v1495 = vpop.f32.mrb[0].mxu0
        %1496 = vmatprep.mubr.f32.mxu0 0.0
        %1497 = vmatmul.mubr.f32.gmra.mrb[0].mxu0 %v1425
        %v1498 = vpop.f32.mrb[0].mxu0
        %v1499 = vadd.f32 0.0, %v1498
        %v1500 = vpop.f32.mrb[0].mxu0
        %1501 = vdwg.mxu0
        %1502 = vrot.lane.b32.xlu0 %v746, 32
        %v1503 = vpop.permute.xlu0 %1502
        %1504 = vrot.lane.b32.xlu0 %v751, 32
        %v1505 = vpop.permute.xlu0 %1504
        %v1509 = vsel %vm842, %v1217, 0
        %v1512 = vsel %vm842, %v1219, 0
        %1514 = vmatprep.subr.mxu0 0.0
        %1515 = vmatpush1.msra.mxu0 %v1503
        %1516 = vmatprep.subr.mxu0 0.0
        %1517 = vmatpush1.msra.mxu0 %v1505
        %1518 = vmatprep.subr.mxu0 0.0
        %1519 = vmatpush1.msra.mxu0 0.0
        %1520 = vmatprep.subr.mxu0 0.0
        %1521 = vmatpush1.msra.mxu0 0.0
        %1522 = vmatprep.subr.mxu0 0.0
        %1523 = vmatpush1.msra.mxu0 0.0
        %1524 = vmatprep.subr.mxu0 0.0
        %1525 = vmatpush1.msra.mxu0 0.0
        %1526 = vmatprep.subr.mxu0 0.0
        %1527 = vmatpush1.msra.mxu0 0.0
        %1528 = vmatprep.subr.mxu0 0.0
        %1529 = vmatpush1.msra.mxu0 0.0
        %1530 = vmatprep.subr.mxu0 0.0
        %1531 = vmatpush1.msra.mxu0 0.0
        %1532 = vmatprep.subr.mxu0 0.0
        %1533 = vmatpush1.msra.mxu0 0.0
        %1534 = vmatprep.subr.mxu0 0.0
        %1535 = vmatpush1.msra.mxu0 0.0
        %1536 = vmatprep.subr.mxu0 0.0
        %1537 = vmatpush1.msra.mxu0 0.0
        %1538 = vmatprep.subr.mxu0 0.0
        %1539 = vmatpush1.msra.mxu0 0.0
        %1540 = vmatprep.subr.mxu0 0.0
        %1541 = vmatpush1.msra.mxu0 0.0
        %1542 = vmatprep.subr.mxu0 0.0
        %1543 = vmatpush1.msra.mxu0 0.0
        %1544 = vmatprep.subr.mxu0 0.0
        %1545 = vmatpush1.msra.mxu0 0.0
        %1546 = vmatprep.subr.mxu0 0.0
        %1547 = vmatpush1.msra.mxu0 0.0
        %1548 = vmatprep.subr.mxu0 0.0
        %1549 = vmatpush1.msra.mxu0 0.0
        %1550 = vmatprep.subr.mxu0 0.0
        %1551 = vmatpush1.msra.mxu0 0.0
        %1552 = vmatprep.subr.mxu0 0.0
        %1553 = vmatpush1.msra.mxu0 0.0
        %1554 = vmatprep.subr.mxu0 0.0
        %1555 = vmatpush1.msra.mxu0 0.0
        %1556 = vmatprep.subr.mxu0 0.0
        %1557 = vmatpush1.msra.mxu0 0.0
        %1558 = vmatprep.subr.mxu0 0.0
        %1559 = vmatpush1.msra.mxu0 0.0
        %1560 = vmatprep.subr.mxu0 0.0
        %1561 = vmatpush1.msra.mxu0 0.0
        %1562 = vmatprep.subr.mxu0 0.0
        %1563 = vmatpush1.msra.mxu0 0.0
        %1564 = vmatprep.subr.mxu0 0.0
        %1565 = vmatpush1.msra.mxu0 0.0
        %1566 = vmatprep.subr.mxu0 0.0
        %1567 = vmatpush1.msra.mxu0 0.0
        %1568 = vmatprep.subr.mxu0 0.0
        %1569 = vmatpush1.msra.mxu0 0.0
        %1570 = vmatprep.subr.mxu0 0.0
        %1571 = vmatpush1.msra.mxu0 0.0
        %1572 = vmatprep.subr.mxu0 0.0
        %1573 = vmatpush1.msra.mxu0 0.0
        %1574 = vmatprep.subr.mxu0 0.0
        %1575 = vmatpush1.msra.mxu0 0.0
        %1576 = vmatprep.subr.mxu0 0.0
        %1577 = vmatpush1.msra.mxu0 0.0
        %1578 = vmatprep.mubr.f32.mxu0 0.0
        %1579 = vmatmul.mubr.f32.gmra.mrb[0].mxu0 %v1509
        %v1580 = vpop.f32.mrb[0].mxu0
        %v1581 = vadd.f32 0.0, %v1580
        %v1582 = vpop.f32.mrb[0].mxu0
        %1583 = vmatprep.mubr.f32.mxu0 0.0
        %1584 = vmatmul.mubr.f32.gmra.mrb[0].mxu0 %v1512
        %v1585 = vpop.f32.mrb[0].mxu0
        %v1586 = vadd.f32 0.0, %v1585
        %v1587 = vpop.f32.mrb[0].mxu0
        %1588 = vdwg.mxu0
        %1591 = vrot.lane.b32.xlu0 %v1407, 32
        %v1592 = vpop.permute.xlu0 %1591
        %1593 = vrot.lane.b32.xlu0 %v1412, 32
        %v1594 = vpop.permute.xlu0 %1593
        %1599 = vrot.lane.b32.xlu0 %v1494, 64
        %v1600 = vpop.permute.xlu0 %1599
        %1601 = vrot.lane.b32.xlu0 %v1499, 64
        %v1602 = vpop.permute.xlu0 %1601
        %1607 = vrot.lane.b32.xlu0 %v1581, 96
        %v1608 = vpop.permute.xlu0 %1607
        %1609 = vrot.lane.b32.xlu0 %v1586, 96
        %v1610 = vpop.permute.xlu0 %1609
        %v1613 = vsel %vm754, %v1318, %v1592
        %v1614 = vsel %vm754, %v1323, %v1594
        %vm1615 = vcmask 523264
        %v1616 = vsel %vm1615, %v1613, %v1600
        %v1617 = vsel %vm1615, %v1614, %v1602
        %vm1618 = vcmask 785408
        %v1619 = vsel %vm1618, %v1616, %v1608
        %v1620 = vsel %vm1618, %v1617, %v1610
        %v1621 = vld [vmem:[#allocation5] sm:$0xff]
        %v1622 = vld [vmem:[#allocation5 + $0x8] sm:$0xff]
        %v1623 = vld [vmem:[#allocation5 + $0x10] sm:$0xff]
        %v1624 = vld [vmem:[#allocation5 + $0x18] sm:$0xff]
        %v1625 = vld [vmem:[#allocation5 + $0x20] sm:$0xff]
        %v1626 = vld [vmem:[#allocation5 + $0x28] sm:$0xff]
        %v1627 = vld [vmem:[#allocation5 + $0x30] sm:$0xff]
        %v1628 = vld [vmem:[#allocation5 + $0x38] sm:$0xff]
        %v1629 = vld [vmem:[#allocation5 + $0x40] sm:$0xff]
        %v1630 = vld [vmem:[#allocation5 + $0x48] sm:$0xff]
        %v1631 = vld [vmem:[#allocation5 + $0x50] sm:$0xff]
        %v1632 = vld [vmem:[#allocation5 + $0x58] sm:$0xff]
        %v1633 = vld [vmem:[#allocation5 + $0x60] sm:$0xff]
        %v1634 = vld [vmem:[#allocation5 + $0x68] sm:$0xff]
        %v1635 = vld [vmem:[#allocation5 + $0x70] sm:$0xff]
        %v1636 = vld [vmem:[#allocation5 + $0x78] sm:$0xff]
        %v1637 = vld [vmem:[%s8] sm:$0x1]
        %v1639 = vlaneseq
        %v1640 = vshrl.u32 %v1639, 7
        %v1641 = vsub.s32 0, %v1640
        %v1642 = vrot.slane %v1637, %v1641
        %1644 = vmatprep.subr.mxu0 0.0
        %1645 = vmatpush1.msra.mxu0 %v1621
        %1646 = vmatprep.subr.mxu0 0.0
        %1647 = vmatpush1.msra.mxu0 %v1622
        %1648 = vmatprep.subr.mxu0 0.0
        %1649 = vmatpush1.msra.mxu0 %v1623
        %1650 = vmatprep.subr.mxu0 0.0
        %1651 = vmatpush1.msra.mxu0 %v1624
        %1652 = vmatprep.subr.mxu0 0.0
        %1653 = vmatpush1.msra.mxu0 %v1625
        %1654 = vmatprep.subr.mxu0 0.0
        %1655 = vmatpush1.msra.mxu0 %v1626
        %1656 = vmatprep.subr.mxu0 0.0
        %1657 = vmatpush1.msra.mxu0 %v1627
        %1658 = vmatprep.subr.mxu0 0.0
        %1659 = vmatpush1.msra.mxu0 %v1628
        %1660 = vmatprep.subr.mxu0 0.0
        %1661 = vmatpush1.msra.mxu0 %v1629
        %1662 = vmatprep.subr.mxu0 0.0
        %1663 = vmatpush1.msra.mxu0 %v1630
        %1664 = vmatprep.subr.mxu0 0.0
        %1665 = vmatpush1.msra.mxu0 %v1631
        %1666 = vmatprep.subr.mxu0 0.0
        %1667 = vmatpush1.msra.mxu0 %v1632
        %1668 = vmatprep.subr.mxu0 0.0
        %1669 = vmatpush1.msra.mxu0 %v1633
        %1670 = vmatprep.subr.mxu0 0.0
        %1671 = vmatpush1.msra.mxu0 %v1634
        %1672 = vmatprep.subr.mxu0 0.0
        %1673 = vmatpush1.msra.mxu0 %v1635
        %1674 = vmatprep.subr.mxu0 0.0
        %1675 = vmatpush1.msra.mxu0 %v1636
        %1676 = vmatprep.subr.mxu0 0.0
        %1677 = vmatpush1.msra.mxu0 0.0
        %1678 = vmatprep.subr.mxu0 0.0
        %1679 = vmatpush1.msra.mxu0 0.0
        %1680 = vmatprep.subr.mxu0 0.0
        %1681 = vmatpush1.msra.mxu0 0.0
        %1682 = vmatprep.subr.mxu0 0.0
        %1683 = vmatpush1.msra.mxu0 0.0
        %1684 = vmatprep.subr.mxu0 0.0
        %1685 = vmatpush1.msra.mxu0 0.0
        %1686 = vmatprep.subr.mxu0 0.0
        %1687 = vmatpush1.msra.mxu0 0.0
        %1688 = vmatprep.subr.mxu0 0.0
        %1689 = vmatpush1.msra.mxu0 0.0
        %1690 = vmatprep.subr.mxu0 0.0
        %1691 = vmatpush1.msra.mxu0 0.0
        %1692 = vmatprep.subr.mxu0 0.0
        %1693 = vmatpush1.msra.mxu0 0.0
        %1694 = vmatprep.subr.mxu0 0.0
        %1695 = vmatpush1.msra.mxu0 0.0
        %1696 = vmatprep.subr.mxu0 0.0
        %1697 = vmatpush1.msra.mxu0 0.0
        %1698 = vmatprep.subr.mxu0 0.0
        %1699 = vmatpush1.msra.mxu0 0.0
        %1700 = vmatprep.subr.mxu0 0.0
        %1701 = vmatpush1.msra.mxu0 0.0
        %1702 = vmatprep.subr.mxu0 0.0
        %1703 = vmatpush1.msra.mxu0 0.0
        %1704 = vmatprep.subr.mxu0 0.0
        %1705 = vmatpush1.msra.mxu0 0.0
        %1706 = vmatprep.subr.mxu0 0.0
        %1707 = vmatpush1.msra.mxu0 0.0
        %1708 = vmatprep.mubr.f32.mxu0 0.0
        %1709 = vmatmul.mubr.f32.gmra.mrb[0].mxu0 %v1619
        %v1710 = vpop.f32.mrb[0].mxu0
        %v1711 = vadd.f32 %v1642, %v1710
        %v1712 = vpop.f32.mrb[0].mxu0
        %1713 = vmatprep.mubr.f32.mxu0 0.0
        %1714 = vmatmul.mubr.f32.gmra.mrb[0].mxu0 %v1620
        %v1715 = vpop.f32.mrb[0].mxu0
        %v1716 = vadd.f32 %v1642, %v1715
        %v1717 = vpop.f32.mrb[0].mxu0
        %1718 = vdwg.mxu0
        %v1719 = vadd.f32 %v458, %v1711
        %v1720 = vadd.f32 %v459, %v1716
        %v1721 = vld [vmem:[%s9] sm:$0x1]
        %v1722 = vld [vmem:[%s10] sm:$0x1]
        %1723 = vadd.xlane.f32.xlu0 %v1719
        %v1724 = vpop.xlane.xlu0 %1723
        %1725 = vadd.xlane.f32.xlu0 %v1720
        %v1726 = vpop.xlane.xlu0 %1725
        %v1727 = vrcp.pop 128.0
        %v1728 = vmul.f32 %v1724, %v1727
        %v1729 = vmul.f32 %v1726, %v1727
        %v1730 = vsub.f32 %v1719, %v1728
        %v1731 = vsub.f32 %v1720, %v1729
        %v1732 = vmul.f32 %v1730, %v1730
        %v1733 = vmul.f32 %v1731, %v1731
        %1734 = vadd.xlane.f32.xlu0 %v1732
        %v1735 = vpop.xlane.xlu0 %1734
        %1736 = vadd.xlane.f32.xlu0 %v1733
        %v1737 = vpop.xlane.xlu0 %1736
        %v1738 = vmul.f32 %v1735, %v1727
        %v1739 = vmul.f32 %v1737, %v1727
        %v1740 = vadd.f32 %v1738, 1e-05
        %v1741 = vadd.f32 %v1739, 1e-05
        %v1742 = vrsqrt.pop %v1740
        %v1743 = vrsqrt.pop %v1741
        %v1744 = vmul.f32 %v1730, %v1742
        %v1745 = vmul.f32 %v1731, %v1743
        %v1747 = vlaneseq
        %v1748 = vshrl.u32 %v1747, 7
        %v1749 = vsub.s32 0, %v1748
        %v1750 = vrot.slane %v1721, %v1749
        %v1752 = vmul.f32 %v1744, %v1750
        %v1753 = vmul.f32 %v1745, %v1750
        %v1755 = vlaneseq
        %v1756 = vshrl.u32 %v1755, 7
        %v1757 = vsub.s32 0, %v1756
        %v1758 = vrot.slane %v1722, %v1757
        %v1760 = vadd.f32 %v1752, %v1758
        %v1761 = vadd.f32 %v1753, %v1758
        %1762 = vst [vmem:[%s454] sm:$0xff] %v1760
        %1763 = vst [vmem:[%s454 + $0x8] sm:$0xff] %v1761
        %p1764 = scmp.lt.s32.totalorder %s28, 1
        %s1765 = scalar_select %p1764, %s28, 1
        %s1766 = smul.addr %s1765, 2
        %s1767 = smul.addr %s1766, 8
        %s1768 = scalar_lea.vmem %s11, %s1767
        %p1769 = scmp.lt.s32.totalorder %s28, 1
        %s1770 = scalar_select %p1769, %s28, 1
        %s1771 = scalar_lea.vmem %s12, %s1770
        // Predicated region
        $region73: #{attention_pooling_removal.2} parent=63 // pred_check
          %p1772 = pneg %p282
        $region74: #{attention_pooling_removal.2} parent=63 // pred_check_branch
          %1774 = sbr.rel (%p1772) target = $region76
        $region75: #{attention_pooling_removal.2} parent=63 // pred_region
          _
        $region76: #{attention_pooling_removal.2} parent=63 // pred_fallthru
          _
        // Predicated region
        $region77: #{attention_pooling_removal.2} parent=63 // pred_check
          %p1775 = pneg %p308
        $region78: #{attention_pooling_removal.2} parent=63 // pred_check_branch
          %1777 = sbr.rel (%p1775) target = $region80
        $region79: #{attention_pooling_removal.2} parent=63 // pred_region
          _
        $region80: #{attention_pooling_removal.2} parent=63 // pred_fallthru
          _
      $region64: #{attention_pooling_removal.2} parent=5 // pred_fallthru
        _
      %p1778 = scmp.le.s32.totalorder 2, %s23
      // Predicated region
      $region81: #{attention_pooling_removal.2} parent=5 // pred_check
        %p1779 = pneg %p1778
      $region82: #{attention_pooling_removal.2} parent=5 // pred_check_branch
        %1781 = sbr.rel (%p1779) target = $region84
      $region83: #{attention_pooling_removal.2} parent=5 // pred_region
        %s1782 = ssub.s32 %s23, 2
        // Predicated region
        $region85: #{attention_pooling_removal.2} parent=83 // pred_check
          %p1783 = pneg %p288
        $region86: #{attention_pooling_removal.2} parent=83 // pred_check_branch
          %1785 = sbr.rel (%p1783) target = $region88
        $region87: #{attention_pooling_removal.2} parent=83 // pred_region
          %p1786 = scmp.lt.s32.totalorder %s29, 1
          %s1787 = scalar_select %p1786, %s29, 1
          %s1788 = smul.addr %s1787, 2
          %s1789 = smul.addr %s1788, 8
          %s1790 = scalar_lea.vmem %s11, %s1789
        $region88: #{attention_pooling_removal.2} parent=83 // pred_fallthru
          _
        // Predicated region
        $region89: #{attention_pooling_removal.2} parent=83 // pred_check
          %p1791 = pneg %p314
        $region90: #{attention_pooling_removal.2} parent=83 // pred_check_branch
          %1793 = sbr.rel (%p1791) target = $region92
        $region91: #{attention_pooling_removal.2} parent=83 // pred_region
          %p1794 = scmp.lt.s32.totalorder %s29, 1
          %s1795 = scalar_select %p1794, %s29, 1
          %s1796 = scalar_lea.vmem %s12, %s1795
        $region92: #{attention_pooling_removal.2} parent=83 // pred_fallthru
          _
      $region84: #{attention_pooling_removal.2} parent=5 // pred_fallthru
        _
    $region6: #{attention_pooling_removal.2} parent=1 // loop_footer
      %s27 = sadd.s32 1, %s23
    $region7: #{attention_pooling_removal.2} parent=1 // loop_footer_branch
      %22 = sbr.rel target = $region3
    $region8: #{attention_pooling_removal.2} parent=1 // loop_exit
      _
    %1797 = vsyncpa [#allocation4], 1
    %s1798 = scalar_lea.sflag [#allocation4], 1
    %1799 = vsyncpa %s1798, 1
    %1800 = vsyncpa [#allocation6], 1

</llo_original>
